<compile_context>
chip_gen: v6e
topology: v6e:2x2x1
jax: 0.10.0
libtpu: 0.0.40
codegen_flags: <defaults>
</compile_context>

<pallas_src>
import functools

import jax
import jax.numpy as jnp
from jax import lax
from jax.experimental import pallas as pl
from jax.experimental.pallas import tpu as pltpu

_MIB = 1024 * 1024


def _attdot_kernel(len_ref,      # (Bb, 1) int32 lengths
                   enc_ref,      # (Bb, T, D) enc dtype
                   wenc_ref,     # (D, A)     enc dtype
                   benc_ref,     # (1, A)     f32
                   dec_ref,      # (Bb, dunits) enc dtype
                   wdec_ref,     # (dunits, A)  enc dtype
                   bdec_ref,     # (1, A)     f32
                   c_ref,        # out: (Bb, D) f32
                   w_ref,        # out: (Bb, T) f32
                   *, scaling):
    Bb, T, D = enc_ref.shape
    A = wenc_ref.shape[1]
    cdtype = enc_ref.dtype

    # pre = tanh(mlp_enc(enc_h)): one large (Bb*T, D) x (D, A) MXU matmul with
    # f32 accumulation; the bias-added result drops back to the storage dtype
    # *before* tanh so `pre` stays half-size in VMEM/vregs and the dominant
    # tanh stream runs at the packed bf16 EUP rate on v6e/v7x.
    pre = jnp.dot(enc_ref[...].reshape(Bb * T, D), wenc_ref[...],
                  preferred_element_type=jnp.float32)
    pre = jnp.tanh((pre + benc_ref[...]).astype(cdtype)).reshape(Bb, T, A)

    # tanh(mlp_dec(dec_z)): (Bb, dunits) x (dunits, A) MXU matmul; result cast
    # to the storage dtype so the score multiply stays in that dtype.
    d = jnp.dot(dec_ref[...], wdec_ref[...],
                preferred_element_type=jnp.float32)
    d = jnp.tanh(d + bdec_ref[...]).astype(cdtype)          # (Bb, A)

    # e[b, t] = sum_a pre[b, t, a] * d[b, a]
    # VPU broadcast-multiply in the storage dtype; f32 accumulation over A.
    # No (Bb, T, A)-sized f32 value is stored back to HBM.
    e = jnp.sum(pre * d[:, None, :], axis=-1, dtype=jnp.float32)   # (Bb, T)

    # Mask padded time steps (t >= length) with -inf.
    t_idx = lax.broadcasted_iota(jnp.int32, (Bb, T), 1)
    e = jnp.where(t_idx < len_ref[...], e, -jnp.inf)

    # w = softmax(scaling * e); divide via EUP approx reciprocal + one Newton
    # step -> rows sum to 1 to ~f32 accuracy at negligible extra cost.
    scaled = scaling * e
    m = jnp.max(scaled, axis=-1, keepdims=True)
    p = jnp.exp(scaled - m)
    denom = jnp.sum(p, axis=-1, keepdims=True)
    inv = pl.reciprocal(denom, approx=True)
    inv = inv * (2.0 - denom * inv)                           # Newton refine
    w = p * inv                                               # (Bb, T) f32

    # c[b, :] = sum_t w[b, t] * enc[b, t, :]
    # Batched MXU matvec (MXU idle here), f32 accumulation.  enc is re-read
    # from its resident VMEM input block at the point of use (no long live
    # range across the softmax, no f32 copy of the encoder block).
    w_q = w.astype(cdtype).reshape(Bb, 1, T)
    c = jnp.einsum('bqt,btd->bqd', w_q, enc_ref[...],
                   preferred_element_type=jnp.float32).reshape(Bb, D)

    w_ref[...] = w            # f32 outputs: dense (8, 128) stores with Bb=8
    c_ref[...] = c


def _vmem_capacity_bytes():
    """Per-TensorCore VMEM capacity; conservative fallback if query fails."""
    try:
        cap = getattr(pltpu.get_tpu_info(), "vmem_capacity_bytes", None)
        if cap:
            return int(cap)
    except Exception:
        pass
    return 64 * _MIB          # v7x per-core size: safe lower bound everywhere


def _estimate_vmem_bytes(bb, T, D, A, dunits, itemsize):
    return (2 * bb * T * D * itemsize              # enc block (double-buffered)
            + 2 * bb * dunits * itemsize           # dec block
            + 2 * (D * A + dunits * A) * itemsize  # weight blocks
            + 4 * A * 4 + 2 * bb * 4               # biases + lengths
            + 2 * bb * (D + T) * 4                 # f32 output blocks
            + bb * T * A * (itemsize + 4)          # pre + its f32 matmul result
            + 6 * bb * T * 4)                      # score/softmax temporaries


def _select_block_b(requested, B, T, D, A, dunits, itemsize, vmem_cap):
    bb = 8 if requested is None else int(requested)
    bb = max(8, (bb // 8) * 8)                     # sublane-aligned batch block
    budget = int(0.6 * vmem_cap)
    # Generation-aware auto-shrink: halve Bb until the estimate fits
    # comfortably (matters on v7x's 64 MiB/TC at real ESPnet shapes).
    while bb > 8 and _estimate_vmem_bytes(bb, T, D, A, dunits, itemsize) > budget:
        bb = max(8, ((bb // 2) // 8) * 8)
    # Keep at least two grid steps so BlockSpec double-buffering can overlap
    # DMA with compute (and both v7x TensorCores get a block).
    while bb > 8 and pl.cdiv(B, bb) < 2:
        bb = max(8, ((bb // 2) // 8) * 8)
    return bb


def att_dot_forward(enc_hs_pad, enc_hs_len, dec_z, params, scaling=2.0,
                    block_b=None):
    """Pallas implementation of AttDot.forward.

    enc_hs_pad: (B, T, eprojs) float32 or bfloat16 (bf16 recommended: halves
                the dominant HBM read of this memory-bound kernel)
    enc_hs_len: (B,) int32 valid lengths (assumed in [1, T])
    dec_z:      (B, dunits) or None
    params:     dict with w_enc (eprojs, att_dim), b_enc (att_dim,),
                w_dec (dunits, att_dim), b_dec (att_dim,)
    returns (c, w): (B, eprojs) f32 context, (B, T) f32 attention weights
    """
    B, T, D = enc_hs_pad.shape
    dunits = params["w_dec"].shape[0]
    A = params["w_enc"].shape[1]

    cdtype = enc_hs_pad.dtype
    if dec_z is None:
        dec_z = jnp.zeros((B, dunits), dtype=cdtype)
    else:
        dec_z = dec_z.reshape(B, dunits).astype(cdtype)

    # Weights follow the encoder dtype (bf16 operands run full-rate on the
    # MXU; accumulation stays f32).  Biases stay f32 (added post-accumulate).
    w_enc = params["w_enc"].astype(cdtype)
    w_dec = params["w_dec"].astype(cdtype)
    b_enc = params["b_enc"].astype(jnp.float32).reshape(1, A)
    b_dec = params["b_dec"].astype(jnp.float32).reshape(1, A)
    lengths = enc_hs_len.astype(jnp.int32)

    itemsize = jnp.dtype(cdtype).itemsize
    vmem_cap = _vmem_capacity_bytes()
    Bb = _select_block_b(block_b, B, T, D, A, dunits, itemsize, vmem_cap)

    # Batch padding: padded rows get zero features and length=T (benign;
    # sliced off at the end, never produce NaN).
    B_pad = ((B + Bb - 1) // Bb) * Bb
    enc, dec = enc_hs_pad, dec_z
    if B_pad != B:
        pad = B_pad - B
        enc = jnp.pad(enc, ((0, pad), (0, 0), (0, 0)))
        dec = jnp.pad(dec, ((0, pad), (0, 0)))
        lengths = jnp.concatenate(
            [lengths, jnp.full((pad,), T, dtype=jnp.int32)])
    lengths_2d = lengths.reshape(B_pad, 1)

    est = _estimate_vmem_bytes(Bb, T, D, A, dunits, itemsize)
    vmem_limit = int(min(int(0.9 * vmem_cap), max(2 * est, 32 * _MIB)))

    kernel = functools.partial(_attdot_kernel, scaling=float(scaling))

    c, w = pl.pallas_call(
        kernel,
        grid=(B_pad // Bb,),
        in_specs=[
            pl.BlockSpec((Bb, 1), lambda i: (i, 0)),          # lengths
            pl.BlockSpec((Bb, T, D), lambda i: (i, 0, 0)),    # enc_hs_pad
            pl.BlockSpec((D, A), lambda i: (0, 0)),           # w_enc
            pl.BlockSpec((1, A), lambda i: (0, 0)),           # b_enc
            pl.BlockSpec((Bb, dunits), lambda i: (i, 0)),     # dec_z
            pl.BlockSpec((dunits, A), lambda i: (0, 0)),      # w_dec
            pl.BlockSpec((1, A), lambda i: (0, 0)),           # b_dec
        ],
        out_specs=[
            pl.BlockSpec((Bb, D), lambda i: (i, 0)),          # c (f32)
            pl.BlockSpec((Bb, T), lambda i: (i, 0)),          # w (f32)
        ],
        out_shape=(
            jax.ShapeDtypeStruct((B_pad, D), jnp.float32),
            jax.ShapeDtypeStruct((B_pad, T), jnp.float32),
        ),
        compiler_params=pltpu.CompilerParams(
            dimension_semantics=("parallel",),
            vmem_limit_bytes=vmem_limit,
        ),
    )(lengths_2d, enc, w_enc, b_enc, dec, w_dec, b_dec)

    return c[:B], w[:B]


def _init_linear(key, in_features, out_features):
    # torch.nn.Linear default init: U(-1/sqrt(in), 1/sqrt(in)); weight stored
    # pre-transposed as (in, out).
    kw, kb = jax.random.split(key)
    bound = 1.0 / (in_features ** 0.5)
    w = jax.random.uniform(kw, (in_features, out_features),
                           minval=-bound, maxval=bound, dtype=jnp.float32)
    b = jax.random.uniform(kb, (out_features,),
                           minval=-bound, maxval=bound, dtype=jnp.float32)
    return w, b


def _reference_forward(enc_hs_pad, enc_hs_len, dec_z, params, scaling=2.0):
    """Plain-JAX reference mirroring the PyTorch module (f32 math)."""
    B, T, D = enc_hs_pad.shape
    enc = enc_hs_pad.astype(jnp.float32)
    w_enc = params["w_enc"].astype(jnp.float32)
    w_dec = params["w_dec"].astype(jnp.float32)
    b_enc = params["b_enc"].astype(jnp.float32).reshape(1, 1, -1)
    b_dec = params["b_dec"].astype(jnp.float32).reshape(1, -1)
    dec = dec_z.astype(jnp.float32)

    pre = jnp.tanh(jnp.einsum("btd,da->bta", enc, w_enc) + b_enc)
    d = jnp.tanh(dec @ w_dec + b_dec)
    e = jnp.sum(pre * d[:, None, :], axis=2)
    mask = jnp.arange(T)[None, :] >= enc_hs_len[:, None]
    e = jnp.where(mask, -jnp.inf, e)
    w = jax.nn.softmax(scaling * e, axis=1)
    c = jnp.sum(enc * w[:, :, None], axis=1)
    return c, w


if __name__ == "__main__":
    key = jax.random.PRNGKey(0)
    (k_enc, k_dec, k_x, k_z,
     k_enc2, k_dec2, k_x2, k_z2) = jax.random.split(key, 8)

    # ---- Test 1: TPU-aligned shapes, bf16 storage (performance path) ----
    B, T, eprojs, dunits, att_dim = 16, 128, 128, 128, 128
    w_enc, b_enc = _init_linear(k_enc, eprojs, att_dim)
    w_dec, b_dec = _init_linear(k_dec, dunits, att_dim)
    enc_f32 = jax.random.normal(k_x, (B, T, eprojs), dtype=jnp.float32)
    dec_f32 = jax.random.normal(k_z, (B, dunits), dtype=jnp.float32)
    lens = jnp.array([128, 96, 64, 32, 17, 128, 5, 77,
                      128, 1, 50, 100, 8, 64, 120, 33], dtype=jnp.int32)

    enc_bf = enc_f32.astype(jnp.bfloat16)
    dec_bf = dec_f32.astype(jnp.bfloat16)
    params_bf = {"w_enc": w_enc.astype(jnp.bfloat16), "b_enc": b_enc,
                 "w_dec": w_dec.astype(jnp.bfloat16), "b_dec": b_dec}

    c1, w1 = att_dot_forward(enc_bf, lens, dec_bf, params_bf, scaling=2.0)
    jax.block_until_ready((c1, w1))
    c1_ref, w1_ref = _reference_forward(enc_bf, lens, dec_bf, params_bf, 2.0)
    # bf16 pre/tanh/score intermediates vs. an all-f32 reference -> looser tol.
    assert jnp.allclose(c1, c1_ref, atol=5e-2, rtol=5e-2), \
        "context mismatch (bf16)"
    assert jnp.allclose(w1, w1_ref, atol=5e-2, rtol=5e-2), \
        "attention weight mismatch (bf16)"

    # ---- Test 2: small, unaligned shapes, f32, exercises batch padding ----
    B2, T2, ep2, du2, ad2 = 3, 40, 48, 24, 16
    w_enc2, b_enc2 = _init_linear(k_enc2, ep2, ad2)
    w_dec2, b_dec2 = _init_linear(k_dec2, du2, ad2)
    enc2 = jax.random.normal(k_x2, (B2, T2, ep2), dtype=jnp.float32)
    dec2 = jax.random.normal(k_z2, (B2, du2), dtype=jnp.float32)
    lens2 = jnp.array([40, 13, 1], dtype=jnp.int32)
    params2 = {"w_enc": w_enc2, "b_enc": b_enc2,
               "w_dec": w_dec2, "b_dec": b_dec2}

    c2, w2 = att_dot_forward(enc2, lens2, dec2, params2, scaling=2.0)
    jax.block_until_ready((c2, w2))
    c2_ref, w2_ref = _reference_forward(enc2, lens2, dec2, params2, 2.0)
    assert jnp.allclose(c2, c2_ref, atol=1e-2, rtol=1e-2), \
        "context mismatch (f32)"
    assert jnp.allclose(w2, w2_ref, atol=1e-2, rtol=1e-2), \
        "attention weight mismatch (f32)"

    print("KERNEL_OK")
</pallas_src>

<mosaic_0001>
module attributes {stable_mosaic.version = 11 : i64} {
  func.func @_attdot_kernel(%arg0: i32, %arg1: memref<8x1xi32, #tpu.memory_space<vmem>>, %arg2: memref<8x128x128xbf16, #tpu.memory_space<vmem>>, %arg3: memref<128x128xbf16, #tpu.memory_space<vmem>>, %arg4: memref<1x128xf32, #tpu.memory_space<vmem>>, %arg5: memref<8x128xbf16, #tpu.memory_space<vmem>>, %arg6: memref<128x128xbf16, #tpu.memory_space<vmem>>, %arg7: memref<1x128xf32, #tpu.memory_space<vmem>>, %arg8: memref<8x128xf32, #tpu.memory_space<vmem>>, %arg9: memref<8x128xf32, #tpu.memory_space<vmem>>) attributes {dimension_semantics = [#tpu.dimension_semantics<parallel>], iteration_bounds = array<i64: 2>, scalar_prefetch = 0 : i64, scratch_operands = 0 : i64, tpu.core_type = #tpu.core_type<tc>, window_params = [{transform_indices = @transform_0, window_bounds = array<i64: 8, 1>}, {transform_indices = @transform_1, window_bounds = array<i64: 8, 128, 128>}, {pipeline_mode = #tpu.pipeline_mode<synchronous>, transform_indices = @transform_2, window_bounds = array<i64: 128, 128>}, {pipeline_mode = #tpu.pipeline_mode<synchronous>, transform_indices = @transform_3, window_bounds = array<i64: 1, 128>}, {transform_indices = @transform_4, window_bounds = array<i64: 8, 128>}, {pipeline_mode = #tpu.pipeline_mode<synchronous>, transform_indices = @transform_5, window_bounds = array<i64: 128, 128>}, {pipeline_mode = #tpu.pipeline_mode<synchronous>, transform_indices = @transform_6, window_bounds = array<i64: 1, 128>}, {transform_indices = @transform_7, window_bounds = array<i64: 8, 128>}, {transform_indices = @transform_8, window_bounds = array<i64: 8, 128>}]} {
    %c0 = arith.constant 0 : index
    %c0_0 = arith.constant 0 : index
    %c0_1 = arith.constant 0 : index
    %0 = vector.load %arg2[%c0, %c0_0, %c0_1] : memref<8x128x128xbf16, #tpu.memory_space<vmem>>, vector<8x128x128xbf16>
    %1 = vector.shape_cast %0 : vector<8x128x128xbf16> to vector<1024x128xbf16>
    %c0_2 = arith.constant 0 : index
    %c0_3 = arith.constant 0 : index
    %2 = vector.load %arg3[%c0_2, %c0_3] : memref<128x128xbf16, #tpu.memory_space<vmem>>, vector<128x128xbf16>
    %cst = arith.constant dense<0.000000e+00> : vector<1024x128xf32>
    %3 = tpu.matmul %1, %2, %cst {dimension_numbers = #tpu.dot_dimension_numbers<[1], [0], [0], [1], [0, 0, 1, 1], [], []>} : vector<1024x128xbf16>, vector<128x128xbf16>, vector<1024x128xf32> -> vector<1024x128xf32>
    %c0_4 = arith.constant 0 : index
    %c0_5 = arith.constant 0 : index
    %4 = vector.load %arg4[%c0_4, %c0_5] : memref<1x128xf32, #tpu.memory_space<vmem>>, vector<1x128xf32>
    %5 = vector.broadcast %4 : vector<1x128xf32> to vector<1024x128xf32>
    %6 = arith.addf %3, %5 : vector<1024x128xf32>
    %7 = arith.truncf %6 : vector<1024x128xf32> to vector<1024x128xbf16>
    %8 = math.tanh %7 : vector<1024x128xbf16>
    %9 = vector.shape_cast %8 : vector<1024x128xbf16> to vector<8x128x128xbf16>
    %c0_6 = arith.constant 0 : index
    %c0_7 = arith.constant 0 : index
    %10 = vector.load %arg5[%c0_6, %c0_7] : memref<8x128xbf16, #tpu.memory_space<vmem>>, vector<8x128xbf16>
    %c0_8 = arith.constant 0 : index
    %c0_9 = arith.constant 0 : index
    %11 = vector.load %arg6[%c0_8, %c0_9] : memref<128x128xbf16, #tpu.memory_space<vmem>>, vector<128x128xbf16>
    %cst_10 = arith.constant dense<0.000000e+00> : vector<8x128xf32>
    %12 = tpu.matmul %10, %11, %cst_10 {dimension_numbers = #tpu.dot_dimension_numbers<[1], [0], [0], [1], [0, 0, 1, 1], [], []>} : vector<8x128xbf16>, vector<128x128xbf16>, vector<8x128xf32> -> vector<8x128xf32>
    %c0_11 = arith.constant 0 : index
    %c0_12 = arith.constant 0 : index
    %13 = vector.load %arg7[%c0_11, %c0_12] : memref<1x128xf32, #tpu.memory_space<vmem>>, vector<1x128xf32>
    %14 = vector.broadcast %13 : vector<1x128xf32> to vector<8x128xf32>
    %15 = arith.addf %12, %14 : vector<8x128xf32>
    %16 = math.tanh %15 : vector<8x128xf32>
    %17 = arith.truncf %16 : vector<8x128xf32> to vector<8x128xbf16>
    %18 = vector.shape_cast %17 : vector<8x128xbf16> to vector<8x1x128xbf16>
    %19 = vector.broadcast %18 : vector<8x1x128xbf16> to vector<8x128x128xbf16>
    %20 = arith.mulf %9, %19 : vector<8x128x128xbf16>
    %21 = arith.extf %20 : vector<8x128x128xbf16> to vector<8x128x128xf32>
    %cst_13 = arith.constant dense<0.000000e+00> : vector<8x128xf32>
    %22 = vector.multi_reduction <add>, %21, %cst_13 [2] : vector<8x128x128xf32> to vector<8x128xf32>
    %23 = tpu.iota {dimensions = array<i32: 1>} : vector<8x128xi32>
    %c0_14 = arith.constant 0 : index
    %c0_15 = arith.constant 0 : index
    %24 = vector.load %arg1[%c0_14, %c0_15] : memref<8x1xi32, #tpu.memory_space<vmem>>, vector<8x1xi32>
    %25 = vector.broadcast %24 : vector<8x1xi32> to vector<8x128xi32>
    %26 = arith.cmpi slt, %23, %25 : vector<8x128xi32>
    %cst_16 = arith.constant 0xFF800000 : f32
    %27 = vector.broadcast %cst_16 : f32 to vector<8x128xf32>
    %28 = arith.select %26, %22, %27 : vector<8x128xi1>, vector<8x128xf32>
    %cst_17 = arith.constant 2.000000e+00 : f32
    %29 = vector.broadcast %cst_17 : f32 to vector<8x128xf32>
    %30 = arith.mulf %29, %28 : vector<8x128xf32>
    %cst_18 = arith.constant dense<0xFF800000> : vector<8xf32>
    %31 = vector.multi_reduction <maximumf>, %30, %cst_18 [1] : vector<8x128xf32> to vector<8xf32>
    %32 = vector.shape_cast %31 : vector<8xf32> to vector<8x1xf32>
    %33 = vector.broadcast %32 : vector<8x1xf32> to vector<8x128xf32>
    %34 = arith.subf %30, %33 : vector<8x128xf32>
    %35 = math.exp %34 : vector<8x128xf32>
    %cst_19 = arith.constant dense<0.000000e+00> : vector<8xf32>
    %36 = vector.multi_reduction <add>, %35, %cst_19 [1] : vector<8x128xf32> to vector<8xf32>
    %37 = vector.shape_cast %36 : vector<8xf32> to vector<8x1xf32>
    %38 = tpu.reciprocal %37 {approx = true} : vector<8x1xf32> -> vector<8x1xf32>
    %39 = arith.mulf %37, %38 : vector<8x1xf32>
    %cst_20 = arith.constant 2.000000e+00 : f32
    %40 = vector.broadcast %cst_20 : f32 to vector<8x1xf32>
    %41 = arith.subf %40, %39 : vector<8x1xf32>
    %42 = arith.mulf %38, %41 : vector<8x1xf32>
    %43 = vector.broadcast %42 : vector<8x1xf32> to vector<8x128xf32>
    %44 = arith.mulf %35, %43 : vector<8x128xf32>
    %45 = arith.truncf %44 : vector<8x128xf32> to vector<8x128xbf16>
    %46 = vector.shape_cast %45 : vector<8x128xbf16> to vector<8x1x128xbf16>
    %c0_21 = arith.constant 0 : index
    %c0_22 = arith.constant 0 : index
    %c0_23 = arith.constant 0 : index
    %47 = vector.load %arg2[%c0_21, %c0_22, %c0_23] : memref<8x128x128xbf16, #tpu.memory_space<vmem>>, vector<8x128x128xbf16>
    "tpu.trace_start"() <{level = 10 : i32, message = "bqt,btd->bqd"}> : () -> ()
    %cst_24 = arith.constant dense<0.000000e+00> : vector<8x1x128xf32>
    %48 = tpu.matmul %46, %47, %cst_24 {dimension_numbers = #tpu.dot_dimension_numbers<[2], [1], [1], [2], [0, 0, 0, 1, 1, 2], [0], [0]>} : vector<8x1x128xbf16>, vector<8x128x128xbf16>, vector<8x1x128xf32> -> vector<8x1x128xf32>
    "tpu.trace_stop"() : () -> ()
    %49 = vector.shape_cast %48 : vector<8x1x128xf32> to vector<8x128xf32>
    %c0_25 = arith.constant 0 : index
    %c0_26 = arith.constant 0 : index
    %50 = vector.load %arg9[%c0_25, %c0_26] : memref<8x128xf32, #tpu.memory_space<vmem>>, vector<8x128xf32>
    tpu.vector_store %arg9[%c0_25, %c0_26], %44 {strides = array<i32>} : memref<8x128xf32, #tpu.memory_space<vmem>>, vector<8x128xf32>,
    %c0_27 = arith.constant 0 : index
    %c0_28 = arith.constant 0 : index
    %51 = vector.load %arg8[%c0_27, %c0_28] : memref<8x128xf32, #tpu.memory_space<vmem>>, vector<8x128xf32>
    tpu.vector_store %arg8[%c0_27, %c0_28], %49 {strides = array<i32>} : memref<8x128xf32, #tpu.memory_space<vmem>>, vector<8x128xf32>,
    return
  }
  func.func @transform_0(%arg0: i32) -> (i32, i32) {
    %c0_i32 = arith.constant 0 : i32
    %c0_i32_0 = arith.constant 0 : i32
    return %arg0, %c0_i32 : i32, i32
  }
  func.func @transform_1(%arg0: i32) -> (i32, i32, i32) {
    %c0_i32 = arith.constant 0 : i32
    %c0_i32_0 = arith.constant 0 : i32
    %c0_i32_1 = arith.constant 0 : i32
    return %arg0, %c0_i32, %c0_i32_0 : i32, i32, i32
  }
  func.func @transform_2(%arg0: i32) -> (i32, i32) {
    %c0_i32 = arith.constant 0 : i32
    %c0_i32_0 = arith.constant 0 : i32
    %c0_i32_1 = arith.constant 0 : i32
    return %c0_i32, %c0_i32_0 : i32, i32
  }
  func.func @transform_3(%arg0: i32) -> (i32, i32) {
    %c0_i32 = arith.constant 0 : i32
    %c0_i32_0 = arith.constant 0 : i32
    %c0_i32_1 = arith.constant 0 : i32
    return %c0_i32, %c0_i32_0 : i32, i32
  }
  func.func @transform_4(%arg0: i32) -> (i32, i32) {
    %c0_i32 = arith.constant 0 : i32
    %c0_i32_0 = arith.constant 0 : i32
    return %arg0, %c0_i32 : i32, i32
  }
  func.func @transform_5(%arg0: i32) -> (i32, i32) {
    %c0_i32 = arith.constant 0 : i32
    %c0_i32_0 = arith.constant 0 : i32
    %c0_i32_1 = arith.constant 0 : i32
    return %c0_i32, %c0_i32_0 : i32, i32
  }
  func.func @transform_6(%arg0: i32) -> (i32, i32) {
    %c0_i32 = arith.constant 0 : i32
    %c0_i32_0 = arith.constant 0 : i32
    %c0_i32_1 = arith.constant 0 : i32
    return %c0_i32, %c0_i32_0 : i32, i32
  }
  func.func @transform_7(%arg0: i32) -> (i32, i32) {
    %c0_i32 = arith.constant 0 : i32
    %c0_i32_0 = arith.constant 0 : i32
    return %arg0, %c0_i32 : i32, i32
  }
  func.func @transform_8(%arg0: i32) -> (i32, i32) {
    %c0_i32 = arith.constant 0 : i32
    %c0_i32_0 = arith.constant 0 : i32
    return %arg0, %c0_i32 : i32, i32
  }
}

</mosaic_0001>

<llo_original>
// kernel: tpu_custom_call.1
$region0: #{tpu_custom_call.1}
  #allocation0 [shape = 'u32[]', space=smem, size = 0x4, offset = 0x4, fixed_abs, tag = 'smem constant byte address 0x4 - core index']
  #allocation1 [shape = 'u32[144,128]{1,0:T(1,128)}', space=vmem, size = 0x12000, scoped, tag = 'internal scratch']
  %s0 = inlined_call_operand.vmem [shape: s32[16,1], index: 0, kind: input, shape index: {}]
  %s1 = inlined_call_operand.hbm [shape: bf16[16,128,128], index: 1, kind: input, shape index: {}]
  %s2 = inlined_call_operand.hbm [shape: bf16[128,128], index: 2, kind: input, shape index: {}]
  %s3 = inlined_call_operand.vmem [shape: f32[1,128], index: 3, kind: input, shape index: {}]
  %s4 = inlined_call_operand.vmem [shape: bf16[16,128], index: 4, kind: input, shape index: {}]
  %s5 = inlined_call_operand.hbm [shape: bf16[128,128], index: 5, kind: input, shape index: {}]
  %s6 = inlined_call_operand.vmem [shape: f32[1,128], index: 6, kind: input, shape index: {}]
  %s7 = inlined_call_operand.hbm [shape: f32[16,128], index: 7, kind: output, shape index: {0}]
  %s8 = inlined_call_operand.hbm [shape: f32[16,128], index: 8, kind: output, shape index: {1}]
  %9 = xla_tuple %s7, %s8
  %s10 = sld [smem:[#allocation0]]
  $region81: #{tpu_custom_call.1} parent=0
    _
  %s12 = ssub.s32 1, %s10
  %s13 = scalar_select 0, %s12, %s10
  $region1: #{tpu_custom_call.1} parent=0
    #allocation2 [shape = 'u8[524288]{0}', space=vmem, size = 0x80000, scoped, tag = 'input window, operand 1']
    #allocation3 [shape = 's32[2]{0}', space=sflag, size = 0x8, scoped, tag = 'scoped memory for tpu_custom_call.1']
    #allocation4 [shape = 's32[2]{0}', space=sflag, size = 0x8, scoped, tag = 'scoped memory for tpu_custom_call.1']
    #allocation5 [shape = 'u8[32768]{0}', space=vmem, size = 0x8000, scoped, tag = 'input window, operand 2, single buffered']
    #allocation6 [shape = 's32[1]{0}', space=sflag, size = 0x4, scoped, tag = 'scoped memory for tpu_custom_call.1']
    #allocation7 [shape = 'u8[32768]{0}', space=vmem, size = 0x8000, scoped, tag = 'input window, operand 5, single buffered']
    #allocation8 [shape = 'u8[8192]{0}', space=vmem, size = 0x2000, scoped, tag = 'output window, operand 0']
    #allocation9 [shape = 'u8[8192]{0}', space=vmem, size = 0x2000, scoped, tag = 'output window, operand 1']
    #allocation10 [shape = 's32[2]{0}', space=sflag, size = 0x8, scoped, tag = 'scoped memory for tpu_custom_call.1']
    %14 = vsyncpa [#allocation3], 0
    %s15 = scalar_lea.sflag [#allocation3], 1
    %16 = vsyncpa %s15, 0
    %17 = vsyncpa [#allocation6], 0
    %18 = vsyncpa [#allocation4], 0
    %s19 = scalar_lea.sflag [#allocation4], 1
    %20 = vsyncpa %s19, 0
    %21 = vsyncpa [#allocation10], 0
    %s22 = scalar_lea.sflag [#allocation10], 1
    %23 = vsyncpa %s22, 0
    loop: start=0, step=1, limit=4
    $region2: #{tpu_custom_call.1} parent=1 // loop_pre_header
      _
    $region3: #{tpu_custom_call.1} parent=1 // loop_header
      %s25 = sphi 0, %s29
      %p26 = scmp.ge.s32.totalorder %s25, 4
      %s35 = sphi 0, %s37
      %s38 = sphi 0, %s35
      %s39 = sphi 0, %s38
      %s55 = sphi 0, %s39
      %s61 = sphi 0, %s63
      %s64 = sphi 0, %s61
      %s65 = sphi 0, %s64
      %s81 = sphi 0, %s65
      %s85 = sphi 0, %s85
      %s87 = sphi 0, %s85
      %s88 = sphi 0, %s87
      %s102 = sphi 0, %s88
      %s106 = sphi 0, %s106
      %s108 = sphi 0, %s106
      %s109 = sphi 0, %s108
      %s123 = sphi 0, %s109
      %s129 = sphi 0, %s131
      %s132 = sphi 0, %s129
      %s133 = sphi 0, %s132
      %s149 = sphi 0, %s133
      %s153 = sphi 0, %s153
      %s155 = sphi 0, %s153
      %s156 = sphi 0, %s155
      %s170 = sphi 0, %s156
      %s174 = sphi 0, %s174
      %s176 = sphi 0, %s174
      %s177 = sphi 0, %s176
      %s191 = sphi 0, %s177
      %s197 = sphi 0, %s199
      %s200 = sphi 0, %s197
      %s201 = sphi 0, %s200
      %s217 = sphi 0, %s201
      %s223 = sphi 0, %s225
      %s226 = sphi 0, %s223
      %s227 = sphi 0, %s226
      %s243 = sphi 0, %s227
    $region4: #{tpu_custom_call.1} parent=1 // loop_header_branch
      %28 = sbr.rel (%p26) target = $region8
    $region5: #{tpu_custom_call.1} parent=1 // loop_body
      %s30 = ssub.s32 %s25, 1
      %s31 = ssub.s32 %s25, 2
      %s32 = sadd.s32 %s25, 1
      %s33 = ssub.s32 %s25, %s32
      %p34 = scmp.eq.s32.totalorder %s33, 0
      %s36 = sadd.s32 %s35, 1
      %s37 = scalar_select %p34, %s35, %s36
      %p40 = pneg %p34
      %p41 = scmp.eq.s32.totalorder %s25, 1
      %p42 = por %p40, %p41
      %p43 = scmp.ne.s32.totalorder %s35, %s38
      %p44 = scmp.eq.s32.totalorder %s25, 0
      %p45 = por %p43, %p44
      %p46 = scmp.ne.s32.totalorder %s35, %s38
      %p47 = scmp.eq.s32.totalorder %s30, 1
      %p48 = por %p46, %p47
      %p49 = scmp.ne.s32.totalorder %s38, %s39
      %p50 = scmp.eq.s32.totalorder %s30, 0
      %p51 = por %p49, %p50
      %p52 = scmp.ne.s32.totalorder %s38, %s39
      %p53 = scmp.eq.s32.totalorder %s31, 1
      %p54 = por %p52, %p53
      %p56 = scmp.ne.s32.totalorder %s39, %s55
      %p57 = scmp.eq.s32.totalorder %s31, 0
      %p58 = por %p56, %p57
      %s59 = ssub.s32 %s25, %s32
      %p60 = scmp.eq.s32.totalorder %s59, 0
      %s62 = sadd.s32 %s61, 1
      %s63 = scalar_select %p60, %s61, %s62
      %p66 = pneg %p60
      %p67 = scmp.eq.s32.totalorder %s25, 1
      %p68 = por %p66, %p67
      %p69 = scmp.ne.s32.totalorder %s61, %s64
      %p70 = scmp.eq.s32.totalorder %s25, 0
      %p71 = por %p69, %p70
      %p72 = scmp.ne.s32.totalorder %s61, %s64
      %p73 = scmp.eq.s32.totalorder %s30, 1
      %p74 = por %p72, %p73
      %p75 = scmp.ne.s32.totalorder %s64, %s65
      %p76 = scmp.eq.s32.totalorder %s30, 0
      %p77 = por %p75, %p76
      %p78 = scmp.ne.s32.totalorder %s64, %s65
      %p79 = scmp.eq.s32.totalorder %s31, 1
      %p80 = por %p78, %p79
      %p82 = scmp.ne.s32.totalorder %s65, %s81
      %p83 = scmp.eq.s32.totalorder %s31, 0
      %p84 = por %p82, %p83
      %s86 = sadd.s32 %s85, 1
      %p89 = scmp.eq.s32.totalorder %s25, 1
      %p90 = scmp.ne.s32.totalorder %s85, %s87
      %p91 = scmp.eq.s32.totalorder %s25, 0
      %p92 = por %p90, %p91
      %p93 = scmp.ne.s32.totalorder %s85, %s87
      %p94 = scmp.eq.s32.totalorder %s30, 1
      %p95 = por %p93, %p94
      %p96 = scmp.ne.s32.totalorder %s87, %s88
      %p97 = scmp.eq.s32.totalorder %s30, 0
      %p98 = por %p96, %p97
      %p99 = scmp.ne.s32.totalorder %s87, %s88
      %p100 = scmp.eq.s32.totalorder %s31, 1
      %p101 = por %p99, %p100
      %p103 = scmp.ne.s32.totalorder %s88, %s102
      %p104 = scmp.eq.s32.totalorder %s31, 0
      %p105 = por %p103, %p104
      %s107 = sadd.s32 %s106, 1
      %p110 = scmp.eq.s32.totalorder %s25, 1
      %p111 = scmp.ne.s32.totalorder %s106, %s108
      %p112 = scmp.eq.s32.totalorder %s25, 0
      %p113 = por %p111, %p112
      %p114 = scmp.ne.s32.totalorder %s106, %s108
      %p115 = scmp.eq.s32.totalorder %s30, 1
      %p116 = por %p114, %p115
      %p117 = scmp.ne.s32.totalorder %s108, %s109
      %p118 = scmp.eq.s32.totalorder %s30, 0
      %p119 = por %p117, %p118
      %p120 = scmp.ne.s32.totalorder %s108, %s109
      %p121 = scmp.eq.s32.totalorder %s31, 1
      %p122 = por %p120, %p121
      %p124 = scmp.ne.s32.totalorder %s109, %s123
      %p125 = scmp.eq.s32.totalorder %s31, 0
      %p126 = por %p124, %p125
      %s127 = ssub.s32 %s25, %s32
      %p128 = scmp.eq.s32.totalorder %s127, 0
      %s130 = sadd.s32 %s129, 1
      %s131 = scalar_select %p128, %s129, %s130
      %p134 = pneg %p128
      %p135 = scmp.eq.s32.totalorder %s25, 1
      %p136 = por %p134, %p135
      %p137 = scmp.ne.s32.totalorder %s129, %s132
      %p138 = scmp.eq.s32.totalorder %s25, 0
      %p139 = por %p137, %p138
      %p140 = scmp.ne.s32.totalorder %s129, %s132
      %p141 = scmp.eq.s32.totalorder %s30, 1
      %p142 = por %p140, %p141
      %p143 = scmp.ne.s32.totalorder %s132, %s133
      %p144 = scmp.eq.s32.totalorder %s30, 0
      %p145 = por %p143, %p144
      %p146 = scmp.ne.s32.totalorder %s132, %s133
      %p147 = scmp.eq.s32.totalorder %s31, 1
      %p148 = por %p146, %p147
      %p150 = scmp.ne.s32.totalorder %s133, %s149
      %p151 = scmp.eq.s32.totalorder %s31, 0
      %p152 = por %p150, %p151
      %s154 = sadd.s32 %s153, 1
      %p157 = scmp.eq.s32.totalorder %s25, 1
      %p158 = scmp.ne.s32.totalorder %s153, %s155
      %p159 = scmp.eq.s32.totalorder %s25, 0
      %p160 = por %p158, %p159
      %p161 = scmp.ne.s32.totalorder %s153, %s155
      %p162 = scmp.eq.s32.totalorder %s30, 1
      %p163 = por %p161, %p162
      %p164 = scmp.ne.s32.totalorder %s155, %s156
      %p165 = scmp.eq.s32.totalorder %s30, 0
      %p166 = por %p164, %p165
      %p167 = scmp.ne.s32.totalorder %s155, %s156
      %p168 = scmp.eq.s32.totalorder %s31, 1
      %p169 = por %p167, %p168
      %p171 = scmp.ne.s32.totalorder %s156, %s170
      %p172 = scmp.eq.s32.totalorder %s31, 0
      %p173 = por %p171, %p172
      %s175 = sadd.s32 %s174, 1
      %p178 = scmp.eq.s32.totalorder %s25, 1
      %p179 = scmp.ne.s32.totalorder %s174, %s176
      %p180 = scmp.eq.s32.totalorder %s25, 0
      %p181 = por %p179, %p180
      %p182 = scmp.ne.s32.totalorder %s174, %s176
      %p183 = scmp.eq.s32.totalorder %s30, 1
      %p184 = por %p182, %p183
      %p185 = scmp.ne.s32.totalorder %s176, %s177
      %p186 = scmp.eq.s32.totalorder %s30, 0
      %p187 = por %p185, %p186
      %p188 = scmp.ne.s32.totalorder %s176, %s177
      %p189 = scmp.eq.s32.totalorder %s31, 1
      %p190 = por %p188, %p189
      %p192 = scmp.ne.s32.totalorder %s177, %s191
      %p193 = scmp.eq.s32.totalorder %s31, 0
      %p194 = por %p192, %p193
      %s195 = ssub.s32 %s25, %s32
      %p196 = scmp.eq.s32.totalorder %s195, 0
      %s198 = sadd.s32 %s197, 1
      %s199 = scalar_select %p196, %s197, %s198
      %p202 = pneg %p196
      %p203 = scmp.eq.s32.totalorder %s25, 1
      %p204 = por %p202, %p203
      %p205 = scmp.ne.s32.totalorder %s197, %s200
      %p206 = scmp.eq.s32.totalorder %s25, 0
      %p207 = por %p205, %p206
      %p208 = scmp.ne.s32.totalorder %s197, %s200
      %p209 = scmp.eq.s32.totalorder %s30, 1
      %p210 = por %p208, %p209
      %p211 = scmp.ne.s32.totalorder %s200, %s201
      %p212 = scmp.eq.s32.totalorder %s30, 0
      %p213 = por %p211, %p212
      %p214 = scmp.ne.s32.totalorder %s200, %s201
      %p215 = scmp.eq.s32.totalorder %s31, 1
      %p216 = por %p214, %p215
      %p218 = scmp.ne.s32.totalorder %s201, %s217
      %p219 = scmp.eq.s32.totalorder %s31, 0
      %p220 = por %p218, %p219
      %s221 = ssub.s32 %s25, %s32
      %p222 = scmp.eq.s32.totalorder %s221, 0
      %s224 = sadd.s32 %s223, 1
      %s225 = scalar_select %p222, %s223, %s224
      %p228 = pneg %p222
      %p229 = scmp.eq.s32.totalorder %s25, 1
      %p230 = por %p228, %p229
      %p231 = scmp.ne.s32.totalorder %s223, %s226
      %p232 = scmp.eq.s32.totalorder %s25, 0
      %p233 = por %p231, %p232
      %p234 = scmp.ne.s32.totalorder %s223, %s226
      %p235 = scmp.eq.s32.totalorder %s30, 1
      %p236 = por %p234, %p235
      %p237 = scmp.ne.s32.totalorder %s226, %s227
      %p238 = scmp.eq.s32.totalorder %s30, 0
      %p239 = por %p237, %p238
      %p240 = scmp.ne.s32.totalorder %s226, %s227
      %p241 = scmp.eq.s32.totalorder %s31, 1
      %p242 = por %p240, %p241
      %p244 = scmp.ne.s32.totalorder %s227, %s243
      %p245 = scmp.eq.s32.totalorder %s31, 0
      %p246 = por %p244, %p245
      %p247 = scmp.le.s32.totalorder 1, %s25
      %p248 = scmp.lt.s32.totalorder %s25, 3
      %p249 = pnand %p247, %p248
      %p250 = pneg %p249
      // Predicated region
      $region9: #{tpu_custom_call.1} parent=5 // pred_check
        _
      $region10: #{tpu_custom_call.1} parent=5 // pred_check_branch
        %252 = sbr.rel (%p249) target = $region12
      $region11: #{tpu_custom_call.1} parent=5 // pred_region
        %s253 = ssub.s32 %s25, 1
        // Predicated region
        $region13: #{tpu_custom_call.1} parent=11 // pred_check
          %p254 = pneg %p98
        $region14: #{tpu_custom_call.1} parent=11 // pred_check_branch
          %256 = sbr.rel (%p254) target = $region16
        $region15: #{tpu_custom_call.1} parent=11 // pred_region
          %s258 = ssub.s32 1024, 1024
          %259 = vsyncadd [#allocation6], %s258
          %s260 = sshll.u32 [#allocation5], 4
          %s261 = int_to_ptr.vmem [resolvable:$true] %s260
          %266 = dma.hbm_to_vmem [thread:$0]  %s2, 1024, %s261, [#allocation6], 64, 64, 4
        $region16: #{tpu_custom_call.1} parent=11 // pred_fallthru
          _
        // Predicated region
        $region17: #{tpu_custom_call.1} parent=11 // pred_check
          %p267 = pneg %p119
        $region18: #{tpu_custom_call.1} parent=11 // pred_check_branch
          %269 = sbr.rel (%p267) target = $region20
        $region19: #{tpu_custom_call.1} parent=11 // pred_region
          _
        $region20: #{tpu_custom_call.1} parent=11 // pred_fallthru
          _
        // Predicated region
        $region21: #{tpu_custom_call.1} parent=11 // pred_check
          %p270 = pneg %p166
        $region22: #{tpu_custom_call.1} parent=11 // pred_check_branch
          %272 = sbr.rel (%p270) target = $region24
        $region23: #{tpu_custom_call.1} parent=11 // pred_region
          %s274 = ssub.s32 1024, 1024
          %275 = vsyncadd [#allocation6], %s274
          %s276 = sshll.u32 [#allocation7], 4
          %s277 = int_to_ptr.vmem [resolvable:$true] %s276
          %282 = dma.hbm_to_vmem [thread:$0]  %s5, 1024, %s277, [#allocation6], 64, 64, 4
        $region24: #{tpu_custom_call.1} parent=11 // pred_fallthru
          _
        // Predicated region
        $region25: #{tpu_custom_call.1} parent=11 // pred_check
          %p283 = pneg %p187
        $region26: #{tpu_custom_call.1} parent=11 // pred_check_branch
          %285 = sbr.rel (%p283) target = $region28
        $region27: #{tpu_custom_call.1} parent=11 // pred_region
          _
        $region28: #{tpu_custom_call.1} parent=11 // pred_fallthru
          _
      $region12: #{tpu_custom_call.1} parent=5 // pred_fallthru
        _
      %p286 = scmp.lt.s32.totalorder %s25, 2
      // Predicated region
      $region29: #{tpu_custom_call.1} parent=5 // pred_check
        %p287 = pneg %p286
      $region30: #{tpu_custom_call.1} parent=5 // pred_check_branch
        %289 = sbr.rel (%p287) target = $region32
      $region31: #{tpu_custom_call.1} parent=5 // pred_region
        // Predicated region
        $region33: #{tpu_custom_call.1} parent=31 // pred_check
          %p290 = pneg %p45
        $region34: #{tpu_custom_call.1} parent=31 // pred_check_branch
          %292 = sbr.rel (%p290) target = $region36
        $region35: #{tpu_custom_call.1} parent=31 // pred_region
          %p293 = scmp.lt.s32.totalorder %s25, 1
          %s294 = scalar_select %p293, %s25, 1
          %s295 = smul.addr %s294, 8
          %s296 = scalar_lea.vmem %s0, %s295
        $region36: #{tpu_custom_call.1} parent=31 // pred_fallthru
          _
        // Predicated region
        $region37: #{tpu_custom_call.1} parent=31 // pred_check
          %p297 = pneg %p71
        $region38: #{tpu_custom_call.1} parent=31 // pred_check_branch
          %299 = sbr.rel (%p297) target = $region40
        $region39: #{tpu_custom_call.1} parent=31 // pred_region
          %s300 = sand.u32 %s61, 1
          %s301 = scalar_lea.sflag [#allocation3], %s300
          %s302 = sand.u32 %s61, 1
          %s303 = smul.addr %s302, 512
          %s304 = scalar_lea.vmem [#allocation2], %s303
          %s305 = smul.u32 8, %s25
          %s307 = ssub.s32 8192, 8192
          %308 = vsyncadd %s301, %s307
          %s309 = smul.addr %s305, 16
          %s310 = smul.addr %s309, 64
          %s311 = scalar_lea.hbm %s1, %s310
          %s312 = sshll.u32 %s304, 4
          %s313 = int_to_ptr.vmem [resolvable:$true] %s312
          %318 = dma.hbm_to_vmem [thread:$0]  %s311, 8192, %s313, %s301, 64, 64, 4
        $region40: #{tpu_custom_call.1} parent=31 // pred_fallthru
          _
        // Predicated region
        $region41: #{tpu_custom_call.1} parent=31 // pred_check
          %p319 = pneg %p139
        $region42: #{tpu_custom_call.1} parent=31 // pred_check_branch
          %321 = sbr.rel (%p319) target = $region44
        $region43: #{tpu_custom_call.1} parent=31 // pred_region
          %p322 = scmp.lt.s32.totalorder %s25, 1
          %s323 = scalar_select %p322, %s25, 1
          %s324 = smul.addr %s323, 4
          %s325 = scalar_lea.vmem %s4, %s324
        $region44: #{tpu_custom_call.1} parent=31 // pred_fallthru
          _
      $region32: #{tpu_custom_call.1} parent=5 // pred_fallthru
        _
      %p326 = scmp.le.s32.totalorder 1, %s25
      %p327 = scmp.lt.s32.totalorder %s25, 3
      %p328 = pnand %p326, %p327
      %p329 = pneg %p328
      // Predicated region
      $region45: #{tpu_custom_call.1} parent=5 // pred_check
        _
      $region46: #{tpu_custom_call.1} parent=5 // pred_check_branch
        %331 = sbr.rel (%p328) target = $region48
      $region47: #{tpu_custom_call.1} parent=5 // pred_region
        %s332 = ssub.s32 %s25, 1
        %s333 = sand.u32 %s64, 1
        %s334 = scalar_lea.sflag [#allocation3], %s333
        %s335 = sand.u32 %s64, 1
        %s336 = smul.addr %s335, 512
        %s337 = scalar_lea.vmem [#allocation2], %s336
        // Predicated region
        $region49: #{tpu_custom_call.1} parent=47 // pred_check
          %p338 = pneg %p77
        $region50: #{tpu_custom_call.1} parent=47 // pred_check_branch
          %340 = sbr.rel (%p338) target = $region52
        $region51: #{tpu_custom_call.1} parent=47 // pred_region
          %341 = dma.done %s334, 8192
        $region52: #{tpu_custom_call.1} parent=47 // pred_fallthru
          _
        // Predicated region
        $region53: #{tpu_custom_call.1} parent=47 // pred_check
          %p342 = pneg %p98
        $region54: #{tpu_custom_call.1} parent=47 // pred_check_branch
          %344 = sbr.rel (%p342) target = $region56
        $region55: #{tpu_custom_call.1} parent=47 // pred_region
          %345 = dma.done [#allocation6], 1024
        $region56: #{tpu_custom_call.1} parent=47 // pred_fallthru
          _
        // Predicated region
        $region57: #{tpu_custom_call.1} parent=47 // pred_check
          %p346 = pneg %p166
        $region58: #{tpu_custom_call.1} parent=47 // pred_check_branch
          %348 = sbr.rel (%p346) target = $region60
        $region59: #{tpu_custom_call.1} parent=47 // pred_region
          %349 = dma.done [#allocation6], 1024
        $region60: #{tpu_custom_call.1} parent=47 // pred_fallthru
          _
        %p350 = scmp.lt.s32.totalorder %s30, 1
        %s351 = scalar_select %p350, %s30, 1
        %s352 = smul.addr %s351, 8
        %s353 = scalar_lea.vmem %s0, %s352
        %p354 = pneg %p51
        %p355 = pneg %p48
        %s356 = sand.u32 %s64, 1
        %s357 = scalar_lea.sflag [#allocation3], %s356
        %s358 = sand.u32 %s64, 1
        %s359 = smul.addr %s358, 512
        %s360 = scalar_lea.vmem [#allocation2], %s359
        %p361 = pneg %p77
        %p362 = pneg %p74
        %p363 = pneg %p98
        %p364 = pneg %p95
        %p365 = pneg %p119
        %p366 = pneg %p116
        %p367 = scmp.lt.s32.totalorder %s30, 1
        %s368 = scalar_select %p367, %s30, 1
        %s369 = smul.addr %s368, 4
        %s370 = scalar_lea.vmem %s4, %s369
        %p371 = pneg %p145
        %p372 = pneg %p142
        %p373 = pneg %p166
        %p374 = pneg %p163
        %p375 = pneg %p187
        %p376 = pneg %p184
        %p377 = pneg %p213
        %p378 = pneg %p210
        %s379 = sand.u32 %s200, 1
        %s380 = scalar_lea.sflag [#allocation4], %s379
        %s381 = sand.u32 %s200, 1
        %s382 = smul.addr %s381, 8
        %s383 = scalar_lea.vmem [#allocation8], %s382
        %p384 = pneg %p239
        %p385 = pneg %p236
        %s386 = sand.u32 %s226, 1
        %s387 = scalar_lea.sflag [#allocation10], %s386
        %s388 = sand.u32 %s226, 1
        %s389 = smul.addr %s388, 8
        %s390 = scalar_lea.vmem [#allocation9], %s389
        %p391 = scmp.lt.s32.totalorder %s30, 1
        %s392 = scalar_select %p391, %s30, 1
        %s393 = smul.addr %s392, 8
        %s394 = scalar_lea.vmem %s0, %s393
        %s395 = smul.u32 8, %s30
        %p396 = scmp.lt.s32.totalorder %s30, 1
        %s397 = scalar_select %p396, %s30, 1
        %s398 = smul.addr %s397, 4
        %s399 = scalar_lea.vmem %s4, %s398
        %v401 = vld [vmem:[%s337] sm:$0xf]
        %v402 = vld [vmem:[%s337 + $0x4] sm:$0xf]
        %v403 = vld [vmem:[%s337 + $0x8] sm:$0xf]
        %v404 = vld [vmem:[%s337 + $0xc] sm:$0xf]
        %v405 = vld [vmem:[%s337 + $0x10] sm:$0xf]
        %v406 = vld [vmem:[%s337 + $0x14] sm:$0xf]
        %v407 = vld [vmem:[%s337 + $0x18] sm:$0xf]
        %v408 = vld [vmem:[%s337 + $0x1c] sm:$0xf]
        %v409 = vld [vmem:[%s337 + $0x20] sm:$0xf]
        %v410 = vld [vmem:[%s337 + $0x24] sm:$0xf]
        %v411 = vld [vmem:[%s337 + $0x28] sm:$0xf]
        %v412 = vld [vmem:[%s337 + $0x2c] sm:$0xf]
        %v413 = vld [vmem:[%s337 + $0x30] sm:$0xf]
        %v414 = vld [vmem:[%s337 + $0x34] sm:$0xf]
        %v415 = vld [vmem:[%s337 + $0x38] sm:$0xf]
        %v416 = vld [vmem:[%s337 + $0x3c] sm:$0xf]
        %v417 = vld [vmem:[%s337 + $0x40] sm:$0xf]
        %v418 = vld [vmem:[%s337 + $0x44] sm:$0xf]
        %v419 = vld [vmem:[%s337 + $0x48] sm:$0xf]
        %v420 = vld [vmem:[%s337 + $0x4c] sm:$0xf]
        %v421 = vld [vmem:[%s337 + $0x50] sm:$0xf]
        %v422 = vld [vmem:[%s337 + $0x54] sm:$0xf]
        %v423 = vld [vmem:[%s337 + $0x58] sm:$0xf]
        %v424 = vld [vmem:[%s337 + $0x5c] sm:$0xf]
        %v425 = vld [vmem:[%s337 + $0x60] sm:$0xf]
        %v426 = vld [vmem:[%s337 + $0x64] sm:$0xf]
        %v427 = vld [vmem:[%s337 + $0x68] sm:$0xf]
        %v428 = vld [vmem:[%s337 + $0x6c] sm:$0xf]
        %v429 = vld [vmem:[%s337 + $0x70] sm:$0xf]
        %v430 = vld [vmem:[%s337 + $0x74] sm:$0xf]
        %v431 = vld [vmem:[%s337 + $0x78] sm:$0xf]
        %v432 = vld [vmem:[%s337 + $0x7c] sm:$0xf]
        %v433 = vld [vmem:[%s337 + $0x80] sm:$0xf]
        %v434 = vld [vmem:[%s337 + $0x84] sm:$0xf]
        %v435 = vld [vmem:[%s337 + $0x88] sm:$0xf]
        %v436 = vld [vmem:[%s337 + $0x8c] sm:$0xf]
        %v437 = vld [vmem:[%s337 + $0x90] sm:$0xf]
        %v438 = vld [vmem:[%s337 + $0x94] sm:$0xf]
        %v439 = vld [vmem:[%s337 + $0x98] sm:$0xf]
        %v440 = vld [vmem:[%s337 + $0x9c] sm:$0xf]
        %v441 = vld [vmem:[%s337 + $0xa0] sm:$0xf]
        %v442 = vld [vmem:[%s337 + $0xa4] sm:$0xf]
        %v443 = vld [vmem:[%s337 + $0xa8] sm:$0xf]
        %v444 = vld [vmem:[%s337 + $0xac] sm:$0xf]
        %v445 = vld [vmem:[%s337 + $0xb0] sm:$0xf]
        %v446 = vld [vmem:[%s337 + $0xb4] sm:$0xf]
        %v447 = vld [vmem:[%s337 + $0xb8] sm:$0xf]
        %v448 = vld [vmem:[%s337 + $0xbc] sm:$0xf]
        %v449 = vld [vmem:[%s337 + $0xc0] sm:$0xf]
        %v450 = vld [vmem:[%s337 + $0xc4] sm:$0xf]
        %v451 = vld [vmem:[%s337 + $0xc8] sm:$0xf]
        %v452 = vld [vmem:[%s337 + $0xcc] sm:$0xf]
        %v453 = vld [vmem:[%s337 + $0xd0] sm:$0xf]
        %v454 = vld [vmem:[%s337 + $0xd4] sm:$0xf]
        %v455 = vld [vmem:[%s337 + $0xd8] sm:$0xf]
        %v456 = vld [vmem:[%s337 + $0xdc] sm:$0xf]
        %v457 = vld [vmem:[%s337 + $0xe0] sm:$0xf]
        %v458 = vld [vmem:[%s337 + $0xe4] sm:$0xf]
        %v459 = vld [vmem:[%s337 + $0xe8] sm:$0xf]
        %v460 = vld [vmem:[%s337 + $0xec] sm:$0xf]
        %v461 = vld [vmem:[%s337 + $0xf0] sm:$0xf]
        %v462 = vld [vmem:[%s337 + $0xf4] sm:$0xf]
        %v463 = vld [vmem:[%s337 + $0xf8] sm:$0xf]
        %v464 = vld [vmem:[%s337 + $0xfc] sm:$0xf]
        %v465 = vld [vmem:[%s337 + $0x100] sm:$0xf]
        %v466 = vld [vmem:[%s337 + $0x104] sm:$0xf]
        %v467 = vld [vmem:[%s337 + $0x108] sm:$0xf]
        %v468 = vld [vmem:[%s337 + $0x10c] sm:$0xf]
        %v469 = vld [vmem:[%s337 + $0x110] sm:$0xf]
        %v470 = vld [vmem:[%s337 + $0x114] sm:$0xf]
        %v471 = vld [vmem:[%s337 + $0x118] sm:$0xf]
        %v472 = vld [vmem:[%s337 + $0x11c] sm:$0xf]
        %v473 = vld [vmem:[%s337 + $0x120] sm:$0xf]
        %v474 = vld [vmem:[%s337 + $0x124] sm:$0xf]
        %v475 = vld [vmem:[%s337 + $0x128] sm:$0xf]
        %v476 = vld [vmem:[%s337 + $0x12c] sm:$0xf]
        %v477 = vld [vmem:[%s337 + $0x130] sm:$0xf]
        %v478 = vld [vmem:[%s337 + $0x134] sm:$0xf]
        %v479 = vld [vmem:[%s337 + $0x138] sm:$0xf]
        %v480 = vld [vmem:[%s337 + $0x13c] sm:$0xf]
        %v481 = vld [vmem:[%s337 + $0x140] sm:$0xf]
        %v482 = vld [vmem:[%s337 + $0x144] sm:$0xf]
        %v483 = vld [vmem:[%s337 + $0x148] sm:$0xf]
        %v484 = vld [vmem:[%s337 + $0x14c] sm:$0xf]
        %v485 = vld [vmem:[%s337 + $0x150] sm:$0xf]
        %v486 = vld [vmem:[%s337 + $0x154] sm:$0xf]
        %v487 = vld [vmem:[%s337 + $0x158] sm:$0xf]
        %v488 = vld [vmem:[%s337 + $0x15c] sm:$0xf]
        %v489 = vld [vmem:[%s337 + $0x160] sm:$0xf]
        %v490 = vld [vmem:[%s337 + $0x164] sm:$0xf]
        %v491 = vld [vmem:[%s337 + $0x168] sm:$0xf]
        %v492 = vld [vmem:[%s337 + $0x16c] sm:$0xf]
        %v493 = vld [vmem:[%s337 + $0x170] sm:$0xf]
        %v494 = vld [vmem:[%s337 + $0x174] sm:$0xf]
        %v495 = vld [vmem:[%s337 + $0x178] sm:$0xf]
        %v496 = vld [vmem:[%s337 + $0x17c] sm:$0xf]
        %v497 = vld [vmem:[%s337 + $0x180] sm:$0xf]
        %v498 = vld [vmem:[%s337 + $0x184] sm:$0xf]
        %v499 = vld [vmem:[%s337 + $0x188] sm:$0xf]
        %v500 = vld [vmem:[%s337 + $0x18c] sm:$0xf]
        %v501 = vld [vmem:[%s337 + $0x190] sm:$0xf]
        %v502 = vld [vmem:[%s337 + $0x194] sm:$0xf]
        %v503 = vld [vmem:[%s337 + $0x198] sm:$0xf]
        %v504 = vld [vmem:[%s337 + $0x19c] sm:$0xf]
        %v505 = vld [vmem:[%s337 + $0x1a0] sm:$0xf]
        %v506 = vld [vmem:[%s337 + $0x1a4] sm:$0xf]
        %v507 = vld [vmem:[%s337 + $0x1a8] sm:$0xf]
        %v508 = vld [vmem:[%s337 + $0x1ac] sm:$0xf]
        %v509 = vld [vmem:[%s337 + $0x1b0] sm:$0xf]
        %v510 = vld [vmem:[%s337 + $0x1b4] sm:$0xf]
        %v511 = vld [vmem:[%s337 + $0x1b8] sm:$0xf]
        %v512 = vld [vmem:[%s337 + $0x1bc] sm:$0xf]
        %v513 = vld [vmem:[%s337 + $0x1c0] sm:$0xf]
        %v514 = vld [vmem:[%s337 + $0x1c4] sm:$0xf]
        %v515 = vld [vmem:[%s337 + $0x1c8] sm:$0xf]
        %v516 = vld [vmem:[%s337 + $0x1cc] sm:$0xf]
        %v517 = vld [vmem:[%s337 + $0x1d0] sm:$0xf]
        %v518 = vld [vmem:[%s337 + $0x1d4] sm:$0xf]
        %v519 = vld [vmem:[%s337 + $0x1d8] sm:$0xf]
        %v520 = vld [vmem:[%s337 + $0x1dc] sm:$0xf]
        %v521 = vld [vmem:[%s337 + $0x1e0] sm:$0xf]
        %v522 = vld [vmem:[%s337 + $0x1e4] sm:$0xf]
        %v523 = vld [vmem:[%s337 + $0x1e8] sm:$0xf]
        %v524 = vld [vmem:[%s337 + $0x1ec] sm:$0xf]
        %v525 = vld [vmem:[%s337 + $0x1f0] sm:$0xf]
        %v526 = vld [vmem:[%s337 + $0x1f4] sm:$0xf]
        %v527 = vld [vmem:[%s337 + $0x1f8] sm:$0xf]
        %v528 = vld [vmem:[%s337 + $0x1fc] sm:$0xf]
        %v529 = vld [vmem:[#allocation5] sm:$0xf]
        %v530 = vld [vmem:[#allocation5 + $0x4] sm:$0xf]
        %v531 = vld [vmem:[#allocation5 + $0x8] sm:$0xf]
        %v532 = vld [vmem:[#allocation5 + $0xc] sm:$0xf]
        %v533 = vld [vmem:[#allocation5 + $0x10] sm:$0xf]
        %v534 = vld [vmem:[#allocation5 + $0x14] sm:$0xf]
        %v535 = vld [vmem:[#allocation5 + $0x18] sm:$0xf]
        %v536 = vld [vmem:[#allocation5 + $0x1c] sm:$0xf]
        %v537 = vld [vmem:[#allocation5 + $0x20] sm:$0xf]
        %v538 = vld [vmem:[#allocation5 + $0x24] sm:$0xf]
        %v539 = vld [vmem:[#allocation5 + $0x28] sm:$0xf]
        %v540 = vld [vmem:[#allocation5 + $0x2c] sm:$0xf]
        %v541 = vld [vmem:[#allocation5 + $0x30] sm:$0xf]
        %v542 = vld [vmem:[#allocation5 + $0x34] sm:$0xf]
        %v543 = vld [vmem:[#allocation5 + $0x38] sm:$0xf]
        %v544 = vld [vmem:[#allocation5 + $0x3c] sm:$0xf]
        %v545 = vld [vmem:[%s3] sm:$0x1]
        %v547 = vlaneseq
        %v548 = vshrl.u32 %v547, 7
        %v549 = vsub.s32 0, %v548
        %v550 = vrot.slane %v545, %v549
        %v680 = vunpack.c.l.b16 %v401
        %v681 = vunpack.c.l.b16 %v402
        %v682 = vunpack.c.l.b16 %v403
        %v683 = vunpack.c.l.b16 %v404
        %v684 = vunpack.c.l.b16 %v405
        %v685 = vunpack.c.l.b16 %v406
        %v686 = vunpack.c.l.b16 %v407
        %v687 = vunpack.c.l.b16 %v408
        %v688 = vunpack.c.l.b16 %v409
        %v689 = vunpack.c.l.b16 %v410
        %v690 = vunpack.c.l.b16 %v411
        %v691 = vunpack.c.l.b16 %v412
        %v692 = vunpack.c.l.b16 %v413
        %v693 = vunpack.c.l.b16 %v414
        %v694 = vunpack.c.l.b16 %v415
        %v695 = vunpack.c.l.b16 %v416
        %v696 = vunpack.c.l.b16 %v417
        %v697 = vunpack.c.l.b16 %v418
        %v698 = vunpack.c.l.b16 %v419
        %v699 = vunpack.c.l.b16 %v420
        %v700 = vunpack.c.l.b16 %v421
        %v701 = vunpack.c.l.b16 %v422
        %v702 = vunpack.c.l.b16 %v423
        %v703 = vunpack.c.l.b16 %v424
        %v704 = vunpack.c.l.b16 %v425
        %v705 = vunpack.c.l.b16 %v426
        %v706 = vunpack.c.l.b16 %v427
        %v707 = vunpack.c.l.b16 %v428
        %v708 = vunpack.c.l.b16 %v429
        %v709 = vunpack.c.l.b16 %v430
        %v710 = vunpack.c.l.b16 %v431
        %v711 = vunpack.c.l.b16 %v432
        %v712 = vunpack.c.l.b16 %v433
        %v713 = vunpack.c.l.b16 %v434
        %v714 = vunpack.c.l.b16 %v435
        %v715 = vunpack.c.l.b16 %v436
        %v716 = vunpack.c.l.b16 %v437
        %v717 = vunpack.c.l.b16 %v438
        %v718 = vunpack.c.l.b16 %v439
        %v719 = vunpack.c.l.b16 %v440
        %v720 = vunpack.c.l.b16 %v441
        %v721 = vunpack.c.l.b16 %v442
        %v722 = vunpack.c.l.b16 %v443
        %v723 = vunpack.c.l.b16 %v444
        %v724 = vunpack.c.l.b16 %v445
        %v725 = vunpack.c.l.b16 %v446
        %v726 = vunpack.c.l.b16 %v447
        %v727 = vunpack.c.l.b16 %v448
        %v728 = vunpack.c.l.b16 %v449
        %v729 = vunpack.c.l.b16 %v450
        %v730 = vunpack.c.l.b16 %v451
        %v731 = vunpack.c.l.b16 %v452
        %v732 = vunpack.c.l.b16 %v453
        %v733 = vunpack.c.l.b16 %v454
        %v734 = vunpack.c.l.b16 %v455
        %v735 = vunpack.c.l.b16 %v456
        %v736 = vunpack.c.l.b16 %v457
        %v737 = vunpack.c.l.b16 %v458
        %v738 = vunpack.c.l.b16 %v459
        %v739 = vunpack.c.l.b16 %v460
        %v740 = vunpack.c.l.b16 %v461
        %v741 = vunpack.c.l.b16 %v462
        %v742 = vunpack.c.l.b16 %v463
        %v743 = vunpack.c.l.b16 %v464
        %v744 = vunpack.c.l.b16 %v465
        %v745 = vunpack.c.l.b16 %v466
        %v746 = vunpack.c.l.b16 %v467
        %v747 = vunpack.c.l.b16 %v468
        %v748 = vunpack.c.l.b16 %v469
        %v749 = vunpack.c.l.b16 %v470
        %v750 = vunpack.c.l.b16 %v471
        %v751 = vunpack.c.l.b16 %v472
        %v752 = vunpack.c.l.b16 %v473
        %v753 = vunpack.c.l.b16 %v474
        %v754 = vunpack.c.l.b16 %v475
        %v755 = vunpack.c.l.b16 %v476
        %v756 = vunpack.c.l.b16 %v477
        %v757 = vunpack.c.l.b16 %v478
        %v758 = vunpack.c.l.b16 %v479
        %v759 = vunpack.c.l.b16 %v480
        %v760 = vunpack.c.l.b16 %v481
        %v761 = vunpack.c.l.b16 %v482
        %v762 = vunpack.c.l.b16 %v483
        %v763 = vunpack.c.l.b16 %v484
        %v764 = vunpack.c.l.b16 %v485
        %v765 = vunpack.c.l.b16 %v486
        %v766 = vunpack.c.l.b16 %v487
        %v767 = vunpack.c.l.b16 %v488
        %v768 = vunpack.c.l.b16 %v489
        %v769 = vunpack.c.l.b16 %v490
        %v770 = vunpack.c.l.b16 %v491
        %v771 = vunpack.c.l.b16 %v492
        %v772 = vunpack.c.l.b16 %v493
        %v773 = vunpack.c.l.b16 %v494
        %v774 = vunpack.c.l.b16 %v495
        %v775 = vunpack.c.l.b16 %v496
        %v776 = vunpack.c.l.b16 %v497
        %v777 = vunpack.c.l.b16 %v498
        %v778 = vunpack.c.l.b16 %v499
        %v779 = vunpack.c.l.b16 %v500
        %v780 = vunpack.c.l.b16 %v501
        %v781 = vunpack.c.l.b16 %v502
        %v782 = vunpack.c.l.b16 %v503
        %v783 = vunpack.c.l.b16 %v504
        %v784 = vunpack.c.l.b16 %v505
        %v785 = vunpack.c.l.b16 %v506
        %v786 = vunpack.c.l.b16 %v507
        %v787 = vunpack.c.l.b16 %v508
        %v788 = vunpack.c.l.b16 %v509
        %v789 = vunpack.c.l.b16 %v510
        %v790 = vunpack.c.l.b16 %v511
        %v791 = vunpack.c.l.b16 %v512
        %v792 = vunpack.c.l.b16 %v513
        %v793 = vunpack.c.l.b16 %v514
        %v794 = vunpack.c.l.b16 %v515
        %v795 = vunpack.c.l.b16 %v516
        %v796 = vunpack.c.l.b16 %v517
        %v797 = vunpack.c.l.b16 %v518
        %v798 = vunpack.c.l.b16 %v519
        %v799 = vunpack.c.l.b16 %v520
        %v800 = vunpack.c.l.b16 %v521
        %v801 = vunpack.c.l.b16 %v522
        %v802 = vunpack.c.l.b16 %v523
        %v803 = vunpack.c.l.b16 %v524
        %v804 = vunpack.c.l.b16 %v525
        %v805 = vunpack.c.l.b16 %v526
        %v806 = vunpack.c.l.b16 %v527
        %v807 = vunpack.c.l.b16 %v528
        %v808 = vpack.c.b16 %v681, %v680
        %v809 = vpack.c.b16 %v683, %v682
        %v810 = vpack.c.b16 %v685, %v684
        %v811 = vpack.c.b16 %v687, %v686
        %v812 = vpack.c.b16 %v689, %v688
        %v813 = vpack.c.b16 %v691, %v690
        %v814 = vpack.c.b16 %v693, %v692
        %v815 = vpack.c.b16 %v695, %v694
        %v816 = vpack.c.b16 %v697, %v696
        %v817 = vpack.c.b16 %v699, %v698
        %v818 = vpack.c.b16 %v701, %v700
        %v819 = vpack.c.b16 %v703, %v702
        %v820 = vpack.c.b16 %v705, %v704
        %v821 = vpack.c.b16 %v707, %v706
        %v822 = vpack.c.b16 %v709, %v708
        %v823 = vpack.c.b16 %v711, %v710
        %v824 = vpack.c.b16 %v713, %v712
        %v825 = vpack.c.b16 %v715, %v714
        %v826 = vpack.c.b16 %v717, %v716
        %v827 = vpack.c.b16 %v719, %v718
        %v828 = vpack.c.b16 %v721, %v720
        %v829 = vpack.c.b16 %v723, %v722
        %v830 = vpack.c.b16 %v725, %v724
        %v831 = vpack.c.b16 %v727, %v726
        %v832 = vpack.c.b16 %v729, %v728
        %v833 = vpack.c.b16 %v731, %v730
        %v834 = vpack.c.b16 %v733, %v732
        %v835 = vpack.c.b16 %v735, %v734
        %v836 = vpack.c.b16 %v737, %v736
        %v837 = vpack.c.b16 %v739, %v738
        %v838 = vpack.c.b16 %v741, %v740
        %v839 = vpack.c.b16 %v743, %v742
        %v840 = vpack.c.b16 %v745, %v744
        %v841 = vpack.c.b16 %v747, %v746
        %v842 = vpack.c.b16 %v749, %v748
        %v843 = vpack.c.b16 %v751, %v750
        %v844 = vpack.c.b16 %v753, %v752
        %v845 = vpack.c.b16 %v755, %v754
        %v846 = vpack.c.b16 %v757, %v756
        %v847 = vpack.c.b16 %v759, %v758
        %v848 = vpack.c.b16 %v761, %v760
        %v849 = vpack.c.b16 %v763, %v762
        %v850 = vpack.c.b16 %v765, %v764
        %v851 = vpack.c.b16 %v767, %v766
        %v852 = vpack.c.b16 %v769, %v768
        %v853 = vpack.c.b16 %v771, %v770
        %v854 = vpack.c.b16 %v773, %v772
        %v855 = vpack.c.b16 %v775, %v774
        %v856 = vpack.c.b16 %v777, %v776
        %v857 = vpack.c.b16 %v779, %v778
        %v858 = vpack.c.b16 %v781, %v780
        %v859 = vpack.c.b16 %v783, %v782
        %v860 = vpack.c.b16 %v785, %v784
        %v861 = vpack.c.b16 %v787, %v786
        %v862 = vpack.c.b16 %v789, %v788
        %v863 = vpack.c.b16 %v791, %v790
        %v864 = vpack.c.b16 %v793, %v792
        %v865 = vpack.c.b16 %v795, %v794
        %v866 = vpack.c.b16 %v797, %v796
        %v867 = vpack.c.b16 %v799, %v798
        %v868 = vpack.c.b16 %v801, %v800
        %v869 = vpack.c.b16 %v803, %v802
        %v870 = vpack.c.b16 %v805, %v804
        %v871 = vpack.c.b16 %v807, %v806
        %v952 = vunpack.c.l.b16 %v529
        %v953 = vunpack.c.l.b16 %v530
        %v954 = vunpack.c.l.b16 %v531
        %v955 = vunpack.c.l.b16 %v532
        %v956 = vunpack.c.l.b16 %v533
        %v957 = vunpack.c.l.b16 %v534
        %v958 = vunpack.c.l.b16 %v535
        %v959 = vunpack.c.l.b16 %v536
        %v960 = vunpack.c.l.b16 %v537
        %v961 = vunpack.c.l.b16 %v538
        %v962 = vunpack.c.l.b16 %v539
        %v963 = vunpack.c.l.b16 %v540
        %v964 = vunpack.c.l.b16 %v541
        %v965 = vunpack.c.l.b16 %v542
        %v966 = vunpack.c.l.b16 %v543
        %v967 = vunpack.c.l.b16 %v544
        %v968 = vpack.c.b16 %v953, %v952
        %v969 = vpack.c.b16 %v955, %v954
        %v970 = vpack.c.b16 %v957, %v956
        %v971 = vpack.c.b16 %v959, %v958
        %v972 = vpack.c.b16 %v961, %v960
        %v973 = vpack.c.b16 %v963, %v962
        %v974 = vpack.c.b16 %v965, %v964
        %v975 = vpack.c.b16 %v967, %v966
        %984 = vmatprep.subr.bf16.mxu0 0
        %985 = vmatpush1.bf16.msra.mxu0 %v975
        %986 = vmatprep.subr.bf16.mxu0 0
        %987 = vmatpush1.bf16.msra.mxu0 %v974
        %988 = vmatprep.subr.bf16.mxu0 0
        %989 = vmatpush1.bf16.msra.mxu0 %v973
        %990 = vmatprep.subr.bf16.mxu0 0
        %991 = vmatpush1.bf16.msra.mxu0 %v972
        %992 = vmatprep.subr.bf16.mxu0 0
        %993 = vmatpush1.bf16.msra.mxu0 %v971
        %994 = vmatprep.subr.bf16.mxu0 0
        %995 = vmatpush1.bf16.msra.mxu0 %v970
        %996 = vmatprep.subr.bf16.mxu0 0
        %997 = vmatpush1.bf16.msra.mxu0 %v969
        %998 = vmatprep.subr.bf16.mxu0 0
        %999 = vmatpush1.bf16.msra.mxu0 %v968
        %1000 = vmatprep.subr.bf16.mxu0 0
        %1001 = vmatpush2.bf16.msra.mxu0 0
        %1002 = vmatprep.subr.bf16.mxu0 0
        %1003 = vmatpush2.bf16.msra.mxu0 0
        %1004 = vmatprep.subr.bf16.mxu0 0
        %1005 = vmatpush2.bf16.msra.mxu0 0
        %1006 = vmatprep.subr.bf16.mxu0 0
        %1007 = vmatpush2.bf16.msra.mxu0 0
        %1008 = vmatprep.subr.bf16.mxu0 0
        %1009 = vmatpush2.bf16.msra.mxu0 0
        %1010 = vmatprep.subr.bf16.mxu0 0
        %1011 = vmatpush2.bf16.msra.mxu0 0
        %1012 = vmatprep.subr.bf16.mxu0 0
        %1013 = vmatpush2.bf16.msra.mxu0 0
        %1014 = vmatprep.subr.bf16.mxu0 0
        %1015 = vmatpush2.bf16.msra.mxu0 0
        %1016 = vmatprep.mubr.bf16.mxu0 0
        %1017 = vmatmul.mubr.bf16.gmra.mxu0 %v808
        %v1018 = vpop.f32.mrf.mxu0
        %v1019 = vadd.f32 %v550, %v1018
        %v1020 = vpop.f32.mrf.mxu0
        %v1021 = vpop.f32.mrf.mxu0
        %v1022 = vadd.f32 %v550, %v1021
        %v1023 = vpop.f32.mrf.mxu0
        %1024 = vmatprep.mubr.bf16.mxu0 0
        %1025 = vmatmul.mubr.bf16.gmra.mxu0 %v809
        %v1026 = vpop.f32.mrf.mxu0
        %v1027 = vadd.f32 %v550, %v1026
        %v1028 = vpop.f32.mrf.mxu0
        %v1029 = vpop.f32.mrf.mxu0
        %v1030 = vadd.f32 %v550, %v1029
        %v1031 = vpop.f32.mrf.mxu0
        %1032 = vmatprep.mubr.bf16.mxu0 0
        %1033 = vmatmul.mubr.bf16.gmra.mxu0 %v810
        %v1034 = vpop.f32.mrf.mxu0
        %v1035 = vadd.f32 %v550, %v1034
        %v1036 = vpop.f32.mrf.mxu0
        %v1037 = vpop.f32.mrf.mxu0
        %v1038 = vadd.f32 %v550, %v1037
        %v1039 = vpop.f32.mrf.mxu0
        %1040 = vmatprep.mubr.bf16.mxu0 0
        %1041 = vmatmul.mubr.bf16.gmra.mxu0 %v811
        %v1042 = vpop.f32.mrf.mxu0
        %v1043 = vadd.f32 %v550, %v1042
        %v1044 = vpop.f32.mrf.mxu0
        %v1045 = vpop.f32.mrf.mxu0
        %v1046 = vadd.f32 %v550, %v1045
        %v1047 = vpop.f32.mrf.mxu0
        %1048 = vmatprep.mubr.bf16.mxu0 0
        %1049 = vmatmul.mubr.bf16.gmra.mxu0 %v812
        %v1050 = vpop.f32.mrf.mxu0
        %v1051 = vadd.f32 %v550, %v1050
        %v1052 = vpop.f32.mrf.mxu0
        %v1053 = vpop.f32.mrf.mxu0
        %v1054 = vadd.f32 %v550, %v1053
        %v1055 = vpop.f32.mrf.mxu0
        %1056 = vmatprep.mubr.bf16.mxu0 0
        %1057 = vmatmul.mubr.bf16.gmra.mxu0 %v813
        %v1058 = vpop.f32.mrf.mxu0
        %v1059 = vadd.f32 %v550, %v1058
        %v1060 = vpop.f32.mrf.mxu0
        %v1061 = vpop.f32.mrf.mxu0
        %v1062 = vadd.f32 %v550, %v1061
        %v1063 = vpop.f32.mrf.mxu0
        %1064 = vmatprep.mubr.bf16.mxu0 0
        %1065 = vmatmul.mubr.bf16.gmra.mxu0 %v814
        %v1066 = vpop.f32.mrf.mxu0
        %v1067 = vadd.f32 %v550, %v1066
        %v1068 = vpop.f32.mrf.mxu0
        %v1069 = vpop.f32.mrf.mxu0
        %v1070 = vadd.f32 %v550, %v1069
        %v1071 = vpop.f32.mrf.mxu0
        %1072 = vmatprep.mubr.bf16.mxu0 0
        %1073 = vmatmul.mubr.bf16.gmra.mxu0 %v815
        %v1074 = vpop.f32.mrf.mxu0
        %v1075 = vadd.f32 %v550, %v1074
        %v1076 = vpop.f32.mrf.mxu0
        %v1077 = vpop.f32.mrf.mxu0
        %v1078 = vadd.f32 %v550, %v1077
        %v1079 = vpop.f32.mrf.mxu0
        %1080 = vmatprep.mubr.bf16.mxu0 0
        %1081 = vmatmul.mubr.bf16.gmra.mxu0 %v816
        %v1082 = vpop.f32.mrf.mxu0
        %v1083 = vadd.f32 %v550, %v1082
        %v1084 = vpop.f32.mrf.mxu0
        %v1085 = vpop.f32.mrf.mxu0
        %v1086 = vadd.f32 %v550, %v1085
        %v1087 = vpop.f32.mrf.mxu0
        %1088 = vmatprep.mubr.bf16.mxu0 0
        %1089 = vmatmul.mubr.bf16.gmra.mxu0 %v817
        %v1090 = vpop.f32.mrf.mxu0
        %v1091 = vadd.f32 %v550, %v1090
        %v1092 = vpop.f32.mrf.mxu0
        %v1093 = vpop.f32.mrf.mxu0
        %v1094 = vadd.f32 %v550, %v1093
        %v1095 = vpop.f32.mrf.mxu0
        %1096 = vmatprep.mubr.bf16.mxu0 0
        %1097 = vmatmul.mubr.bf16.gmra.mxu0 %v818
        %v1098 = vpop.f32.mrf.mxu0
        %v1099 = vadd.f32 %v550, %v1098
        %v1100 = vpop.f32.mrf.mxu0
        %v1101 = vpop.f32.mrf.mxu0
        %v1102 = vadd.f32 %v550, %v1101
        %v1103 = vpop.f32.mrf.mxu0
        %1104 = vmatprep.mubr.bf16.mxu0 0
        %1105 = vmatmul.mubr.bf16.gmra.mxu0 %v819
        %v1106 = vpop.f32.mrf.mxu0
        %v1107 = vadd.f32 %v550, %v1106
        %v1108 = vpop.f32.mrf.mxu0
        %v1109 = vpop.f32.mrf.mxu0
        %v1110 = vadd.f32 %v550, %v1109
        %v1111 = vpop.f32.mrf.mxu0
        %1112 = vmatprep.mubr.bf16.mxu0 0
        %1113 = vmatmul.mubr.bf16.gmra.mxu0 %v820
        %v1114 = vpop.f32.mrf.mxu0
        %v1115 = vadd.f32 %v550, %v1114
        %v1116 = vpop.f32.mrf.mxu0
        %v1117 = vpop.f32.mrf.mxu0
        %v1118 = vadd.f32 %v550, %v1117
        %v1119 = vpop.f32.mrf.mxu0
        %1120 = vmatprep.mubr.bf16.mxu0 0
        %1121 = vmatmul.mubr.bf16.gmra.mxu0 %v821
        %v1122 = vpop.f32.mrf.mxu0
        %v1123 = vadd.f32 %v550, %v1122
        %v1124 = vpop.f32.mrf.mxu0
        %v1125 = vpop.f32.mrf.mxu0
        %v1126 = vadd.f32 %v550, %v1125
        %v1127 = vpop.f32.mrf.mxu0
        %1128 = vmatprep.mubr.bf16.mxu0 0
        %1129 = vmatmul.mubr.bf16.gmra.mxu0 %v822
        %v1130 = vpop.f32.mrf.mxu0
        %v1131 = vadd.f32 %v550, %v1130
        %v1132 = vpop.f32.mrf.mxu0
        %v1133 = vpop.f32.mrf.mxu0
        %v1134 = vadd.f32 %v550, %v1133
        %v1135 = vpop.f32.mrf.mxu0
        %1136 = vmatprep.mubr.bf16.mxu0 0
        %1137 = vmatmul.mubr.bf16.gmra.mxu0 %v823
        %v1138 = vpop.f32.mrf.mxu0
        %v1139 = vadd.f32 %v550, %v1138
        %v1140 = vpop.f32.mrf.mxu0
        %v1141 = vpop.f32.mrf.mxu0
        %v1142 = vadd.f32 %v550, %v1141
        %v1143 = vpop.f32.mrf.mxu0
        %1144 = vmatprep.mubr.bf16.mxu0 0
        %1145 = vmatmul.mubr.bf16.gmra.mxu0 %v824
        %v1146 = vpop.f32.mrf.mxu0
        %v1147 = vadd.f32 %v550, %v1146
        %v1148 = vpop.f32.mrf.mxu0
        %v1149 = vpop.f32.mrf.mxu0
        %v1150 = vadd.f32 %v550, %v1149
        %v1151 = vpop.f32.mrf.mxu0
        %1152 = vmatprep.mubr.bf16.mxu0 0
        %1153 = vmatmul.mubr.bf16.gmra.mxu0 %v825
        %v1154 = vpop.f32.mrf.mxu0
        %v1155 = vadd.f32 %v550, %v1154
        %v1156 = vpop.f32.mrf.mxu0
        %v1157 = vpop.f32.mrf.mxu0
        %v1158 = vadd.f32 %v550, %v1157
        %v1159 = vpop.f32.mrf.mxu0
        %1160 = vmatprep.mubr.bf16.mxu0 0
        %1161 = vmatmul.mubr.bf16.gmra.mxu0 %v826
        %v1162 = vpop.f32.mrf.mxu0
        %v1163 = vadd.f32 %v550, %v1162
        %v1164 = vpop.f32.mrf.mxu0
        %v1165 = vpop.f32.mrf.mxu0
        %v1166 = vadd.f32 %v550, %v1165
        %v1167 = vpop.f32.mrf.mxu0
        %1168 = vmatprep.mubr.bf16.mxu0 0
        %1169 = vmatmul.mubr.bf16.gmra.mxu0 %v827
        %v1170 = vpop.f32.mrf.mxu0
        %v1171 = vadd.f32 %v550, %v1170
        %v1172 = vpop.f32.mrf.mxu0
        %v1173 = vpop.f32.mrf.mxu0
        %v1174 = vadd.f32 %v550, %v1173
        %v1175 = vpop.f32.mrf.mxu0
        %1176 = vmatprep.mubr.bf16.mxu0 0
        %1177 = vmatmul.mubr.bf16.gmra.mxu0 %v828
        %v1178 = vpop.f32.mrf.mxu0
        %v1179 = vadd.f32 %v550, %v1178
        %v1180 = vpop.f32.mrf.mxu0
        %v1181 = vpop.f32.mrf.mxu0
        %v1182 = vadd.f32 %v550, %v1181
        %v1183 = vpop.f32.mrf.mxu0
        %1184 = vmatprep.mubr.bf16.mxu0 0
        %1185 = vmatmul.mubr.bf16.gmra.mxu0 %v829
        %v1186 = vpop.f32.mrf.mxu0
        %v1187 = vadd.f32 %v550, %v1186
        %v1188 = vpop.f32.mrf.mxu0
        %v1189 = vpop.f32.mrf.mxu0
        %v1190 = vadd.f32 %v550, %v1189
        %v1191 = vpop.f32.mrf.mxu0
        %1192 = vmatprep.mubr.bf16.mxu0 0
        %1193 = vmatmul.mubr.bf16.gmra.mxu0 %v830
        %v1194 = vpop.f32.mrf.mxu0
        %v1195 = vadd.f32 %v550, %v1194
        %v1196 = vpop.f32.mrf.mxu0
        %v1197 = vpop.f32.mrf.mxu0
        %v1198 = vadd.f32 %v550, %v1197
        %v1199 = vpop.f32.mrf.mxu0
        %1200 = vmatprep.mubr.bf16.mxu0 0
        %1201 = vmatmul.mubr.bf16.gmra.mxu0 %v831
        %v1202 = vpop.f32.mrf.mxu0
        %v1203 = vadd.f32 %v550, %v1202
        %v1204 = vpop.f32.mrf.mxu0
        %v1205 = vpop.f32.mrf.mxu0
        %v1206 = vadd.f32 %v550, %v1205
        %v1207 = vpop.f32.mrf.mxu0
        %1208 = vmatprep.mubr.bf16.mxu0 0
        %1209 = vmatmul.mubr.bf16.gmra.mxu0 %v832
        %v1210 = vpop.f32.mrf.mxu0
        %v1211 = vadd.f32 %v550, %v1210
        %v1212 = vpop.f32.mrf.mxu0
        %v1213 = vpop.f32.mrf.mxu0
        %v1214 = vadd.f32 %v550, %v1213
        %v1215 = vpop.f32.mrf.mxu0
        %1216 = vmatprep.mubr.bf16.mxu0 0
        %1217 = vmatmul.mubr.bf16.gmra.mxu0 %v833
        %v1218 = vpop.f32.mrf.mxu0
        %v1219 = vadd.f32 %v550, %v1218
        %v1220 = vpop.f32.mrf.mxu0
        %v1221 = vpop.f32.mrf.mxu0
        %v1222 = vadd.f32 %v550, %v1221
        %v1223 = vpop.f32.mrf.mxu0
        %1224 = vmatprep.mubr.bf16.mxu0 0
        %1225 = vmatmul.mubr.bf16.gmra.mxu0 %v834
        %v1226 = vpop.f32.mrf.mxu0
        %v1227 = vadd.f32 %v550, %v1226
        %v1228 = vpop.f32.mrf.mxu0
        %v1229 = vpop.f32.mrf.mxu0
        %v1230 = vadd.f32 %v550, %v1229
        %v1231 = vpop.f32.mrf.mxu0
        %1232 = vmatprep.mubr.bf16.mxu0 0
        %1233 = vmatmul.mubr.bf16.gmra.mxu0 %v835
        %v1234 = vpop.f32.mrf.mxu0
        %v1235 = vadd.f32 %v550, %v1234
        %v1236 = vpop.f32.mrf.mxu0
        %v1237 = vpop.f32.mrf.mxu0
        %v1238 = vadd.f32 %v550, %v1237
        %v1239 = vpop.f32.mrf.mxu0
        %1240 = vmatprep.mubr.bf16.mxu0 0
        %1241 = vmatmul.mubr.bf16.gmra.mxu0 %v836
        %v1242 = vpop.f32.mrf.mxu0
        %v1243 = vadd.f32 %v550, %v1242
        %v1244 = vpop.f32.mrf.mxu0
        %v1245 = vpop.f32.mrf.mxu0
        %v1246 = vadd.f32 %v550, %v1245
        %v1247 = vpop.f32.mrf.mxu0
        %1248 = vmatprep.mubr.bf16.mxu0 0
        %1249 = vmatmul.mubr.bf16.gmra.mxu0 %v837
        %v1250 = vpop.f32.mrf.mxu0
        %v1251 = vadd.f32 %v550, %v1250
        %v1252 = vpop.f32.mrf.mxu0
        %v1253 = vpop.f32.mrf.mxu0
        %v1254 = vadd.f32 %v550, %v1253
        %v1255 = vpop.f32.mrf.mxu0
        %1256 = vmatprep.mubr.bf16.mxu0 0
        %1257 = vmatmul.mubr.bf16.gmra.mxu0 %v838
        %v1258 = vpop.f32.mrf.mxu0
        %v1259 = vadd.f32 %v550, %v1258
        %v1260 = vpop.f32.mrf.mxu0
        %v1261 = vpop.f32.mrf.mxu0
        %v1262 = vadd.f32 %v550, %v1261
        %v1263 = vpop.f32.mrf.mxu0
        %1264 = vmatprep.mubr.bf16.mxu0 0
        %1265 = vmatmul.mubr.bf16.gmra.mxu0 %v839
        %v1266 = vpop.f32.mrf.mxu0
        %v1267 = vadd.f32 %v550, %v1266
        %v1268 = vpop.f32.mrf.mxu0
        %v1269 = vpop.f32.mrf.mxu0
        %v1270 = vadd.f32 %v550, %v1269
        %v1271 = vpop.f32.mrf.mxu0
        %1272 = vmatprep.mubr.bf16.mxu0 0
        %1273 = vmatmul.mubr.bf16.gmra.mxu0 %v840
        %v1274 = vpop.f32.mrf.mxu0
        %v1275 = vadd.f32 %v550, %v1274
        %v1276 = vpop.f32.mrf.mxu0
        %v1277 = vpop.f32.mrf.mxu0
        %v1278 = vadd.f32 %v550, %v1277
        %v1279 = vpop.f32.mrf.mxu0
        %1280 = vmatprep.mubr.bf16.mxu0 0
        %1281 = vmatmul.mubr.bf16.gmra.mxu0 %v841
        %v1282 = vpop.f32.mrf.mxu0
        %v1283 = vadd.f32 %v550, %v1282
        %v1284 = vpop.f32.mrf.mxu0
        %v1285 = vpop.f32.mrf.mxu0
        %v1286 = vadd.f32 %v550, %v1285
        %v1287 = vpop.f32.mrf.mxu0
        %1288 = vmatprep.mubr.bf16.mxu0 0
        %1289 = vmatmul.mubr.bf16.gmra.mxu0 %v842
        %v1290 = vpop.f32.mrf.mxu0
        %v1291 = vadd.f32 %v550, %v1290
        %v1292 = vpop.f32.mrf.mxu0
        %v1293 = vpop.f32.mrf.mxu0
        %v1294 = vadd.f32 %v550, %v1293
        %v1295 = vpop.f32.mrf.mxu0
        %1296 = vmatprep.mubr.bf16.mxu0 0
        %1297 = vmatmul.mubr.bf16.gmra.mxu0 %v843
        %v1298 = vpop.f32.mrf.mxu0
        %v1299 = vadd.f32 %v550, %v1298
        %v1300 = vpop.f32.mrf.mxu0
        %v1301 = vpop.f32.mrf.mxu0
        %v1302 = vadd.f32 %v550, %v1301
        %v1303 = vpop.f32.mrf.mxu0
        %1304 = vmatprep.mubr.bf16.mxu0 0
        %1305 = vmatmul.mubr.bf16.gmra.mxu0 %v844
        %v1306 = vpop.f32.mrf.mxu0
        %v1307 = vadd.f32 %v550, %v1306
        %v1308 = vpop.f32.mrf.mxu0
        %v1309 = vpop.f32.mrf.mxu0
        %v1310 = vadd.f32 %v550, %v1309
        %v1311 = vpop.f32.mrf.mxu0
        %1312 = vmatprep.mubr.bf16.mxu0 0
        %1313 = vmatmul.mubr.bf16.gmra.mxu0 %v845
        %v1314 = vpop.f32.mrf.mxu0
        %v1315 = vadd.f32 %v550, %v1314
        %v1316 = vpop.f32.mrf.mxu0
        %v1317 = vpop.f32.mrf.mxu0
        %v1318 = vadd.f32 %v550, %v1317
        %v1319 = vpop.f32.mrf.mxu0
        %1320 = vmatprep.mubr.bf16.mxu0 0
        %1321 = vmatmul.mubr.bf16.gmra.mxu0 %v846
        %v1322 = vpop.f32.mrf.mxu0
        %v1323 = vadd.f32 %v550, %v1322
        %v1324 = vpop.f32.mrf.mxu0
        %v1325 = vpop.f32.mrf.mxu0
        %v1326 = vadd.f32 %v550, %v1325
        %v1327 = vpop.f32.mrf.mxu0
        %1328 = vmatprep.mubr.bf16.mxu0 0
        %1329 = vmatmul.mubr.bf16.gmra.mxu0 %v847
        %v1330 = vpop.f32.mrf.mxu0
        %v1331 = vadd.f32 %v550, %v1330
        %v1332 = vpop.f32.mrf.mxu0
        %v1333 = vpop.f32.mrf.mxu0
        %v1334 = vadd.f32 %v550, %v1333
        %v1335 = vpop.f32.mrf.mxu0
        %1336 = vmatprep.mubr.bf16.mxu0 0
        %1337 = vmatmul.mubr.bf16.gmra.mxu0 %v848
        %v1338 = vpop.f32.mrf.mxu0
        %v1339 = vadd.f32 %v550, %v1338
        %v1340 = vpop.f32.mrf.mxu0
        %v1341 = vpop.f32.mrf.mxu0
        %v1342 = vadd.f32 %v550, %v1341
        %v1343 = vpop.f32.mrf.mxu0
        %1344 = vmatprep.mubr.bf16.mxu0 0
        %1345 = vmatmul.mubr.bf16.gmra.mxu0 %v849
        %v1346 = vpop.f32.mrf.mxu0
        %v1347 = vadd.f32 %v550, %v1346
        %v1348 = vpop.f32.mrf.mxu0
        %v1349 = vpop.f32.mrf.mxu0
        %v1350 = vadd.f32 %v550, %v1349
        %v1351 = vpop.f32.mrf.mxu0
        %1352 = vmatprep.mubr.bf16.mxu0 0
        %1353 = vmatmul.mubr.bf16.gmra.mxu0 %v850
        %v1354 = vpop.f32.mrf.mxu0
        %v1355 = vadd.f32 %v550, %v1354
        %v1356 = vpop.f32.mrf.mxu0
        %v1357 = vpop.f32.mrf.mxu0
        %v1358 = vadd.f32 %v550, %v1357
        %v1359 = vpop.f32.mrf.mxu0
        %1360 = vmatprep.mubr.bf16.mxu0 0
        %1361 = vmatmul.mubr.bf16.gmra.mxu0 %v851
        %v1362 = vpop.f32.mrf.mxu0
        %v1363 = vadd.f32 %v550, %v1362
        %v1364 = vpop.f32.mrf.mxu0
        %v1365 = vpop.f32.mrf.mxu0
        %v1366 = vadd.f32 %v550, %v1365
        %v1367 = vpop.f32.mrf.mxu0
        %1368 = vmatprep.mubr.bf16.mxu0 0
        %1369 = vmatmul.mubr.bf16.gmra.mxu0 %v852
        %v1370 = vpop.f32.mrf.mxu0
        %v1371 = vadd.f32 %v550, %v1370
        %v1372 = vpop.f32.mrf.mxu0
        %v1373 = vpop.f32.mrf.mxu0
        %v1374 = vadd.f32 %v550, %v1373
        %v1375 = vpop.f32.mrf.mxu0
        %1376 = vmatprep.mubr.bf16.mxu0 0
        %1377 = vmatmul.mubr.bf16.gmra.mxu0 %v853
        %v1378 = vpop.f32.mrf.mxu0
        %v1379 = vadd.f32 %v550, %v1378
        %v1380 = vpop.f32.mrf.mxu0
        %v1381 = vpop.f32.mrf.mxu0
        %v1382 = vadd.f32 %v550, %v1381
        %v1383 = vpop.f32.mrf.mxu0
        %1384 = vmatprep.mubr.bf16.mxu0 0
        %1385 = vmatmul.mubr.bf16.gmra.mxu0 %v854
        %v1386 = vpop.f32.mrf.mxu0
        %v1387 = vadd.f32 %v550, %v1386
        %v1388 = vpop.f32.mrf.mxu0
        %v1389 = vpop.f32.mrf.mxu0
        %v1390 = vadd.f32 %v550, %v1389
        %v1391 = vpop.f32.mrf.mxu0
        %1392 = vmatprep.mubr.bf16.mxu0 0
        %1393 = vmatmul.mubr.bf16.gmra.mxu0 %v855
        %v1394 = vpop.f32.mrf.mxu0
        %v1395 = vadd.f32 %v550, %v1394
        %v1396 = vpop.f32.mrf.mxu0
        %v1397 = vpop.f32.mrf.mxu0
        %v1398 = vadd.f32 %v550, %v1397
        %v1399 = vpop.f32.mrf.mxu0
        %1400 = vmatprep.mubr.bf16.mxu0 0
        %1401 = vmatmul.mubr.bf16.gmra.mxu0 %v856
        %v1402 = vpop.f32.mrf.mxu0
        %v1403 = vadd.f32 %v550, %v1402
        %v1404 = vpop.f32.mrf.mxu0
        %v1405 = vpop.f32.mrf.mxu0
        %v1406 = vadd.f32 %v550, %v1405
        %v1407 = vpop.f32.mrf.mxu0
        %1408 = vmatprep.mubr.bf16.mxu0 0
        %1409 = vmatmul.mubr.bf16.gmra.mxu0 %v857
        %v1410 = vpop.f32.mrf.mxu0
        %v1411 = vadd.f32 %v550, %v1410
        %v1412 = vpop.f32.mrf.mxu0
        %v1413 = vpop.f32.mrf.mxu0
        %v1414 = vadd.f32 %v550, %v1413
        %v1415 = vpop.f32.mrf.mxu0
        %1416 = vmatprep.mubr.bf16.mxu0 0
        %1417 = vmatmul.mubr.bf16.gmra.mxu0 %v858
        %v1418 = vpop.f32.mrf.mxu0
        %v1419 = vadd.f32 %v550, %v1418
        %v1420 = vpop.f32.mrf.mxu0
        %v1421 = vpop.f32.mrf.mxu0
        %v1422 = vadd.f32 %v550, %v1421
        %v1423 = vpop.f32.mrf.mxu0
        %1424 = vmatprep.mubr.bf16.mxu0 0
        %1425 = vmatmul.mubr.bf16.gmra.mxu0 %v859
        %v1426 = vpop.f32.mrf.mxu0
        %v1427 = vadd.f32 %v550, %v1426
        %v1428 = vpop.f32.mrf.mxu0
        %v1429 = vpop.f32.mrf.mxu0
        %v1430 = vadd.f32 %v550, %v1429
        %v1431 = vpop.f32.mrf.mxu0
        %1432 = vmatprep.mubr.bf16.mxu0 0
        %1433 = vmatmul.mubr.bf16.gmra.mxu0 %v860
        %v1434 = vpop.f32.mrf.mxu0
        %v1435 = vadd.f32 %v550, %v1434
        %v1436 = vpop.f32.mrf.mxu0
        %v1437 = vpop.f32.mrf.mxu0
        %v1438 = vadd.f32 %v550, %v1437
        %v1439 = vpop.f32.mrf.mxu0
        %1440 = vmatprep.mubr.bf16.mxu0 0
        %1441 = vmatmul.mubr.bf16.gmra.mxu0 %v861
        %v1442 = vpop.f32.mrf.mxu0
        %v1443 = vadd.f32 %v550, %v1442
        %v1444 = vpop.f32.mrf.mxu0
        %v1445 = vpop.f32.mrf.mxu0
        %v1446 = vadd.f32 %v550, %v1445
        %v1447 = vpop.f32.mrf.mxu0
        %1448 = vmatprep.mubr.bf16.mxu0 0
        %1449 = vmatmul.mubr.bf16.gmra.mxu0 %v862
        %v1450 = vpop.f32.mrf.mxu0
        %v1451 = vadd.f32 %v550, %v1450
        %v1452 = vpop.f32.mrf.mxu0
        %v1453 = vpop.f32.mrf.mxu0
        %v1454 = vadd.f32 %v550, %v1453
        %v1455 = vpop.f32.mrf.mxu0
        %1456 = vmatprep.mubr.bf16.mxu0 0
        %1457 = vmatmul.mubr.bf16.gmra.mxu0 %v863
        %v1458 = vpop.f32.mrf.mxu0
        %v1459 = vadd.f32 %v550, %v1458
        %v1460 = vpop.f32.mrf.mxu0
        %v1461 = vpop.f32.mrf.mxu0
        %v1462 = vadd.f32 %v550, %v1461
        %v1463 = vpop.f32.mrf.mxu0
        %1464 = vmatprep.mubr.bf16.mxu0 0
        %1465 = vmatmul.mubr.bf16.gmra.mxu0 %v864
        %v1466 = vpop.f32.mrf.mxu0
        %v1467 = vadd.f32 %v550, %v1466
        %v1468 = vpop.f32.mrf.mxu0
        %v1469 = vpop.f32.mrf.mxu0
        %v1470 = vadd.f32 %v550, %v1469
        %v1471 = vpop.f32.mrf.mxu0
        %1472 = vmatprep.mubr.bf16.mxu0 0
        %1473 = vmatmul.mubr.bf16.gmra.mxu0 %v865
        %v1474 = vpop.f32.mrf.mxu0
        %v1475 = vadd.f32 %v550, %v1474
        %v1476 = vpop.f32.mrf.mxu0
        %v1477 = vpop.f32.mrf.mxu0
        %v1478 = vadd.f32 %v550, %v1477
        %v1479 = vpop.f32.mrf.mxu0
        %1480 = vmatprep.mubr.bf16.mxu0 0
        %1481 = vmatmul.mubr.bf16.gmra.mxu0 %v866
        %v1482 = vpop.f32.mrf.mxu0
        %v1483 = vadd.f32 %v550, %v1482
        %v1484 = vpop.f32.mrf.mxu0
        %v1485 = vpop.f32.mrf.mxu0
        %v1486 = vadd.f32 %v550, %v1485
        %v1487 = vpop.f32.mrf.mxu0
        %1488 = vmatprep.mubr.bf16.mxu0 0
        %1489 = vmatmul.mubr.bf16.gmra.mxu0 %v867
        %v1490 = vpop.f32.mrf.mxu0
        %v1491 = vadd.f32 %v550, %v1490
        %v1492 = vpop.f32.mrf.mxu0
        %v1493 = vpop.f32.mrf.mxu0
        %v1494 = vadd.f32 %v550, %v1493
        %v1495 = vpop.f32.mrf.mxu0
        %1496 = vmatprep.mubr.bf16.mxu0 0
        %1497 = vmatmul.mubr.bf16.gmra.mxu0 %v868
        %v1498 = vpop.f32.mrf.mxu0
        %v1499 = vadd.f32 %v550, %v1498
        %v1500 = vpop.f32.mrf.mxu0
        %v1501 = vpop.f32.mrf.mxu0
        %v1502 = vadd.f32 %v550, %v1501
        %v1503 = vpop.f32.mrf.mxu0
        %1504 = vmatprep.mubr.bf16.mxu0 0
        %1505 = vmatmul.mubr.bf16.gmra.mxu0 %v869
        %v1506 = vpop.f32.mrf.mxu0
        %v1507 = vadd.f32 %v550, %v1506
        %v1508 = vpop.f32.mrf.mxu0
        %v1509 = vpop.f32.mrf.mxu0
        %v1510 = vadd.f32 %v550, %v1509
        %v1511 = vpop.f32.mrf.mxu0
        %1512 = vmatprep.mubr.bf16.mxu0 0
        %1513 = vmatmul.mubr.bf16.gmra.mxu0 %v870
        %v1514 = vpop.f32.mrf.mxu0
        %v1515 = vadd.f32 %v550, %v1514
        %v1516 = vpop.f32.mrf.mxu0
        %v1517 = vpop.f32.mrf.mxu0
        %v1518 = vadd.f32 %v550, %v1517
        %v1519 = vpop.f32.mrf.mxu0
        %1520 = vmatprep.mubr.bf16.mxu0 0
        %1521 = vmatmul.mubr.bf16.gmra.mxu0 %v871
        %v1522 = vpop.f32.mrf.mxu0
        %v1523 = vadd.f32 %v550, %v1522
        %v1524 = vpop.f32.mrf.mxu0
        %v1525 = vpop.f32.mrf.mxu0
        %v1526 = vadd.f32 %v550, %v1525
        %v1527 = vpop.f32.mrf.mxu0
        %1528 = vdwg.mxu0
        %v1529 = vpack.c.bf16 %v1022, %v1019
        %v1530 = vpack.c.bf16 %v1030, %v1027
        %v1531 = vpack.c.bf16 %v1038, %v1035
        %v1532 = vpack.c.bf16 %v1046, %v1043
        %v1533 = vpack.c.bf16 %v1054, %v1051
        %v1534 = vpack.c.bf16 %v1062, %v1059
        %v1535 = vpack.c.bf16 %v1070, %v1067
        %v1536 = vpack.c.bf16 %v1078, %v1075
        %v1537 = vpack.c.bf16 %v1086, %v1083
        %v1538 = vpack.c.bf16 %v1094, %v1091
        %v1539 = vpack.c.bf16 %v1102, %v1099
        %v1540 = vpack.c.bf16 %v1110, %v1107
        %v1541 = vpack.c.bf16 %v1118, %v1115
        %v1542 = vpack.c.bf16 %v1126, %v1123
        %v1543 = vpack.c.bf16 %v1134, %v1131
        %v1544 = vpack.c.bf16 %v1142, %v1139
        %v1545 = vpack.c.bf16 %v1150, %v1147
        %v1546 = vpack.c.bf16 %v1158, %v1155
        %v1547 = vpack.c.bf16 %v1166, %v1163
        %v1548 = vpack.c.bf16 %v1174, %v1171
        %v1549 = vpack.c.bf16 %v1182, %v1179
        %v1550 = vpack.c.bf16 %v1190, %v1187
        %v1551 = vpack.c.bf16 %v1198, %v1195
        %v1552 = vpack.c.bf16 %v1206, %v1203
        %v1553 = vpack.c.bf16 %v1214, %v1211
        %v1554 = vpack.c.bf16 %v1222, %v1219
        %v1555 = vpack.c.bf16 %v1230, %v1227
        %v1556 = vpack.c.bf16 %v1238, %v1235
        %v1557 = vpack.c.bf16 %v1246, %v1243
        %v1558 = vpack.c.bf16 %v1254, %v1251
        %v1559 = vpack.c.bf16 %v1262, %v1259
        %v1560 = vpack.c.bf16 %v1270, %v1267
        %v1561 = vpack.c.bf16 %v1278, %v1275
        %v1562 = vpack.c.bf16 %v1286, %v1283
        %v1563 = vpack.c.bf16 %v1294, %v1291
        %v1564 = vpack.c.bf16 %v1302, %v1299
        %v1565 = vpack.c.bf16 %v1310, %v1307
        %v1566 = vpack.c.bf16 %v1318, %v1315
        %v1567 = vpack.c.bf16 %v1326, %v1323
        %v1568 = vpack.c.bf16 %v1334, %v1331
        %v1569 = vpack.c.bf16 %v1342, %v1339
        %v1570 = vpack.c.bf16 %v1350, %v1347
        %v1571 = vpack.c.bf16 %v1358, %v1355
        %v1572 = vpack.c.bf16 %v1366, %v1363
        %v1573 = vpack.c.bf16 %v1374, %v1371
        %v1574 = vpack.c.bf16 %v1382, %v1379
        %v1575 = vpack.c.bf16 %v1390, %v1387
        %v1576 = vpack.c.bf16 %v1398, %v1395
        %v1577 = vpack.c.bf16 %v1406, %v1403
        %v1578 = vpack.c.bf16 %v1414, %v1411
        %v1579 = vpack.c.bf16 %v1422, %v1419
        %v1580 = vpack.c.bf16 %v1430, %v1427
        %v1581 = vpack.c.bf16 %v1438, %v1435
        %v1582 = vpack.c.bf16 %v1446, %v1443
        %v1583 = vpack.c.bf16 %v1454, %v1451
        %v1584 = vpack.c.bf16 %v1462, %v1459
        %v1585 = vpack.c.bf16 %v1470, %v1467
        %v1586 = vpack.c.bf16 %v1478, %v1475
        %v1587 = vpack.c.bf16 %v1486, %v1483
        %v1588 = vpack.c.bf16 %v1494, %v1491
        %v1589 = vpack.c.bf16 %v1502, %v1499
        %v1590 = vpack.c.bf16 %v1510, %v1507
        %v1591 = vpack.c.bf16 %v1518, %v1515
        %v1592 = vpack.c.bf16 %v1526, %v1523
        %v1593 = vtanh.bf16.pop %v1529
        %v1594 = vtanh.bf16.pop %v1530
        %v1595 = vtanh.bf16.pop %v1531
        %v1596 = vtanh.bf16.pop %v1532
        %v1597 = vtanh.bf16.pop %v1533
        %v1598 = vtanh.bf16.pop %v1534
        %v1599 = vtanh.bf16.pop %v1535
        %v1600 = vtanh.bf16.pop %v1536
        %v1601 = vtanh.bf16.pop %v1537
        %v1602 = vtanh.bf16.pop %v1538
        %v1603 = vtanh.bf16.pop %v1539
        %v1604 = vtanh.bf16.pop %v1540
        %v1605 = vtanh.bf16.pop %v1541
        %v1606 = vtanh.bf16.pop %v1542
        %v1607 = vtanh.bf16.pop %v1543
        %v1608 = vtanh.bf16.pop %v1544
        %v1609 = vtanh.bf16.pop %v1545
        %v1610 = vtanh.bf16.pop %v1546
        %v1611 = vtanh.bf16.pop %v1547
        %v1612 = vtanh.bf16.pop %v1548
        %v1613 = vtanh.bf16.pop %v1549
        %v1614 = vtanh.bf16.pop %v1550
        %v1615 = vtanh.bf16.pop %v1551
        %v1616 = vtanh.bf16.pop %v1552
        %v1617 = vtanh.bf16.pop %v1553
        %v1618 = vtanh.bf16.pop %v1554
        %v1619 = vtanh.bf16.pop %v1555
        %v1620 = vtanh.bf16.pop %v1556
        %v1621 = vtanh.bf16.pop %v1557
        %v1622 = vtanh.bf16.pop %v1558
        %v1623 = vtanh.bf16.pop %v1559
        %v1624 = vtanh.bf16.pop %v1560
        %v1625 = vtanh.bf16.pop %v1561
        %v1626 = vtanh.bf16.pop %v1562
        %v1627 = vtanh.bf16.pop %v1563
        %v1628 = vtanh.bf16.pop %v1564
        %v1629 = vtanh.bf16.pop %v1565
        %v1630 = vtanh.bf16.pop %v1566
        %v1631 = vtanh.bf16.pop %v1567
        %v1632 = vtanh.bf16.pop %v1568
        %v1633 = vtanh.bf16.pop %v1569
        %v1634 = vtanh.bf16.pop %v1570
        %v1635 = vtanh.bf16.pop %v1571
        %v1636 = vtanh.bf16.pop %v1572
        %v1637 = vtanh.bf16.pop %v1573
        %v1638 = vtanh.bf16.pop %v1574
        %v1639 = vtanh.bf16.pop %v1575
        %v1640 = vtanh.bf16.pop %v1576
        %v1641 = vtanh.bf16.pop %v1577
        %v1642 = vtanh.bf16.pop %v1578
        %v1643 = vtanh.bf16.pop %v1579
        %v1644 = vtanh.bf16.pop %v1580
        %v1645 = vtanh.bf16.pop %v1581
        %v1646 = vtanh.bf16.pop %v1582
        %v1647 = vtanh.bf16.pop %v1583
        %v1648 = vtanh.bf16.pop %v1584
        %v1649 = vtanh.bf16.pop %v1585
        %v1650 = vtanh.bf16.pop %v1586
        %v1651 = vtanh.bf16.pop %v1587
        %v1652 = vtanh.bf16.pop %v1588
        %v1653 = vtanh.bf16.pop %v1589
        %v1654 = vtanh.bf16.pop %v1590
        %v1655 = vtanh.bf16.pop %v1591
        %v1656 = vtanh.bf16.pop %v1592
        %v1657 = vld [vmem:[%s399] sm:$0xf]
        %v1658 = vld [vmem:[#allocation7] sm:$0xf]
        %v1659 = vld [vmem:[#allocation7 + $0x4] sm:$0xf]
        %v1660 = vld [vmem:[#allocation7 + $0x8] sm:$0xf]
        %v1661 = vld [vmem:[#allocation7 + $0xc] sm:$0xf]
        %v1662 = vld [vmem:[#allocation7 + $0x10] sm:$0xf]
        %v1663 = vld [vmem:[#allocation7 + $0x14] sm:$0xf]
        %v1664 = vld [vmem:[#allocation7 + $0x18] sm:$0xf]
        %v1665 = vld [vmem:[#allocation7 + $0x1c] sm:$0xf]
        %v1666 = vld [vmem:[#allocation7 + $0x20] sm:$0xf]
        %v1667 = vld [vmem:[#allocation7 + $0x24] sm:$0xf]
        %v1668 = vld [vmem:[#allocation7 + $0x28] sm:$0xf]
        %v1669 = vld [vmem:[#allocation7 + $0x2c] sm:$0xf]
        %v1670 = vld [vmem:[#allocation7 + $0x30] sm:$0xf]
        %v1671 = vld [vmem:[#allocation7 + $0x34] sm:$0xf]
        %v1672 = vld [vmem:[#allocation7 + $0x38] sm:$0xf]
        %v1673 = vld [vmem:[#allocation7 + $0x3c] sm:$0xf]
        %v1674 = vld [vmem:[%s6] sm:$0x1]
        %v1676 = vlaneseq
        %v1677 = vshrl.u32 %v1676, 7
        %v1678 = vsub.s32 0, %v1677
        %v1679 = vrot.slane %v1674, %v1678
        %v1697 = vunpack.c.l.b16 %v1658
        %v1698 = vunpack.c.l.b16 %v1659
        %v1699 = vunpack.c.l.b16 %v1660
        %v1700 = vunpack.c.l.b16 %v1661
        %v1701 = vunpack.c.l.b16 %v1662
        %v1702 = vunpack.c.l.b16 %v1663
        %v1703 = vunpack.c.l.b16 %v1664
        %v1704 = vunpack.c.l.b16 %v1665
        %v1705 = vunpack.c.l.b16 %v1666
        %v1706 = vunpack.c.l.b16 %v1667
        %v1707 = vunpack.c.l.b16 %v1668
        %v1708 = vunpack.c.l.b16 %v1669
        %v1709 = vunpack.c.l.b16 %v1670
        %v1710 = vunpack.c.l.b16 %v1671
        %v1711 = vunpack.c.l.b16 %v1672
        %v1712 = vunpack.c.l.b16 %v1673
        %v1713 = vpack.c.b16 %v1698, %v1697
        %v1714 = vpack.c.b16 %v1700, %v1699
        %v1715 = vpack.c.b16 %v1702, %v1701
        %v1716 = vpack.c.b16 %v1704, %v1703
        %v1717 = vpack.c.b16 %v1706, %v1705
        %v1718 = vpack.c.b16 %v1708, %v1707
        %v1719 = vpack.c.b16 %v1710, %v1709
        %v1720 = vpack.c.b16 %v1712, %v1711
        %1729 = vmatprep.subr.bf16.mxu0 0
        %1730 = vmatpush1.bf16.msra.mxu0 %v1720
        %1731 = vmatprep.subr.bf16.mxu0 0
        %1732 = vmatpush1.bf16.msra.mxu0 %v1719
        %1733 = vmatprep.subr.bf16.mxu0 0
        %1734 = vmatpush1.bf16.msra.mxu0 %v1718
        %1735 = vmatprep.subr.bf16.mxu0 0
        %1736 = vmatpush1.bf16.msra.mxu0 %v1717
        %1737 = vmatprep.subr.bf16.mxu0 0
        %1738 = vmatpush1.bf16.msra.mxu0 %v1716
        %1739 = vmatprep.subr.bf16.mxu0 0
        %1740 = vmatpush1.bf16.msra.mxu0 %v1715
        %1741 = vmatprep.subr.bf16.mxu0 0
        %1742 = vmatpush1.bf16.msra.mxu0 %v1714
        %1743 = vmatprep.subr.bf16.mxu0 0
        %1744 = vmatpush1.bf16.msra.mxu0 %v1713
        %1745 = vmatprep.subr.bf16.mxu0 0
        %1746 = vmatpush2.bf16.msra.mxu0 0
        %1747 = vmatprep.subr.bf16.mxu0 0
        %1748 = vmatpush2.bf16.msra.mxu0 0
        %1749 = vmatprep.subr.bf16.mxu0 0
        %1750 = vmatpush2.bf16.msra.mxu0 0
        %1751 = vmatprep.subr.bf16.mxu0 0
        %1752 = vmatpush2.bf16.msra.mxu0 0
        %1753 = vmatprep.subr.bf16.mxu0 0
        %1754 = vmatpush2.bf16.msra.mxu0 0
        %1755 = vmatprep.subr.bf16.mxu0 0
        %1756 = vmatpush2.bf16.msra.mxu0 0
        %1757 = vmatprep.subr.bf16.mxu0 0
        %1758 = vmatpush2.bf16.msra.mxu0 0
        %1759 = vmatprep.subr.bf16.mxu0 0
        %1760 = vmatpush2.bf16.msra.mxu0 0
        %1761 = vmatprep.mubr.bf16.mxu0 0
        %1762 = vmatmul.mubr.bf16.gmra.mxu0 %v1657
        %v1763 = vpop.f32.mrf.mxu0
        %v1764 = vadd.f32 %v1679, %v1763
        %v1765 = vpop.f32.mrf.mxu0
        %v1766 = vpop.f32.mrf.mxu0
        %v1767 = vpop.f32.mrf.mxu0
        %1768 = vdwg.mxu0
        %v1769 = vtanh.pop %v1764
        %v1770 = vpack.c.bf16 %v1769, %v1769
        %v1773 = vunpack.c.l.s4 1966171168
        %v1774 = vunpack.c.0.s8 %v1773
        %v1775 = vlaneseq
        %v1776 = vshrl.u32 %v1775, 7
        %v1777 = vsub.s32 %v1774, %v1776
        %v1778 = vrot.slane %v1770, %v1777
        %v1779 = vcombine.high %v1778, %v1778
        %v1781 = vunpack.c.l.s4 1966171168
        %v1782 = vunpack.c.0.s8 %v1781
        %v1783 = vlaneseq
        %v1784 = vshrl.u32 %v1783, 7
        %v1785 = vsub.s32 %v1782, %v1784
        %v1786 = vrot.slane %v1778, %v1785
        %v1788 = vunpack.c.l.s4 1966171168
        %v1789 = vunpack.c.0.s8 %v1788
        %v1790 = vlaneseq
        %v1791 = vshrl.u32 %v1790, 7
        %v1792 = vsub.s32 %v1789, %v1791
        %v1793 = vrot.slane %v1779, %v1792
        %v1794 = vcombine.high %v1786, %v1786
        %v1795 = vcombine.high %v1793, %v1793
        %v1796 = vunpack.i.l.s16 %v1786
        %v1797 = vunpack.i.h.s16 %v1786
        %v1798 = vunpack.i.l.s16 %v1793
        %v1799 = vunpack.i.h.s16 %v1793
        %v1800 = vunpack.i.l.s16 %v1794
        %v1801 = vunpack.i.h.s16 %v1794
        %v1802 = vunpack.i.l.s16 %v1795
        %v1803 = vunpack.i.h.s16 %v1795
        %v1804 = vpack.i.b16 %v1796, %v1796
        %v1805 = vpack.i.b16 %v1797, %v1797
        %v1806 = vpack.i.b16 %v1798, %v1798
        %v1807 = vpack.i.b16 %v1799, %v1799
        %v1808 = vpack.i.b16 %v1800, %v1800
        %v1809 = vpack.i.b16 %v1801, %v1801
        %v1810 = vpack.i.b16 %v1802, %v1802
        %v1811 = vpack.i.b16 %v1803, %v1803
        %v1812 = vlaneseq
        %v1813 = vshrl.u32 %v1812, 7
        %v1814 = vsub.s32 0, %v1813
        %v1815 = vrot.slane %v1804, %v1814
        %v1816 = vlaneseq
        %v1817 = vshrl.u32 %v1816, 7
        %v1818 = vsub.s32 0, %v1817
        %v1819 = vrot.slane %v1805, %v1818
        %v1820 = vlaneseq
        %v1821 = vshrl.u32 %v1820, 7
        %v1822 = vsub.s32 0, %v1821
        %v1823 = vrot.slane %v1806, %v1822
        %v1824 = vlaneseq
        %v1825 = vshrl.u32 %v1824, 7
        %v1826 = vsub.s32 0, %v1825
        %v1827 = vrot.slane %v1807, %v1826
        %v1828 = vlaneseq
        %v1829 = vshrl.u32 %v1828, 7
        %v1830 = vsub.s32 0, %v1829
        %v1831 = vrot.slane %v1808, %v1830
        %v1832 = vlaneseq
        %v1833 = vshrl.u32 %v1832, 7
        %v1834 = vsub.s32 0, %v1833
        %v1835 = vrot.slane %v1809, %v1834
        %v1836 = vlaneseq
        %v1837 = vshrl.u32 %v1836, 7
        %v1838 = vsub.s32 0, %v1837
        %v1839 = vrot.slane %v1810, %v1838
        %v1840 = vlaneseq
        %v1841 = vshrl.u32 %v1840, 7
        %v1842 = vsub.s32 0, %v1841
        %v1843 = vrot.slane %v1811, %v1842
        %v1845 = vpack.i.b16 %v1815, %v1815
        %v1847 = vlaneseq
        %v1848 = vshrl.u32 %v1847, 7
        %v1849 = vsub.s32 0, %v1848
        %v1850 = vrot.slane %v1845, %v1849
        %v1852 = vpack.i.b16 %v1819, %v1819
        %v1854 = vlaneseq
        %v1855 = vshrl.u32 %v1854, 7
        %v1856 = vsub.s32 0, %v1855
        %v1857 = vrot.slane %v1852, %v1856
        %v1859 = vpack.i.b16 %v1823, %v1823
        %v1861 = vlaneseq
        %v1862 = vshrl.u32 %v1861, 7
        %v1863 = vsub.s32 0, %v1862
        %v1864 = vrot.slane %v1859, %v1863
        %v1866 = vpack.i.b16 %v1827, %v1827
        %v1868 = vlaneseq
        %v1869 = vshrl.u32 %v1868, 7
        %v1870 = vsub.s32 0, %v1869
        %v1871 = vrot.slane %v1866, %v1870
        %v1873 = vpack.i.b16 %v1831, %v1831
        %v1875 = vlaneseq
        %v1876 = vshrl.u32 %v1875, 7
        %v1877 = vsub.s32 0, %v1876
        %v1878 = vrot.slane %v1873, %v1877
        %v1880 = vpack.i.b16 %v1835, %v1835
        %v1882 = vlaneseq
        %v1883 = vshrl.u32 %v1882, 7
        %v1884 = vsub.s32 0, %v1883
        %v1885 = vrot.slane %v1880, %v1884
        %v1887 = vpack.i.b16 %v1839, %v1839
        %v1889 = vlaneseq
        %v1890 = vshrl.u32 %v1889, 7
        %v1891 = vsub.s32 0, %v1890
        %v1892 = vrot.slane %v1887, %v1891
        %v1894 = vpack.i.b16 %v1843, %v1843
        %v1896 = vlaneseq
        %v1897 = vshrl.u32 %v1896, 7
        %v1898 = vsub.s32 0, %v1897
        %v1899 = vrot.slane %v1894, %v1898
        %v1900 = vmul.bf16 %v1593, %v1850
        %v1901 = vmul.bf16 %v1594, %v1850
        %v1902 = vmul.bf16 %v1595, %v1850
        %v1903 = vmul.bf16 %v1596, %v1850
        %v1904 = vmul.bf16 %v1597, %v1850
        %v1905 = vmul.bf16 %v1598, %v1850
        %v1906 = vmul.bf16 %v1599, %v1850
        %v1907 = vmul.bf16 %v1600, %v1850
        %v1908 = vmul.bf16 %v1601, %v1857
        %v1909 = vmul.bf16 %v1602, %v1857
        %v1910 = vmul.bf16 %v1603, %v1857
        %v1911 = vmul.bf16 %v1604, %v1857
        %v1912 = vmul.bf16 %v1605, %v1857
        %v1913 = vmul.bf16 %v1606, %v1857
        %v1914 = vmul.bf16 %v1607, %v1857
        %v1915 = vmul.bf16 %v1608, %v1857
        %v1916 = vmul.bf16 %v1609, %v1864
        %v1917 = vmul.bf16 %v1610, %v1864
        %v1918 = vmul.bf16 %v1611, %v1864
        %v1919 = vmul.bf16 %v1612, %v1864
        %v1920 = vmul.bf16 %v1613, %v1864
        %v1921 = vmul.bf16 %v1614, %v1864
        %v1922 = vmul.bf16 %v1615, %v1864
        %v1923 = vmul.bf16 %v1616, %v1864
        %v1924 = vmul.bf16 %v1617, %v1871
        %v1925 = vmul.bf16 %v1618, %v1871
        %v1926 = vmul.bf16 %v1619, %v1871
        %v1927 = vmul.bf16 %v1620, %v1871
        %v1928 = vmul.bf16 %v1621, %v1871
        %v1929 = vmul.bf16 %v1622, %v1871
        %v1930 = vmul.bf16 %v1623, %v1871
        %v1931 = vmul.bf16 %v1624, %v1871
        %v1932 = vmul.bf16 %v1625, %v1878
        %v1933 = vmul.bf16 %v1626, %v1878
        %v1934 = vmul.bf16 %v1627, %v1878
        %v1935 = vmul.bf16 %v1628, %v1878
        %v1936 = vmul.bf16 %v1629, %v1878
        %v1937 = vmul.bf16 %v1630, %v1878
        %v1938 = vmul.bf16 %v1631, %v1878
        %v1939 = vmul.bf16 %v1632, %v1878
        %v1940 = vmul.bf16 %v1633, %v1885
        %v1941 = vmul.bf16 %v1634, %v1885
        %v1942 = vmul.bf16 %v1635, %v1885
        %v1943 = vmul.bf16 %v1636, %v1885
        %v1944 = vmul.bf16 %v1637, %v1885
        %v1945 = vmul.bf16 %v1638, %v1885
        %v1946 = vmul.bf16 %v1639, %v1885
        %v1947 = vmul.bf16 %v1640, %v1885
        %v1948 = vmul.bf16 %v1641, %v1892
        %v1949 = vmul.bf16 %v1642, %v1892
        %v1950 = vmul.bf16 %v1643, %v1892
        %v1951 = vmul.bf16 %v1644, %v1892
        %v1952 = vmul.bf16 %v1645, %v1892
        %v1953 = vmul.bf16 %v1646, %v1892
        %v1954 = vmul.bf16 %v1647, %v1892
        %v1955 = vmul.bf16 %v1648, %v1892
        %v1956 = vmul.bf16 %v1649, %v1899
        %v1957 = vmul.bf16 %v1650, %v1899
        %v1958 = vmul.bf16 %v1651, %v1899
        %v1959 = vmul.bf16 %v1652, %v1899
        %v1960 = vmul.bf16 %v1653, %v1899
        %v1961 = vmul.bf16 %v1654, %v1899
        %v1962 = vmul.bf16 %v1655, %v1899
        %v1963 = vmul.bf16 %v1656, %v1899
        %v1964 = vunpack.c.l.bf16 %v1900
        %v1965 = vunpack.c.h.bf16 %v1900
        %v1966 = vunpack.c.l.bf16 %v1901
        %v1967 = vunpack.c.h.bf16 %v1901
        %v1968 = vunpack.c.l.bf16 %v1902
        %v1969 = vunpack.c.h.bf16 %v1902
        %v1970 = vunpack.c.l.bf16 %v1903
        %v1971 = vunpack.c.h.bf16 %v1903
        %v1972 = vunpack.c.l.bf16 %v1904
        %v1973 = vunpack.c.h.bf16 %v1904
        %v1974 = vunpack.c.l.bf16 %v1905
        %v1975 = vunpack.c.h.bf16 %v1905
        %v1976 = vunpack.c.l.bf16 %v1906
        %v1977 = vunpack.c.h.bf16 %v1906
        %v1978 = vunpack.c.l.bf16 %v1907
        %v1979 = vunpack.c.h.bf16 %v1907
        %v1980 = vunpack.c.l.bf16 %v1908
        %v1981 = vunpack.c.h.bf16 %v1908
        %v1982 = vunpack.c.l.bf16 %v1909
        %v1983 = vunpack.c.h.bf16 %v1909
        %v1984 = vunpack.c.l.bf16 %v1910
        %v1985 = vunpack.c.h.bf16 %v1910
        %v1986 = vunpack.c.l.bf16 %v1911
        %v1987 = vunpack.c.h.bf16 %v1911
        %v1988 = vunpack.c.l.bf16 %v1912
        %v1989 = vunpack.c.h.bf16 %v1912
        %v1990 = vunpack.c.l.bf16 %v1913
        %v1991 = vunpack.c.h.bf16 %v1913
        %v1992 = vunpack.c.l.bf16 %v1914
        %v1993 = vunpack.c.h.bf16 %v1914
        %v1994 = vunpack.c.l.bf16 %v1915
        %v1995 = vunpack.c.h.bf16 %v1915
        %v1996 = vunpack.c.l.bf16 %v1916
        %v1997 = vunpack.c.h.bf16 %v1916
        %v1998 = vunpack.c.l.bf16 %v1917
        %v1999 = vunpack.c.h.bf16 %v1917
        %v2000 = vunpack.c.l.bf16 %v1918
        %v2001 = vunpack.c.h.bf16 %v1918
        %v2002 = vunpack.c.l.bf16 %v1919
        %v2003 = vunpack.c.h.bf16 %v1919
        %v2004 = vunpack.c.l.bf16 %v1920
        %v2005 = vunpack.c.h.bf16 %v1920
        %v2006 = vunpack.c.l.bf16 %v1921
        %v2007 = vunpack.c.h.bf16 %v1921
        %v2008 = vunpack.c.l.bf16 %v1922
        %v2009 = vunpack.c.h.bf16 %v1922
        %v2010 = vunpack.c.l.bf16 %v1923
        %v2011 = vunpack.c.h.bf16 %v1923
        %v2012 = vunpack.c.l.bf16 %v1924
        %v2013 = vunpack.c.h.bf16 %v1924
        %v2014 = vunpack.c.l.bf16 %v1925
        %v2015 = vunpack.c.h.bf16 %v1925
        %v2016 = vunpack.c.l.bf16 %v1926
        %v2017 = vunpack.c.h.bf16 %v1926
        %v2018 = vunpack.c.l.bf16 %v1927
        %v2019 = vunpack.c.h.bf16 %v1927
        %v2020 = vunpack.c.l.bf16 %v1928
        %v2021 = vunpack.c.h.bf16 %v1928
        %v2022 = vunpack.c.l.bf16 %v1929
        %v2023 = vunpack.c.h.bf16 %v1929
        %v2024 = vunpack.c.l.bf16 %v1930
        %v2025 = vunpack.c.h.bf16 %v1930
        %v2026 = vunpack.c.l.bf16 %v1931
        %v2027 = vunpack.c.h.bf16 %v1931
        %v2028 = vunpack.c.l.bf16 %v1932
        %v2029 = vunpack.c.h.bf16 %v1932
        %v2030 = vunpack.c.l.bf16 %v1933
        %v2031 = vunpack.c.h.bf16 %v1933
        %v2032 = vunpack.c.l.bf16 %v1934
        %v2033 = vunpack.c.h.bf16 %v1934
        %v2034 = vunpack.c.l.bf16 %v1935
        %v2035 = vunpack.c.h.bf16 %v1935
        %v2036 = vunpack.c.l.bf16 %v1936
        %v2037 = vunpack.c.h.bf16 %v1936
        %v2038 = vunpack.c.l.bf16 %v1937
        %v2039 = vunpack.c.h.bf16 %v1937
        %v2040 = vunpack.c.l.bf16 %v1938
        %v2041 = vunpack.c.h.bf16 %v1938
        %v2042 = vunpack.c.l.bf16 %v1939
        %v2043 = vunpack.c.h.bf16 %v1939
        %v2044 = vunpack.c.l.bf16 %v1940
        %v2045 = vunpack.c.h.bf16 %v1940
        %v2046 = vunpack.c.l.bf16 %v1941
        %v2047 = vunpack.c.h.bf16 %v1941
        %v2048 = vunpack.c.l.bf16 %v1942
        %v2049 = vunpack.c.h.bf16 %v1942
        %v2050 = vunpack.c.l.bf16 %v1943
        %v2051 = vunpack.c.h.bf16 %v1943
        %v2052 = vunpack.c.l.bf16 %v1944
        %v2053 = vunpack.c.h.bf16 %v1944
        %v2054 = vunpack.c.l.bf16 %v1945
        %v2055 = vunpack.c.h.bf16 %v1945
        %v2056 = vunpack.c.l.bf16 %v1946
        %v2057 = vunpack.c.h.bf16 %v1946
        %v2058 = vunpack.c.l.bf16 %v1947
        %v2059 = vunpack.c.h.bf16 %v1947
        %v2060 = vunpack.c.l.bf16 %v1948
        %v2061 = vunpack.c.h.bf16 %v1948
        %v2062 = vunpack.c.l.bf16 %v1949
        %v2063 = vunpack.c.h.bf16 %v1949
        %v2064 = vunpack.c.l.bf16 %v1950
        %v2065 = vunpack.c.h.bf16 %v1950
        %v2066 = vunpack.c.l.bf16 %v1951
        %v2067 = vunpack.c.h.bf16 %v1951
        %v2068 = vunpack.c.l.bf16 %v1952
        %v2069 = vunpack.c.h.bf16 %v1952
        %v2070 = vunpack.c.l.bf16 %v1953
        %v2071 = vunpack.c.h.bf16 %v1953
        %v2072 = vunpack.c.l.bf16 %v1954
        %v2073 = vunpack.c.h.bf16 %v1954
        %v2074 = vunpack.c.l.bf16 %v1955
        %v2075 = vunpack.c.h.bf16 %v1955
        %v2076 = vunpack.c.l.bf16 %v1956
        %v2077 = vunpack.c.h.bf16 %v1956
        %v2078 = vunpack.c.l.bf16 %v1957
        %v2079 = vunpack.c.h.bf16 %v1957
        %v2080 = vunpack.c.l.bf16 %v1958
        %v2081 = vunpack.c.h.bf16 %v1958
        %v2082 = vunpack.c.l.bf16 %v1959
        %v2083 = vunpack.c.h.bf16 %v1959
        %v2084 = vunpack.c.l.bf16 %v1960
        %v2085 = vunpack.c.h.bf16 %v1960
        %v2086 = vunpack.c.l.bf16 %v1961
        %v2087 = vunpack.c.h.bf16 %v1961
        %v2088 = vunpack.c.l.bf16 %v1962
        %v2089 = vunpack.c.h.bf16 %v1962
        %v2090 = vunpack.c.l.bf16 %v1963
        %v2091 = vunpack.c.h.bf16 %v1963
        %2092 = vadd.xlane.f32.xlu0 %v1964
        %v2093 = vpop.xlane.xlu0 %2092
        %2094 = vadd.xlane.f32.xlu0 %v1965
        %v2095 = vpop.xlane.xlu0 %2094
        %2096 = vadd.xlane.f32.xlu0 %v1966
        %v2097 = vpop.xlane.xlu0 %2096
        %2098 = vadd.xlane.f32.xlu0 %v1967
        %v2099 = vpop.xlane.xlu0 %2098
        %2100 = vadd.xlane.f32.xlu0 %v1968
        %v2101 = vpop.xlane.xlu0 %2100
        %2102 = vadd.xlane.f32.xlu0 %v1969
        %v2103 = vpop.xlane.xlu0 %2102
        %2104 = vadd.xlane.f32.xlu0 %v1970
        %v2105 = vpop.xlane.xlu0 %2104
        %2106 = vadd.xlane.f32.xlu0 %v1971
        %v2107 = vpop.xlane.xlu0 %2106
        %2108 = vadd.xlane.f32.xlu0 %v1972
        %v2109 = vpop.xlane.xlu0 %2108
        %2110 = vadd.xlane.f32.xlu0 %v1973
        %v2111 = vpop.xlane.xlu0 %2110
        %2112 = vadd.xlane.f32.xlu0 %v1974
        %v2113 = vpop.xlane.xlu0 %2112
        %2114 = vadd.xlane.f32.xlu0 %v1975
        %v2115 = vpop.xlane.xlu0 %2114
        %2116 = vadd.xlane.f32.xlu0 %v1976
        %v2117 = vpop.xlane.xlu0 %2116
        %2118 = vadd.xlane.f32.xlu0 %v1977
        %v2119 = vpop.xlane.xlu0 %2118
        %2120 = vadd.xlane.f32.xlu0 %v1978
        %v2121 = vpop.xlane.xlu0 %2120
        %2122 = vadd.xlane.f32.xlu0 %v1979
        %v2123 = vpop.xlane.xlu0 %2122
        %2124 = vadd.xlane.f32.xlu0 %v1980
        %v2125 = vpop.xlane.xlu0 %2124
        %2126 = vadd.xlane.f32.xlu0 %v1981
        %v2127 = vpop.xlane.xlu0 %2126
        %2128 = vadd.xlane.f32.xlu0 %v1982
        %v2129 = vpop.xlane.xlu0 %2128
        %2130 = vadd.xlane.f32.xlu0 %v1983
        %v2131 = vpop.xlane.xlu0 %2130
        %2132 = vadd.xlane.f32.xlu0 %v1984
        %v2133 = vpop.xlane.xlu0 %2132
        %2134 = vadd.xlane.f32.xlu0 %v1985
        %v2135 = vpop.xlane.xlu0 %2134
        %2136 = vadd.xlane.f32.xlu0 %v1986
        %v2137 = vpop.xlane.xlu0 %2136
        %2138 = vadd.xlane.f32.xlu0 %v1987
        %v2139 = vpop.xlane.xlu0 %2138
        %2140 = vadd.xlane.f32.xlu0 %v1988
        %v2141 = vpop.xlane.xlu0 %2140
        %2142 = vadd.xlane.f32.xlu0 %v1989
        %v2143 = vpop.xlane.xlu0 %2142
        %2144 = vadd.xlane.f32.xlu0 %v1990
        %v2145 = vpop.xlane.xlu0 %2144
        %2146 = vadd.xlane.f32.xlu0 %v1991
        %v2147 = vpop.xlane.xlu0 %2146
        %2148 = vadd.xlane.f32.xlu0 %v1992
        %v2149 = vpop.xlane.xlu0 %2148
        %2150 = vadd.xlane.f32.xlu0 %v1993
        %v2151 = vpop.xlane.xlu0 %2150
        %2152 = vadd.xlane.f32.xlu0 %v1994
        %v2153 = vpop.xlane.xlu0 %2152
        %2154 = vadd.xlane.f32.xlu0 %v1995
        %v2155 = vpop.xlane.xlu0 %2154
        %2156 = vadd.xlane.f32.xlu0 %v1996
        %v2157 = vpop.xlane.xlu0 %2156
        %2158 = vadd.xlane.f32.xlu0 %v1997
        %v2159 = vpop.xlane.xlu0 %2158
        %2160 = vadd.xlane.f32.xlu0 %v1998
        %v2161 = vpop.xlane.xlu0 %2160
        %2162 = vadd.xlane.f32.xlu0 %v1999
        %v2163 = vpop.xlane.xlu0 %2162
        %2164 = vadd.xlane.f32.xlu0 %v2000
        %v2165 = vpop.xlane.xlu0 %2164
        %2166 = vadd.xlane.f32.xlu0 %v2001
        %v2167 = vpop.xlane.xlu0 %2166
        %2168 = vadd.xlane.f32.xlu0 %v2002
        %v2169 = vpop.xlane.xlu0 %2168
        %2170 = vadd.xlane.f32.xlu0 %v2003
        %v2171 = vpop.xlane.xlu0 %2170
        %2172 = vadd.xlane.f32.xlu0 %v2004
        %v2173 = vpop.xlane.xlu0 %2172
        %2174 = vadd.xlane.f32.xlu0 %v2005
        %v2175 = vpop.xlane.xlu0 %2174
        %2176 = vadd.xlane.f32.xlu0 %v2006
        %v2177 = vpop.xlane.xlu0 %2176
        %2178 = vadd.xlane.f32.xlu0 %v2007
        %v2179 = vpop.xlane.xlu0 %2178
        %2180 = vadd.xlane.f32.xlu0 %v2008
        %v2181 = vpop.xlane.xlu0 %2180
        %2182 = vadd.xlane.f32.xlu0 %v2009
        %v2183 = vpop.xlane.xlu0 %2182
        %2184 = vadd.xlane.f32.xlu0 %v2010
        %v2185 = vpop.xlane.xlu0 %2184
        %2186 = vadd.xlane.f32.xlu0 %v2011
        %v2187 = vpop.xlane.xlu0 %2186
        %2188 = vadd.xlane.f32.xlu0 %v2012
        %v2189 = vpop.xlane.xlu0 %2188
        %2190 = vadd.xlane.f32.xlu0 %v2013
        %v2191 = vpop.xlane.xlu0 %2190
        %2192 = vadd.xlane.f32.xlu0 %v2014
        %v2193 = vpop.xlane.xlu0 %2192
        %2194 = vadd.xlane.f32.xlu0 %v2015
        %v2195 = vpop.xlane.xlu0 %2194
        %2196 = vadd.xlane.f32.xlu0 %v2016
        %v2197 = vpop.xlane.xlu0 %2196
        %2198 = vadd.xlane.f32.xlu0 %v2017
        %v2199 = vpop.xlane.xlu0 %2198
        %2200 = vadd.xlane.f32.xlu0 %v2018
        %v2201 = vpop.xlane.xlu0 %2200
        %2202 = vadd.xlane.f32.xlu0 %v2019
        %v2203 = vpop.xlane.xlu0 %2202
        %2204 = vadd.xlane.f32.xlu0 %v2020
        %v2205 = vpop.xlane.xlu0 %2204
        %2206 = vadd.xlane.f32.xlu0 %v2021
        %v2207 = vpop.xlane.xlu0 %2206
        %2208 = vadd.xlane.f32.xlu0 %v2022
        %v2209 = vpop.xlane.xlu0 %2208
        %2210 = vadd.xlane.f32.xlu0 %v2023
        %v2211 = vpop.xlane.xlu0 %2210
        %2212 = vadd.xlane.f32.xlu0 %v2024
        %v2213 = vpop.xlane.xlu0 %2212
        %2214 = vadd.xlane.f32.xlu0 %v2025
        %v2215 = vpop.xlane.xlu0 %2214
        %2216 = vadd.xlane.f32.xlu0 %v2026
        %v2217 = vpop.xlane.xlu0 %2216
        %2218 = vadd.xlane.f32.xlu0 %v2027
        %v2219 = vpop.xlane.xlu0 %2218
        %2220 = vadd.xlane.f32.xlu0 %v2028
        %v2221 = vpop.xlane.xlu0 %2220
        %2222 = vadd.xlane.f32.xlu0 %v2029
        %v2223 = vpop.xlane.xlu0 %2222
        %2224 = vadd.xlane.f32.xlu0 %v2030
        %v2225 = vpop.xlane.xlu0 %2224
        %2226 = vadd.xlane.f32.xlu0 %v2031
        %v2227 = vpop.xlane.xlu0 %2226
        %2228 = vadd.xlane.f32.xlu0 %v2032
        %v2229 = vpop.xlane.xlu0 %2228
        %2230 = vadd.xlane.f32.xlu0 %v2033
        %v2231 = vpop.xlane.xlu0 %2230
        %2232 = vadd.xlane.f32.xlu0 %v2034
        %v2233 = vpop.xlane.xlu0 %2232
        %2234 = vadd.xlane.f32.xlu0 %v2035
        %v2235 = vpop.xlane.xlu0 %2234
        %2236 = vadd.xlane.f32.xlu0 %v2036
        %v2237 = vpop.xlane.xlu0 %2236
        %2238 = vadd.xlane.f32.xlu0 %v2037
        %v2239 = vpop.xlane.xlu0 %2238
        %2240 = vadd.xlane.f32.xlu0 %v2038
        %v2241 = vpop.xlane.xlu0 %2240
        %2242 = vadd.xlane.f32.xlu0 %v2039
        %v2243 = vpop.xlane.xlu0 %2242
        %2244 = vadd.xlane.f32.xlu0 %v2040
        %v2245 = vpop.xlane.xlu0 %2244
        %2246 = vadd.xlane.f32.xlu0 %v2041
        %v2247 = vpop.xlane.xlu0 %2246
        %2248 = vadd.xlane.f32.xlu0 %v2042
        %v2249 = vpop.xlane.xlu0 %2248
        %2250 = vadd.xlane.f32.xlu0 %v2043
        %v2251 = vpop.xlane.xlu0 %2250
        %2252 = vadd.xlane.f32.xlu0 %v2044
        %v2253 = vpop.xlane.xlu0 %2252
        %2254 = vadd.xlane.f32.xlu0 %v2045
        %v2255 = vpop.xlane.xlu0 %2254
        %2256 = vadd.xlane.f32.xlu0 %v2046
        %v2257 = vpop.xlane.xlu0 %2256
        %2258 = vadd.xlane.f32.xlu0 %v2047
        %v2259 = vpop.xlane.xlu0 %2258
        %2260 = vadd.xlane.f32.xlu0 %v2048
        %v2261 = vpop.xlane.xlu0 %2260
        %2262 = vadd.xlane.f32.xlu0 %v2049
        %v2263 = vpop.xlane.xlu0 %2262
        %2264 = vadd.xlane.f32.xlu0 %v2050
        %v2265 = vpop.xlane.xlu0 %2264
        %2266 = vadd.xlane.f32.xlu0 %v2051
        %v2267 = vpop.xlane.xlu0 %2266
        %2268 = vadd.xlane.f32.xlu0 %v2052
        %v2269 = vpop.xlane.xlu0 %2268
        %2270 = vadd.xlane.f32.xlu0 %v2053
        %v2271 = vpop.xlane.xlu0 %2270
        %2272 = vadd.xlane.f32.xlu0 %v2054
        %v2273 = vpop.xlane.xlu0 %2272
        %2274 = vadd.xlane.f32.xlu0 %v2055
        %v2275 = vpop.xlane.xlu0 %2274
        %2276 = vadd.xlane.f32.xlu0 %v2056
        %v2277 = vpop.xlane.xlu0 %2276
        %2278 = vadd.xlane.f32.xlu0 %v2057
        %v2279 = vpop.xlane.xlu0 %2278
        %2280 = vadd.xlane.f32.xlu0 %v2058
        %v2281 = vpop.xlane.xlu0 %2280
        %2282 = vadd.xlane.f32.xlu0 %v2059
        %v2283 = vpop.xlane.xlu0 %2282
        %2284 = vadd.xlane.f32.xlu0 %v2060
        %v2285 = vpop.xlane.xlu0 %2284
        %2286 = vadd.xlane.f32.xlu0 %v2061
        %v2287 = vpop.xlane.xlu0 %2286
        %2288 = vadd.xlane.f32.xlu0 %v2062
        %v2289 = vpop.xlane.xlu0 %2288
        %2290 = vadd.xlane.f32.xlu0 %v2063
        %v2291 = vpop.xlane.xlu0 %2290
        %2292 = vadd.xlane.f32.xlu0 %v2064
        %v2293 = vpop.xlane.xlu0 %2292
        %2294 = vadd.xlane.f32.xlu0 %v2065
        %v2295 = vpop.xlane.xlu0 %2294
        %2296 = vadd.xlane.f32.xlu0 %v2066
        %v2297 = vpop.xlane.xlu0 %2296
        %2298 = vadd.xlane.f32.xlu0 %v2067
        %v2299 = vpop.xlane.xlu0 %2298
        %2300 = vadd.xlane.f32.xlu0 %v2068
        %v2301 = vpop.xlane.xlu0 %2300
        %2302 = vadd.xlane.f32.xlu0 %v2069
        %v2303 = vpop.xlane.xlu0 %2302
        %2304 = vadd.xlane.f32.xlu0 %v2070
        %v2305 = vpop.xlane.xlu0 %2304
        %2306 = vadd.xlane.f32.xlu0 %v2071
        %v2307 = vpop.xlane.xlu0 %2306
        %2308 = vadd.xlane.f32.xlu0 %v2072
        %v2309 = vpop.xlane.xlu0 %2308
        %2310 = vadd.xlane.f32.xlu0 %v2073
        %v2311 = vpop.xlane.xlu0 %2310
        %2312 = vadd.xlane.f32.xlu0 %v2074
        %v2313 = vpop.xlane.xlu0 %2312
        %2314 = vadd.xlane.f32.xlu0 %v2075
        %v2315 = vpop.xlane.xlu0 %2314
        %2316 = vadd.xlane.f32.xlu0 %v2076
        %v2317 = vpop.xlane.xlu0 %2316
        %2318 = vadd.xlane.f32.xlu0 %v2077
        %v2319 = vpop.xlane.xlu0 %2318
        %2320 = vadd.xlane.f32.xlu0 %v2078
        %v2321 = vpop.xlane.xlu0 %2320
        %2322 = vadd.xlane.f32.xlu0 %v2079
        %v2323 = vpop.xlane.xlu0 %2322
        %2324 = vadd.xlane.f32.xlu0 %v2080
        %v2325 = vpop.xlane.xlu0 %2324
        %2326 = vadd.xlane.f32.xlu0 %v2081
        %v2327 = vpop.xlane.xlu0 %2326
        %2328 = vadd.xlane.f32.xlu0 %v2082
        %v2329 = vpop.xlane.xlu0 %2328
        %2330 = vadd.xlane.f32.xlu0 %v2083
        %v2331 = vpop.xlane.xlu0 %2330
        %2332 = vadd.xlane.f32.xlu0 %v2084
        %v2333 = vpop.xlane.xlu0 %2332
        %2334 = vadd.xlane.f32.xlu0 %v2085
        %v2335 = vpop.xlane.xlu0 %2334
        %2336 = vadd.xlane.f32.xlu0 %v2086
        %v2337 = vpop.xlane.xlu0 %2336
        %2338 = vadd.xlane.f32.xlu0 %v2087
        %v2339 = vpop.xlane.xlu0 %2338
        %2340 = vadd.xlane.f32.xlu0 %v2088
        %v2341 = vpop.xlane.xlu0 %2340
        %2342 = vadd.xlane.f32.xlu0 %v2089
        %v2343 = vpop.xlane.xlu0 %2342
        %2344 = vadd.xlane.f32.xlu0 %v2090
        %v2345 = vpop.xlane.xlu0 %2344
        %2346 = vadd.xlane.f32.xlu0 %v2091
        %v2347 = vpop.xlane.xlu0 %2346
        %v2348 = vlaneseq
        %v2349 = vand.u32 %v2348, 127
        %v2350 = vld [vmem:[%s394] sm:$0xff]
        %2351 = vset.pattern.permute.xlu0 0
        %2352 = vperm.xlu0 %2351, %v2350
        %v2353 = vpop.permute.xlu0 %2352
        %vm2354 = vcmp.lt.s32.totalorder %v2349, %v2353
        %v2483 = vlaneseq
        %v2484 = vshrl.u32 %v2483, 7
        %v2485 = vsub.s32 %v2349, %v2484
        %v2486 = vrot.slane %v2093, %v2485
        %v2487 = vadd.s32 %v2349, 4294967288
        %v2488 = vlaneseq
        %v2489 = vshrl.u32 %v2488, 7
        %v2490 = vsub.s32 %v2487, %v2489
        %v2491 = vrot.slane %v2095, %v2490
        %vm2492 = vcmask 130112
        %v2493 = vsel %vm2492, %v2491, %v2486
        %v2494 = vadd.s32 %v2349, 4294967280
        %v2495 = vlaneseq
        %v2496 = vshrl.u32 %v2495, 7
        %v2497 = vsub.s32 %v2494, %v2496
        %v2498 = vrot.slane %v2097, %v2497
        %vm2499 = vcmask 195712
        %v2500 = vsel %vm2499, %v2498, %v2493
        %v2501 = vadd.s32 %v2349, 4294967272
        %v2502 = vlaneseq
        %v2503 = vshrl.u32 %v2502, 7
        %v2504 = vsub.s32 %v2501, %v2503
        %v2505 = vrot.slane %v2099, %v2504
        %vm2506 = vcmask 261312
        %v2507 = vsel %vm2506, %v2505, %v2500
        %v2508 = vadd.s32 %v2349, 4294967264
        %v2509 = vlaneseq
        %v2510 = vshrl.u32 %v2509, 7
        %v2511 = vsub.s32 %v2508, %v2510
        %v2512 = vrot.slane %v2101, %v2511
        %vm2513 = vcmask 326912
        %v2514 = vsel %vm2513, %v2512, %v2507
        %v2515 = vadd.s32 %v2349, 4294967256
        %v2516 = vlaneseq
        %v2517 = vshrl.u32 %v2516, 7
        %v2518 = vsub.s32 %v2515, %v2517
        %v2519 = vrot.slane %v2103, %v2518
        %vm2520 = vcmask 392512
        %v2521 = vsel %vm2520, %v2519, %v2514
        %v2522 = vadd.s32 %v2349, 4294967248
        %v2523 = vlaneseq
        %v2524 = vshrl.u32 %v2523, 7
        %v2525 = vsub.s32 %v2522, %v2524
        %v2526 = vrot.slane %v2105, %v2525
        %vm2527 = vcmask 458112
        %v2528 = vsel %vm2527, %v2526, %v2521
        %v2529 = vadd.s32 %v2349, 4294967240
        %v2530 = vlaneseq
        %v2531 = vshrl.u32 %v2530, 7
        %v2532 = vsub.s32 %v2529, %v2531
        %v2533 = vrot.slane %v2107, %v2532
        %vm2534 = vcmask 523712
        %v2535 = vsel %vm2534, %v2533, %v2528
        %v2536 = vadd.s32 %v2349, 4294967232
        %v2537 = vlaneseq
        %v2538 = vshrl.u32 %v2537, 7
        %v2539 = vsub.s32 %v2536, %v2538
        %v2540 = vrot.slane %v2109, %v2539
        %vm2541 = vcmask 589312
        %v2542 = vsel %vm2541, %v2540, %v2535
        %v2543 = vadd.s32 %v2349, 4294967224
        %v2544 = vlaneseq
        %v2545 = vshrl.u32 %v2544, 7
        %v2546 = vsub.s32 %v2543, %v2545
        %v2547 = vrot.slane %v2111, %v2546
        %vm2548 = vcmask 654912
        %v2549 = vsel %vm2548, %v2547, %v2542
        %v2550 = vadd.s32 %v2349, 4294967216
        %v2551 = vlaneseq
        %v2552 = vshrl.u32 %v2551, 7
        %v2553 = vsub.s32 %v2550, %v2552
        %v2554 = vrot.slane %v2113, %v2553
        %vm2555 = vcmask 720512
        %v2556 = vsel %vm2555, %v2554, %v2549
        %v2557 = vadd.s32 %v2349, 4294967208
        %v2558 = vlaneseq
        %v2559 = vshrl.u32 %v2558, 7
        %v2560 = vsub.s32 %v2557, %v2559
        %v2561 = vrot.slane %v2115, %v2560
        %vm2562 = vcmask 786112
        %v2563 = vsel %vm2562, %v2561, %v2556
        %v2564 = vadd.s32 %v2349, 4294967200
        %v2565 = vlaneseq
        %v2566 = vshrl.u32 %v2565, 7
        %v2567 = vsub.s32 %v2564, %v2566
        %v2568 = vrot.slane %v2117, %v2567
        %vm2569 = vcmask 851712
        %v2570 = vsel %vm2569, %v2568, %v2563
        %v2571 = vadd.s32 %v2349, 4294967192
        %v2572 = vlaneseq
        %v2573 = vshrl.u32 %v2572, 7
        %v2574 = vsub.s32 %v2571, %v2573
        %v2575 = vrot.slane %v2119, %v2574
        %vm2576 = vcmask 917312
        %v2577 = vsel %vm2576, %v2575, %v2570
        %v2578 = vadd.s32 %v2349, 4294967184
        %v2579 = vlaneseq
        %v2580 = vshrl.u32 %v2579, 7
        %v2581 = vsub.s32 %v2578, %v2580
        %v2582 = vrot.slane %v2121, %v2581
        %vm2583 = vcmask 982912
        %v2584 = vsel %vm2583, %v2582, %v2577
        %v2585 = vadd.s32 %v2349, 4294967176
        %v2586 = vlaneseq
        %v2587 = vshrl.u32 %v2586, 7
        %v2588 = vsub.s32 %v2585, %v2587
        %v2589 = vrot.slane %v2123, %v2588
        %vm2590 = vcmask 1048512
        %v2591 = vsel %vm2590, %v2589, %v2584
        %v2592 = vlaneseq
        %v2593 = vshrl.u32 %v2592, 7
        %v2594 = vsub.s32 %v2349, %v2593
        %v2595 = vrot.slane %v2125, %v2594
        %v2596 = vlaneseq
        %v2597 = vshrl.u32 %v2596, 7
        %v2598 = vsub.s32 %v2487, %v2597
        %v2599 = vrot.slane %v2127, %v2598
        %v2600 = vsel %vm2492, %v2599, %v2595
        %v2601 = vlaneseq
        %v2602 = vshrl.u32 %v2601, 7
        %v2603 = vsub.s32 %v2494, %v2602
        %v2604 = vrot.slane %v2129, %v2603
        %v2605 = vsel %vm2499, %v2604, %v2600
        %v2606 = vlaneseq
        %v2607 = vshrl.u32 %v2606, 7
        %v2608 = vsub.s32 %v2501, %v2607
        %v2609 = vrot.slane %v2131, %v2608
        %v2610 = vsel %vm2506, %v2609, %v2605
        %v2611 = vlaneseq
        %v2612 = vshrl.u32 %v2611, 7
        %v2613 = vsub.s32 %v2508, %v2612
        %v2614 = vrot.slane %v2133, %v2613
        %v2615 = vsel %vm2513, %v2614, %v2610
        %v2616 = vlaneseq
        %v2617 = vshrl.u32 %v2616, 7
        %v2618 = vsub.s32 %v2515, %v2617
        %v2619 = vrot.slane %v2135, %v2618
        %v2620 = vsel %vm2520, %v2619, %v2615
        %v2621 = vlaneseq
        %v2622 = vshrl.u32 %v2621, 7
        %v2623 = vsub.s32 %v2522, %v2622
        %v2624 = vrot.slane %v2137, %v2623
        %v2625 = vsel %vm2527, %v2624, %v2620
        %v2626 = vlaneseq
        %v2627 = vshrl.u32 %v2626, 7
        %v2628 = vsub.s32 %v2529, %v2627
        %v2629 = vrot.slane %v2139, %v2628
        %v2630 = vsel %vm2534, %v2629, %v2625
        %v2631 = vlaneseq
        %v2632 = vshrl.u32 %v2631, 7
        %v2633 = vsub.s32 %v2536, %v2632
        %v2634 = vrot.slane %v2141, %v2633
        %v2635 = vsel %vm2541, %v2634, %v2630
        %v2636 = vlaneseq
        %v2637 = vshrl.u32 %v2636, 7
        %v2638 = vsub.s32 %v2543, %v2637
        %v2639 = vrot.slane %v2143, %v2638
        %v2640 = vsel %vm2548, %v2639, %v2635
        %v2641 = vlaneseq
        %v2642 = vshrl.u32 %v2641, 7
        %v2643 = vsub.s32 %v2550, %v2642
        %v2644 = vrot.slane %v2145, %v2643
        %v2645 = vsel %vm2555, %v2644, %v2640
        %v2646 = vlaneseq
        %v2647 = vshrl.u32 %v2646, 7
        %v2648 = vsub.s32 %v2557, %v2647
        %v2649 = vrot.slane %v2147, %v2648
        %v2650 = vsel %vm2562, %v2649, %v2645
        %v2651 = vlaneseq
        %v2652 = vshrl.u32 %v2651, 7
        %v2653 = vsub.s32 %v2564, %v2652
        %v2654 = vrot.slane %v2149, %v2653
        %v2655 = vsel %vm2569, %v2654, %v2650
        %v2656 = vlaneseq
        %v2657 = vshrl.u32 %v2656, 7
        %v2658 = vsub.s32 %v2571, %v2657
        %v2659 = vrot.slane %v2151, %v2658
        %v2660 = vsel %vm2576, %v2659, %v2655
        %v2661 = vlaneseq
        %v2662 = vshrl.u32 %v2661, 7
        %v2663 = vsub.s32 %v2578, %v2662
        %v2664 = vrot.slane %v2153, %v2663
        %v2665 = vsel %vm2583, %v2664, %v2660
        %v2666 = vlaneseq
        %v2667 = vshrl.u32 %v2666, 7
        %v2668 = vsub.s32 %v2585, %v2667
        %v2669 = vrot.slane %v2155, %v2668
        %v2670 = vsel %vm2590, %v2669, %v2665
        %v2671 = vlaneseq
        %v2672 = vshrl.u32 %v2671, 7
        %v2673 = vsub.s32 %v2349, %v2672
        %v2674 = vrot.slane %v2157, %v2673
        %v2675 = vlaneseq
        %v2676 = vshrl.u32 %v2675, 7
        %v2677 = vsub.s32 %v2487, %v2676
        %v2678 = vrot.slane %v2159, %v2677
        %v2679 = vsel %vm2492, %v2678, %v2674
        %v2680 = vlaneseq
        %v2681 = vshrl.u32 %v2680, 7
        %v2682 = vsub.s32 %v2494, %v2681
        %v2683 = vrot.slane %v2161, %v2682
        %v2684 = vsel %vm2499, %v2683, %v2679
        %v2685 = vlaneseq
        %v2686 = vshrl.u32 %v2685, 7
        %v2687 = vsub.s32 %v2501, %v2686
        %v2688 = vrot.slane %v2163, %v2687
        %v2689 = vsel %vm2506, %v2688, %v2684
        %v2690 = vlaneseq
        %v2691 = vshrl.u32 %v2690, 7
        %v2692 = vsub.s32 %v2508, %v2691
        %v2693 = vrot.slane %v2165, %v2692
        %v2694 = vsel %vm2513, %v2693, %v2689
        %v2695 = vlaneseq
        %v2696 = vshrl.u32 %v2695, 7
        %v2697 = vsub.s32 %v2515, %v2696
        %v2698 = vrot.slane %v2167, %v2697
        %v2699 = vsel %vm2520, %v2698, %v2694
        %v2700 = vlaneseq
        %v2701 = vshrl.u32 %v2700, 7
        %v2702 = vsub.s32 %v2522, %v2701
        %v2703 = vrot.slane %v2169, %v2702
        %v2704 = vsel %vm2527, %v2703, %v2699
        %v2705 = vlaneseq
        %v2706 = vshrl.u32 %v2705, 7
        %v2707 = vsub.s32 %v2529, %v2706
        %v2708 = vrot.slane %v2171, %v2707
        %v2709 = vsel %vm2534, %v2708, %v2704
        %v2710 = vlaneseq
        %v2711 = vshrl.u32 %v2710, 7
        %v2712 = vsub.s32 %v2536, %v2711
        %v2713 = vrot.slane %v2173, %v2712
        %v2714 = vsel %vm2541, %v2713, %v2709
        %v2715 = vlaneseq
        %v2716 = vshrl.u32 %v2715, 7
        %v2717 = vsub.s32 %v2543, %v2716
        %v2718 = vrot.slane %v2175, %v2717
        %v2719 = vsel %vm2548, %v2718, %v2714
        %v2720 = vlaneseq
        %v2721 = vshrl.u32 %v2720, 7
        %v2722 = vsub.s32 %v2550, %v2721
        %v2723 = vrot.slane %v2177, %v2722
        %v2724 = vsel %vm2555, %v2723, %v2719
        %v2725 = vlaneseq
        %v2726 = vshrl.u32 %v2725, 7
        %v2727 = vsub.s32 %v2557, %v2726
        %v2728 = vrot.slane %v2179, %v2727
        %v2729 = vsel %vm2562, %v2728, %v2724
        %v2730 = vlaneseq
        %v2731 = vshrl.u32 %v2730, 7
        %v2732 = vsub.s32 %v2564, %v2731
        %v2733 = vrot.slane %v2181, %v2732
        %v2734 = vsel %vm2569, %v2733, %v2729
        %v2735 = vlaneseq
        %v2736 = vshrl.u32 %v2735, 7
        %v2737 = vsub.s32 %v2571, %v2736
        %v2738 = vrot.slane %v2183, %v2737
        %v2739 = vsel %vm2576, %v2738, %v2734
        %v2740 = vlaneseq
        %v2741 = vshrl.u32 %v2740, 7
        %v2742 = vsub.s32 %v2578, %v2741
        %v2743 = vrot.slane %v2185, %v2742
        %v2744 = vsel %vm2583, %v2743, %v2739
        %v2745 = vlaneseq
        %v2746 = vshrl.u32 %v2745, 7
        %v2747 = vsub.s32 %v2585, %v2746
        %v2748 = vrot.slane %v2187, %v2747
        %v2749 = vsel %vm2590, %v2748, %v2744
        %v2750 = vlaneseq
        %v2751 = vshrl.u32 %v2750, 7
        %v2752 = vsub.s32 %v2349, %v2751
        %v2753 = vrot.slane %v2189, %v2752
        %v2754 = vlaneseq
        %v2755 = vshrl.u32 %v2754, 7
        %v2756 = vsub.s32 %v2487, %v2755
        %v2757 = vrot.slane %v2191, %v2756
        %v2758 = vsel %vm2492, %v2757, %v2753
        %v2759 = vlaneseq
        %v2760 = vshrl.u32 %v2759, 7
        %v2761 = vsub.s32 %v2494, %v2760
        %v2762 = vrot.slane %v2193, %v2761
        %v2763 = vsel %vm2499, %v2762, %v2758
        %v2764 = vlaneseq
        %v2765 = vshrl.u32 %v2764, 7
        %v2766 = vsub.s32 %v2501, %v2765
        %v2767 = vrot.slane %v2195, %v2766
        %v2768 = vsel %vm2506, %v2767, %v2763
        %v2769 = vlaneseq
        %v2770 = vshrl.u32 %v2769, 7
        %v2771 = vsub.s32 %v2508, %v2770
        %v2772 = vrot.slane %v2197, %v2771
        %v2773 = vsel %vm2513, %v2772, %v2768
        %v2774 = vlaneseq
        %v2775 = vshrl.u32 %v2774, 7
        %v2776 = vsub.s32 %v2515, %v2775
        %v2777 = vrot.slane %v2199, %v2776
        %v2778 = vsel %vm2520, %v2777, %v2773
        %v2779 = vlaneseq
        %v2780 = vshrl.u32 %v2779, 7
        %v2781 = vsub.s32 %v2522, %v2780
        %v2782 = vrot.slane %v2201, %v2781
        %v2783 = vsel %vm2527, %v2782, %v2778
        %v2784 = vlaneseq
        %v2785 = vshrl.u32 %v2784, 7
        %v2786 = vsub.s32 %v2529, %v2785
        %v2787 = vrot.slane %v2203, %v2786
        %v2788 = vsel %vm2534, %v2787, %v2783
        %v2789 = vlaneseq
        %v2790 = vshrl.u32 %v2789, 7
        %v2791 = vsub.s32 %v2536, %v2790
        %v2792 = vrot.slane %v2205, %v2791
        %v2793 = vsel %vm2541, %v2792, %v2788
        %v2794 = vlaneseq
        %v2795 = vshrl.u32 %v2794, 7
        %v2796 = vsub.s32 %v2543, %v2795
        %v2797 = vrot.slane %v2207, %v2796
        %v2798 = vsel %vm2548, %v2797, %v2793
        %v2799 = vlaneseq
        %v2800 = vshrl.u32 %v2799, 7
        %v2801 = vsub.s32 %v2550, %v2800
        %v2802 = vrot.slane %v2209, %v2801
        %v2803 = vsel %vm2555, %v2802, %v2798
        %v2804 = vlaneseq
        %v2805 = vshrl.u32 %v2804, 7
        %v2806 = vsub.s32 %v2557, %v2805
        %v2807 = vrot.slane %v2211, %v2806
        %v2808 = vsel %vm2562, %v2807, %v2803
        %v2809 = vlaneseq
        %v2810 = vshrl.u32 %v2809, 7
        %v2811 = vsub.s32 %v2564, %v2810
        %v2812 = vrot.slane %v2213, %v2811
        %v2813 = vsel %vm2569, %v2812, %v2808
        %v2814 = vlaneseq
        %v2815 = vshrl.u32 %v2814, 7
        %v2816 = vsub.s32 %v2571, %v2815
        %v2817 = vrot.slane %v2215, %v2816
        %v2818 = vsel %vm2576, %v2817, %v2813
        %v2819 = vlaneseq
        %v2820 = vshrl.u32 %v2819, 7
        %v2821 = vsub.s32 %v2578, %v2820
        %v2822 = vrot.slane %v2217, %v2821
        %v2823 = vsel %vm2583, %v2822, %v2818
        %v2824 = vlaneseq
        %v2825 = vshrl.u32 %v2824, 7
        %v2826 = vsub.s32 %v2585, %v2825
        %v2827 = vrot.slane %v2219, %v2826
        %v2828 = vsel %vm2590, %v2827, %v2823
        %v2829 = vlaneseq
        %v2830 = vshrl.u32 %v2829, 7
        %v2831 = vsub.s32 %v2349, %v2830
        %v2832 = vrot.slane %v2221, %v2831
        %v2833 = vlaneseq
        %v2834 = vshrl.u32 %v2833, 7
        %v2835 = vsub.s32 %v2487, %v2834
        %v2836 = vrot.slane %v2223, %v2835
        %v2837 = vsel %vm2492, %v2836, %v2832
        %v2838 = vlaneseq
        %v2839 = vshrl.u32 %v2838, 7
        %v2840 = vsub.s32 %v2494, %v2839
        %v2841 = vrot.slane %v2225, %v2840
        %v2842 = vsel %vm2499, %v2841, %v2837
        %v2843 = vlaneseq
        %v2844 = vshrl.u32 %v2843, 7
        %v2845 = vsub.s32 %v2501, %v2844
        %v2846 = vrot.slane %v2227, %v2845
        %v2847 = vsel %vm2506, %v2846, %v2842
        %v2848 = vlaneseq
        %v2849 = vshrl.u32 %v2848, 7
        %v2850 = vsub.s32 %v2508, %v2849
        %v2851 = vrot.slane %v2229, %v2850
        %v2852 = vsel %vm2513, %v2851, %v2847
        %v2853 = vlaneseq
        %v2854 = vshrl.u32 %v2853, 7
        %v2855 = vsub.s32 %v2515, %v2854
        %v2856 = vrot.slane %v2231, %v2855
        %v2857 = vsel %vm2520, %v2856, %v2852
        %v2858 = vlaneseq
        %v2859 = vshrl.u32 %v2858, 7
        %v2860 = vsub.s32 %v2522, %v2859
        %v2861 = vrot.slane %v2233, %v2860
        %v2862 = vsel %vm2527, %v2861, %v2857
        %v2863 = vlaneseq
        %v2864 = vshrl.u32 %v2863, 7
        %v2865 = vsub.s32 %v2529, %v2864
        %v2866 = vrot.slane %v2235, %v2865
        %v2867 = vsel %vm2534, %v2866, %v2862
        %v2868 = vlaneseq
        %v2869 = vshrl.u32 %v2868, 7
        %v2870 = vsub.s32 %v2536, %v2869
        %v2871 = vrot.slane %v2237, %v2870
        %v2872 = vsel %vm2541, %v2871, %v2867
        %v2873 = vlaneseq
        %v2874 = vshrl.u32 %v2873, 7
        %v2875 = vsub.s32 %v2543, %v2874
        %v2876 = vrot.slane %v2239, %v2875
        %v2877 = vsel %vm2548, %v2876, %v2872
        %v2878 = vlaneseq
        %v2879 = vshrl.u32 %v2878, 7
        %v2880 = vsub.s32 %v2550, %v2879
        %v2881 = vrot.slane %v2241, %v2880
        %v2882 = vsel %vm2555, %v2881, %v2877
        %v2883 = vlaneseq
        %v2884 = vshrl.u32 %v2883, 7
        %v2885 = vsub.s32 %v2557, %v2884
        %v2886 = vrot.slane %v2243, %v2885
        %v2887 = vsel %vm2562, %v2886, %v2882
        %v2888 = vlaneseq
        %v2889 = vshrl.u32 %v2888, 7
        %v2890 = vsub.s32 %v2564, %v2889
        %v2891 = vrot.slane %v2245, %v2890
        %v2892 = vsel %vm2569, %v2891, %v2887
        %v2893 = vlaneseq
        %v2894 = vshrl.u32 %v2893, 7
        %v2895 = vsub.s32 %v2571, %v2894
        %v2896 = vrot.slane %v2247, %v2895
        %v2897 = vsel %vm2576, %v2896, %v2892
        %v2898 = vlaneseq
        %v2899 = vshrl.u32 %v2898, 7
        %v2900 = vsub.s32 %v2578, %v2899
        %v2901 = vrot.slane %v2249, %v2900
        %v2902 = vsel %vm2583, %v2901, %v2897
        %v2903 = vlaneseq
        %v2904 = vshrl.u32 %v2903, 7
        %v2905 = vsub.s32 %v2585, %v2904
        %v2906 = vrot.slane %v2251, %v2905
        %v2907 = vsel %vm2590, %v2906, %v2902
        %v2908 = vlaneseq
        %v2909 = vshrl.u32 %v2908, 7
        %v2910 = vsub.s32 %v2349, %v2909
        %v2911 = vrot.slane %v2253, %v2910
        %v2912 = vlaneseq
        %v2913 = vshrl.u32 %v2912, 7
        %v2914 = vsub.s32 %v2487, %v2913
        %v2915 = vrot.slane %v2255, %v2914
        %v2916 = vsel %vm2492, %v2915, %v2911
        %v2917 = vlaneseq
        %v2918 = vshrl.u32 %v2917, 7
        %v2919 = vsub.s32 %v2494, %v2918
        %v2920 = vrot.slane %v2257, %v2919
        %v2921 = vsel %vm2499, %v2920, %v2916
        %v2922 = vlaneseq
        %v2923 = vshrl.u32 %v2922, 7
        %v2924 = vsub.s32 %v2501, %v2923
        %v2925 = vrot.slane %v2259, %v2924
        %v2926 = vsel %vm2506, %v2925, %v2921
        %v2927 = vlaneseq
        %v2928 = vshrl.u32 %v2927, 7
        %v2929 = vsub.s32 %v2508, %v2928
        %v2930 = vrot.slane %v2261, %v2929
        %v2931 = vsel %vm2513, %v2930, %v2926
        %v2932 = vlaneseq
        %v2933 = vshrl.u32 %v2932, 7
        %v2934 = vsub.s32 %v2515, %v2933
        %v2935 = vrot.slane %v2263, %v2934
        %v2936 = vsel %vm2520, %v2935, %v2931
        %v2937 = vlaneseq
        %v2938 = vshrl.u32 %v2937, 7
        %v2939 = vsub.s32 %v2522, %v2938
        %v2940 = vrot.slane %v2265, %v2939
        %v2941 = vsel %vm2527, %v2940, %v2936
        %v2942 = vlaneseq
        %v2943 = vshrl.u32 %v2942, 7
        %v2944 = vsub.s32 %v2529, %v2943
        %v2945 = vrot.slane %v2267, %v2944
        %v2946 = vsel %vm2534, %v2945, %v2941
        %v2947 = vlaneseq
        %v2948 = vshrl.u32 %v2947, 7
        %v2949 = vsub.s32 %v2536, %v2948
        %v2950 = vrot.slane %v2269, %v2949
        %v2951 = vsel %vm2541, %v2950, %v2946
        %v2952 = vlaneseq
        %v2953 = vshrl.u32 %v2952, 7
        %v2954 = vsub.s32 %v2543, %v2953
        %v2955 = vrot.slane %v2271, %v2954
        %v2956 = vsel %vm2548, %v2955, %v2951
        %v2957 = vlaneseq
        %v2958 = vshrl.u32 %v2957, 7
        %v2959 = vsub.s32 %v2550, %v2958
        %v2960 = vrot.slane %v2273, %v2959
        %v2961 = vsel %vm2555, %v2960, %v2956
        %v2962 = vlaneseq
        %v2963 = vshrl.u32 %v2962, 7
        %v2964 = vsub.s32 %v2557, %v2963
        %v2965 = vrot.slane %v2275, %v2964
        %v2966 = vsel %vm2562, %v2965, %v2961
        %v2967 = vlaneseq
        %v2968 = vshrl.u32 %v2967, 7
        %v2969 = vsub.s32 %v2564, %v2968
        %v2970 = vrot.slane %v2277, %v2969
        %v2971 = vsel %vm2569, %v2970, %v2966
        %v2972 = vlaneseq
        %v2973 = vshrl.u32 %v2972, 7
        %v2974 = vsub.s32 %v2571, %v2973
        %v2975 = vrot.slane %v2279, %v2974
        %v2976 = vsel %vm2576, %v2975, %v2971
        %v2977 = vlaneseq
        %v2978 = vshrl.u32 %v2977, 7
        %v2979 = vsub.s32 %v2578, %v2978
        %v2980 = vrot.slane %v2281, %v2979
        %v2981 = vsel %vm2583, %v2980, %v2976
        %v2982 = vlaneseq
        %v2983 = vshrl.u32 %v2982, 7
        %v2984 = vsub.s32 %v2585, %v2983
        %v2985 = vrot.slane %v2283, %v2984
        %v2986 = vsel %vm2590, %v2985, %v2981
        %v2987 = vlaneseq
        %v2988 = vshrl.u32 %v2987, 7
        %v2989 = vsub.s32 %v2349, %v2988
        %v2990 = vrot.slane %v2285, %v2989
        %v2991 = vlaneseq
        %v2992 = vshrl.u32 %v2991, 7
        %v2993 = vsub.s32 %v2487, %v2992
        %v2994 = vrot.slane %v2287, %v2993
        %v2995 = vsel %vm2492, %v2994, %v2990
        %v2996 = vlaneseq
        %v2997 = vshrl.u32 %v2996, 7
        %v2998 = vsub.s32 %v2494, %v2997
        %v2999 = vrot.slane %v2289, %v2998
        %v3000 = vsel %vm2499, %v2999, %v2995
        %v3001 = vlaneseq
        %v3002 = vshrl.u32 %v3001, 7
        %v3003 = vsub.s32 %v2501, %v3002
        %v3004 = vrot.slane %v2291, %v3003
        %v3005 = vsel %vm2506, %v3004, %v3000
        %v3006 = vlaneseq
        %v3007 = vshrl.u32 %v3006, 7
        %v3008 = vsub.s32 %v2508, %v3007
        %v3009 = vrot.slane %v2293, %v3008
        %v3010 = vsel %vm2513, %v3009, %v3005
        %v3011 = vlaneseq
        %v3012 = vshrl.u32 %v3011, 7
        %v3013 = vsub.s32 %v2515, %v3012
        %v3014 = vrot.slane %v2295, %v3013
        %v3015 = vsel %vm2520, %v3014, %v3010
        %v3016 = vlaneseq
        %v3017 = vshrl.u32 %v3016, 7
        %v3018 = vsub.s32 %v2522, %v3017
        %v3019 = vrot.slane %v2297, %v3018
        %v3020 = vsel %vm2527, %v3019, %v3015
        %v3021 = vlaneseq
        %v3022 = vshrl.u32 %v3021, 7
        %v3023 = vsub.s32 %v2529, %v3022
        %v3024 = vrot.slane %v2299, %v3023
        %v3025 = vsel %vm2534, %v3024, %v3020
        %v3026 = vlaneseq
        %v3027 = vshrl.u32 %v3026, 7
        %v3028 = vsub.s32 %v2536, %v3027
        %v3029 = vrot.slane %v2301, %v3028
        %v3030 = vsel %vm2541, %v3029, %v3025
        %v3031 = vlaneseq
        %v3032 = vshrl.u32 %v3031, 7
        %v3033 = vsub.s32 %v2543, %v3032
        %v3034 = vrot.slane %v2303, %v3033
        %v3035 = vsel %vm2548, %v3034, %v3030
        %v3036 = vlaneseq
        %v3037 = vshrl.u32 %v3036, 7
        %v3038 = vsub.s32 %v2550, %v3037
        %v3039 = vrot.slane %v2305, %v3038
        %v3040 = vsel %vm2555, %v3039, %v3035
        %v3041 = vlaneseq
        %v3042 = vshrl.u32 %v3041, 7
        %v3043 = vsub.s32 %v2557, %v3042
        %v3044 = vrot.slane %v2307, %v3043
        %v3045 = vsel %vm2562, %v3044, %v3040
        %v3046 = vlaneseq
        %v3047 = vshrl.u32 %v3046, 7
        %v3048 = vsub.s32 %v2564, %v3047
        %v3049 = vrot.slane %v2309, %v3048
        %v3050 = vsel %vm2569, %v3049, %v3045
        %v3051 = vlaneseq
        %v3052 = vshrl.u32 %v3051, 7
        %v3053 = vsub.s32 %v2571, %v3052
        %v3054 = vrot.slane %v2311, %v3053
        %v3055 = vsel %vm2576, %v3054, %v3050
        %v3056 = vlaneseq
        %v3057 = vshrl.u32 %v3056, 7
        %v3058 = vsub.s32 %v2578, %v3057
        %v3059 = vrot.slane %v2313, %v3058
        %v3060 = vsel %vm2583, %v3059, %v3055
        %v3061 = vlaneseq
        %v3062 = vshrl.u32 %v3061, 7
        %v3063 = vsub.s32 %v2585, %v3062
        %v3064 = vrot.slane %v2315, %v3063
        %v3065 = vsel %vm2590, %v3064, %v3060
        %v3066 = vlaneseq
        %v3067 = vshrl.u32 %v3066, 7
        %v3068 = vsub.s32 %v2349, %v3067
        %v3069 = vrot.slane %v2317, %v3068
        %v3070 = vlaneseq
        %v3071 = vshrl.u32 %v3070, 7
        %v3072 = vsub.s32 %v2487, %v3071
        %v3073 = vrot.slane %v2319, %v3072
        %v3074 = vsel %vm2492, %v3073, %v3069
        %v3075 = vlaneseq
        %v3076 = vshrl.u32 %v3075, 7
        %v3077 = vsub.s32 %v2494, %v3076
        %v3078 = vrot.slane %v2321, %v3077
        %v3079 = vsel %vm2499, %v3078, %v3074
        %v3080 = vlaneseq
        %v3081 = vshrl.u32 %v3080, 7
        %v3082 = vsub.s32 %v2501, %v3081
        %v3083 = vrot.slane %v2323, %v3082
        %v3084 = vsel %vm2506, %v3083, %v3079
        %v3085 = vlaneseq
        %v3086 = vshrl.u32 %v3085, 7
        %v3087 = vsub.s32 %v2508, %v3086
        %v3088 = vrot.slane %v2325, %v3087
        %v3089 = vsel %vm2513, %v3088, %v3084
        %v3090 = vlaneseq
        %v3091 = vshrl.u32 %v3090, 7
        %v3092 = vsub.s32 %v2515, %v3091
        %v3093 = vrot.slane %v2327, %v3092
        %v3094 = vsel %vm2520, %v3093, %v3089
        %v3095 = vlaneseq
        %v3096 = vshrl.u32 %v3095, 7
        %v3097 = vsub.s32 %v2522, %v3096
        %v3098 = vrot.slane %v2329, %v3097
        %v3099 = vsel %vm2527, %v3098, %v3094
        %v3100 = vlaneseq
        %v3101 = vshrl.u32 %v3100, 7
        %v3102 = vsub.s32 %v2529, %v3101
        %v3103 = vrot.slane %v2331, %v3102
        %v3104 = vsel %vm2534, %v3103, %v3099
        %v3105 = vlaneseq
        %v3106 = vshrl.u32 %v3105, 7
        %v3107 = vsub.s32 %v2536, %v3106
        %v3108 = vrot.slane %v2333, %v3107
        %v3109 = vsel %vm2541, %v3108, %v3104
        %v3110 = vlaneseq
        %v3111 = vshrl.u32 %v3110, 7
        %v3112 = vsub.s32 %v2543, %v3111
        %v3113 = vrot.slane %v2335, %v3112
        %v3114 = vsel %vm2548, %v3113, %v3109
        %v3115 = vlaneseq
        %v3116 = vshrl.u32 %v3115, 7
        %v3117 = vsub.s32 %v2550, %v3116
        %v3118 = vrot.slane %v2337, %v3117
        %v3119 = vsel %vm2555, %v3118, %v3114
        %v3120 = vlaneseq
        %v3121 = vshrl.u32 %v3120, 7
        %v3122 = vsub.s32 %v2557, %v3121
        %v3123 = vrot.slane %v2339, %v3122
        %v3124 = vsel %vm2562, %v3123, %v3119
        %v3125 = vlaneseq
        %v3126 = vshrl.u32 %v3125, 7
        %v3127 = vsub.s32 %v2564, %v3126
        %v3128 = vrot.slane %v2341, %v3127
        %v3129 = vsel %vm2569, %v3128, %v3124
        %v3130 = vlaneseq
        %v3131 = vshrl.u32 %v3130, 7
        %v3132 = vsub.s32 %v2571, %v3131
        %v3133 = vrot.slane %v2343, %v3132
        %v3134 = vsel %vm2576, %v3133, %v3129
        %v3135 = vlaneseq
        %v3136 = vshrl.u32 %v3135, 7
        %v3137 = vsub.s32 %v2578, %v3136
        %v3138 = vrot.slane %v2345, %v3137
        %v3139 = vsel %vm2583, %v3138, %v3134
        %v3140 = vlaneseq
        %v3141 = vshrl.u32 %v3140, 7
        %v3142 = vsub.s32 %v2585, %v3141
        %v3143 = vrot.slane %v2347, %v3142
        %v3144 = vsel %vm2590, %v3143, %v3139
        %vm3145 = vcmask 1041409
        %v3146 = vsel %vm3145, %v2670, %v2591
        %vm3147 = vcmask 1042434
        %v3148 = vsel %vm3147, %v2749, %v3146
        %vm3149 = vcmask 1043459
        %v3150 = vsel %vm3149, %v2828, %v3148
        %vm3151 = vcmask 1044484
        %v3152 = vsel %vm3151, %v2907, %v3150
        %vm3153 = vcmask 1045509
        %v3154 = vsel %vm3153, %v2986, %v3152
        %vm3155 = vcmask 1046534
        %v3156 = vsel %vm3155, %v3065, %v3154
        %vm3157 = vcmask 1047559
        %v3158 = vsel %vm3157, %v3144, %v3156
        %v3160 = vsel %vm2354, %v3158, -inf
        %v3161 = vmul.f32 %v3160, 2.0
        %3162 = vmax.xlane.f32.xlu0 %v3161
        %v3163 = vpop.xlane.xlu0 %3162
        %v3164 = vsub.f32 %v3161, %v3163
        %v3165 = vmul.f32 %v3164, 1.442695
        %v3166 = vpow.pop %v3165
        %3167 = vadd.xlane.f32.xlu0 %v3166
        %v3168 = vpop.xlane.xlu0 %3167
        %v3169 = vrcp.pop %v3168
        %v3170 = vmul.f32 %v3168, %v3169
        %v3171 = vsub.f32 2.0, %v3170
        %v3172 = vmul.f32 %v3169, %v3171
        %v3173 = vmul.f32 %v3166, %v3172
        %v3174 = vpack.c.bf16 %v3173, %v3173
        %v3177 = vunpack.c.l.s4 1966171168
        %v3178 = vunpack.c.0.s8 %v3177
        %v3179 = vlaneseq
        %v3180 = vshrl.u32 %v3179, 7
        %v3181 = vsub.s32 %v3178, %v3180
        %v3182 = vrot.slane %v3174, %v3181
        %v3183 = vcombine.high %v3182, %v3182
        %v3185 = vunpack.c.l.s4 1966171168
        %v3186 = vunpack.c.0.s8 %v3185
        %v3187 = vlaneseq
        %v3188 = vshrl.u32 %v3187, 7
        %v3189 = vsub.s32 %v3186, %v3188
        %v3190 = vrot.slane %v3182, %v3189
        %v3192 = vunpack.c.l.s4 1966171168
        %v3193 = vunpack.c.0.s8 %v3192
        %v3194 = vlaneseq
        %v3195 = vshrl.u32 %v3194, 7
        %v3196 = vsub.s32 %v3193, %v3195
        %v3197 = vrot.slane %v3183, %v3196
        %v3198 = vcombine.high %v3190, %v3190
        %v3199 = vcombine.high %v3197, %v3197
        %v3200 = vunpack.i.l.s16 %v3190
        %v3201 = vunpack.i.h.s16 %v3190
        %v3202 = vunpack.i.l.s16 %v3197
        %v3203 = vunpack.i.h.s16 %v3197
        %v3204 = vunpack.i.l.s16 %v3198
        %v3205 = vunpack.i.h.s16 %v3198
        %v3206 = vunpack.i.l.s16 %v3199
        %v3207 = vunpack.i.h.s16 %v3199
        %v3208 = vpack.i.b16 %v3200, %v3200
        %v3209 = vlaneseq
        %v3210 = vshrl.u32 %v3209, 7
        %v3211 = vsub.s32 0, %v3210
        %v3212 = vrot.slane %v3208, %v3211
        %3214 = vmatprep.subr.bf16.mxu0 0
        %3215 = vmatpush1.bf16.msra.mxu0 %v815
        %3216 = vmatprep.subr.bf16.mxu0 0
        %3217 = vmatpush1.bf16.msra.mxu0 %v814
        %3218 = vmatprep.subr.bf16.mxu0 0
        %3219 = vmatpush1.bf16.msra.mxu0 %v813
        %3220 = vmatprep.subr.bf16.mxu0 0
        %3221 = vmatpush1.bf16.msra.mxu0 %v812
        %3222 = vmatprep.subr.bf16.mxu0 0
        %3223 = vmatpush1.bf16.msra.mxu0 %v811
        %3224 = vmatprep.subr.bf16.mxu0 0
        %3225 = vmatpush1.bf16.msra.mxu0 %v810
        %3226 = vmatprep.subr.bf16.mxu0 0
        %3227 = vmatpush1.bf16.msra.mxu0 %v809
        %3228 = vmatprep.subr.bf16.mxu0 0
        %3229 = vmatpush1.bf16.msra.mxu0 %v808
        %3230 = vmatprep.subr.bf16.mxu0 0
        %3231 = vmatpush2.bf16.msra.mxu0 0
        %3232 = vmatprep.subr.bf16.mxu0 0
        %3233 = vmatpush2.bf16.msra.mxu0 0
        %3234 = vmatprep.subr.bf16.mxu0 0
        %3235 = vmatpush2.bf16.msra.mxu0 0
        %3236 = vmatprep.subr.bf16.mxu0 0
        %3237 = vmatpush2.bf16.msra.mxu0 0
        %3238 = vmatprep.subr.bf16.mxu0 0
        %3239 = vmatpush2.bf16.msra.mxu0 0
        %3240 = vmatprep.subr.bf16.mxu0 0
        %3241 = vmatpush2.bf16.msra.mxu0 0
        %3242 = vmatprep.subr.bf16.mxu0 0
        %3243 = vmatpush2.bf16.msra.mxu0 0
        %3244 = vmatprep.subr.bf16.mxu0 0
        %3245 = vmatpush2.bf16.msra.mxu0 0
        %3246 = vmatprep.mubr.bf16.mxu0 0
        %3247 = vmatmul.mubr.bf16.gmra.mxu0 %v3212
        %v3248 = vpop.f32.mrf.mxu0
        %v3249 = vadd.f32 0.0, %v3248
        %v3250 = vpop.f32.mrf.mxu0
        %v3251 = vpop.f32.mrf.mxu0
        %v3252 = vpop.f32.mrf.mxu0
        %3253 = vdwg.mxu0
        %v3254 = vpack.i.b16 %v3201, %v3201
        %v3255 = vlaneseq
        %v3256 = vshrl.u32 %v3255, 7
        %v3257 = vsub.s32 0, %v3256
        %v3258 = vrot.slane %v3254, %v3257
        %3260 = vmatprep.subr.bf16.mxu0 0
        %3261 = vmatpush1.bf16.msra.mxu0 %v823
        %3262 = vmatprep.subr.bf16.mxu0 0
        %3263 = vmatpush1.bf16.msra.mxu0 %v822
        %3264 = vmatprep.subr.bf16.mxu0 0
        %3265 = vmatpush1.bf16.msra.mxu0 %v821
        %3266 = vmatprep.subr.bf16.mxu0 0
        %3267 = vmatpush1.bf16.msra.mxu0 %v820
        %3268 = vmatprep.subr.bf16.mxu0 0
        %3269 = vmatpush1.bf16.msra.mxu0 %v819
        %3270 = vmatprep.subr.bf16.mxu0 0
        %3271 = vmatpush1.bf16.msra.mxu0 %v818
        %3272 = vmatprep.subr.bf16.mxu0 0
        %3273 = vmatpush1.bf16.msra.mxu0 %v817
        %3274 = vmatprep.subr.bf16.mxu0 0
        %3275 = vmatpush1.bf16.msra.mxu0 %v816
        %3276 = vmatprep.subr.bf16.mxu0 0
        %3277 = vmatpush2.bf16.msra.mxu0 0
        %3278 = vmatprep.subr.bf16.mxu0 0
        %3279 = vmatpush2.bf16.msra.mxu0 0
        %3280 = vmatprep.subr.bf16.mxu0 0
        %3281 = vmatpush2.bf16.msra.mxu0 0
        %3282 = vmatprep.subr.bf16.mxu0 0
        %3283 = vmatpush2.bf16.msra.mxu0 0
        %3284 = vmatprep.subr.bf16.mxu0 0
        %3285 = vmatpush2.bf16.msra.mxu0 0
        %3286 = vmatprep.subr.bf16.mxu0 0
        %3287 = vmatpush2.bf16.msra.mxu0 0
        %3288 = vmatprep.subr.bf16.mxu0 0
        %3289 = vmatpush2.bf16.msra.mxu0 0
        %3290 = vmatprep.subr.bf16.mxu0 0
        %3291 = vmatpush2.bf16.msra.mxu0 0
        %3292 = vmatprep.mubr.bf16.mxu0 0
        %3293 = vmatmul.mubr.bf16.gmra.mxu0 %v3258
        %v3294 = vpop.f32.mrf.mxu0
        %v3295 = vadd.f32 0.0, %v3294
        %v3296 = vpop.f32.mrf.mxu0
        %v3297 = vpop.f32.mrf.mxu0
        %v3298 = vpop.f32.mrf.mxu0
        %3299 = vdwg.mxu0
        %v3300 = vpack.i.b16 %v3202, %v3202
        %v3301 = vlaneseq
        %v3302 = vshrl.u32 %v3301, 7
        %v3303 = vsub.s32 0, %v3302
        %v3304 = vrot.slane %v3300, %v3303
        %3306 = vmatprep.subr.bf16.mxu0 0
        %3307 = vmatpush1.bf16.msra.mxu0 %v831
        %3308 = vmatprep.subr.bf16.mxu0 0
        %3309 = vmatpush1.bf16.msra.mxu0 %v830
        %3310 = vmatprep.subr.bf16.mxu0 0
        %3311 = vmatpush1.bf16.msra.mxu0 %v829
        %3312 = vmatprep.subr.bf16.mxu0 0
        %3313 = vmatpush1.bf16.msra.mxu0 %v828
        %3314 = vmatprep.subr.bf16.mxu0 0
        %3315 = vmatpush1.bf16.msra.mxu0 %v827
        %3316 = vmatprep.subr.bf16.mxu0 0
        %3317 = vmatpush1.bf16.msra.mxu0 %v826
        %3318 = vmatprep.subr.bf16.mxu0 0
        %3319 = vmatpush1.bf16.msra.mxu0 %v825
        %3320 = vmatprep.subr.bf16.mxu0 0
        %3321 = vmatpush1.bf16.msra.mxu0 %v824
        %3322 = vmatprep.subr.bf16.mxu0 0
        %3323 = vmatpush2.bf16.msra.mxu0 0
        %3324 = vmatprep.subr.bf16.mxu0 0
        %3325 = vmatpush2.bf16.msra.mxu0 0
        %3326 = vmatprep.subr.bf16.mxu0 0
        %3327 = vmatpush2.bf16.msra.mxu0 0
        %3328 = vmatprep.subr.bf16.mxu0 0
        %3329 = vmatpush2.bf16.msra.mxu0 0
        %3330 = vmatprep.subr.bf16.mxu0 0
        %3331 = vmatpush2.bf16.msra.mxu0 0
        %3332 = vmatprep.subr.bf16.mxu0 0
        %3333 = vmatpush2.bf16.msra.mxu0 0
        %3334 = vmatprep.subr.bf16.mxu0 0
        %3335 = vmatpush2.bf16.msra.mxu0 0
        %3336 = vmatprep.subr.bf16.mxu0 0
        %3337 = vmatpush2.bf16.msra.mxu0 0
        %3338 = vmatprep.mubr.bf16.mxu0 0
        %3339 = vmatmul.mubr.bf16.gmra.mxu0 %v3304
        %v3340 = vpop.f32.mrf.mxu0
        %v3341 = vadd.f32 0.0, %v3340
        %v3342 = vpop.f32.mrf.mxu0
        %v3343 = vpop.f32.mrf.mxu0
        %v3344 = vpop.f32.mrf.mxu0
        %3345 = vdwg.mxu0
        %v3346 = vpack.i.b16 %v3203, %v3203
        %v3347 = vlaneseq
        %v3348 = vshrl.u32 %v3347, 7
        %v3349 = vsub.s32 0, %v3348
        %v3350 = vrot.slane %v3346, %v3349
        %3352 = vmatprep.subr.bf16.mxu0 0
        %3353 = vmatpush1.bf16.msra.mxu0 %v839
        %3354 = vmatprep.subr.bf16.mxu0 0
        %3355 = vmatpush1.bf16.msra.mxu0 %v838
        %3356 = vmatprep.subr.bf16.mxu0 0
        %3357 = vmatpush1.bf16.msra.mxu0 %v837
        %3358 = vmatprep.subr.bf16.mxu0 0
        %3359 = vmatpush1.bf16.msra.mxu0 %v836
        %3360 = vmatprep.subr.bf16.mxu0 0
        %3361 = vmatpush1.bf16.msra.mxu0 %v835
        %3362 = vmatprep.subr.bf16.mxu0 0
        %3363 = vmatpush1.bf16.msra.mxu0 %v834
        %3364 = vmatprep.subr.bf16.mxu0 0
        %3365 = vmatpush1.bf16.msra.mxu0 %v833
        %3366 = vmatprep.subr.bf16.mxu0 0
        %3367 = vmatpush1.bf16.msra.mxu0 %v832
        %3368 = vmatprep.subr.bf16.mxu0 0
        %3369 = vmatpush2.bf16.msra.mxu0 0
        %3370 = vmatprep.subr.bf16.mxu0 0
        %3371 = vmatpush2.bf16.msra.mxu0 0
        %3372 = vmatprep.subr.bf16.mxu0 0
        %3373 = vmatpush2.bf16.msra.mxu0 0
        %3374 = vmatprep.subr.bf16.mxu0 0
        %3375 = vmatpush2.bf16.msra.mxu0 0
        %3376 = vmatprep.subr.bf16.mxu0 0
        %3377 = vmatpush2.bf16.msra.mxu0 0
        %3378 = vmatprep.subr.bf16.mxu0 0
        %3379 = vmatpush2.bf16.msra.mxu0 0
        %3380 = vmatprep.subr.bf16.mxu0 0
        %3381 = vmatpush2.bf16.msra.mxu0 0
        %3382 = vmatprep.subr.bf16.mxu0 0
        %3383 = vmatpush2.bf16.msra.mxu0 0
        %3384 = vmatprep.mubr.bf16.mxu0 0
        %3385 = vmatmul.mubr.bf16.gmra.mxu0 %v3350
        %v3386 = vpop.f32.mrf.mxu0
        %v3387 = vadd.f32 0.0, %v3386
        %v3388 = vpop.f32.mrf.mxu0
        %v3389 = vpop.f32.mrf.mxu0
        %v3390 = vpop.f32.mrf.mxu0
        %3391 = vdwg.mxu0
        %v3392 = vpack.i.b16 %v3204, %v3204
        %v3393 = vlaneseq
        %v3394 = vshrl.u32 %v3393, 7
        %v3395 = vsub.s32 0, %v3394
        %v3396 = vrot.slane %v3392, %v3395
        %3398 = vmatprep.subr.bf16.mxu0 0
        %3399 = vmatpush1.bf16.msra.mxu0 %v847
        %3400 = vmatprep.subr.bf16.mxu0 0
        %3401 = vmatpush1.bf16.msra.mxu0 %v846
        %3402 = vmatprep.subr.bf16.mxu0 0
        %3403 = vmatpush1.bf16.msra.mxu0 %v845
        %3404 = vmatprep.subr.bf16.mxu0 0
        %3405 = vmatpush1.bf16.msra.mxu0 %v844
        %3406 = vmatprep.subr.bf16.mxu0 0
        %3407 = vmatpush1.bf16.msra.mxu0 %v843
        %3408 = vmatprep.subr.bf16.mxu0 0
        %3409 = vmatpush1.bf16.msra.mxu0 %v842
        %3410 = vmatprep.subr.bf16.mxu0 0
        %3411 = vmatpush1.bf16.msra.mxu0 %v841
        %3412 = vmatprep.subr.bf16.mxu0 0
        %3413 = vmatpush1.bf16.msra.mxu0 %v840
        %3414 = vmatprep.subr.bf16.mxu0 0
        %3415 = vmatpush2.bf16.msra.mxu0 0
        %3416 = vmatprep.subr.bf16.mxu0 0
        %3417 = vmatpush2.bf16.msra.mxu0 0
        %3418 = vmatprep.subr.bf16.mxu0 0
        %3419 = vmatpush2.bf16.msra.mxu0 0
        %3420 = vmatprep.subr.bf16.mxu0 0
        %3421 = vmatpush2.bf16.msra.mxu0 0
        %3422 = vmatprep.subr.bf16.mxu0 0
        %3423 = vmatpush2.bf16.msra.mxu0 0
        %3424 = vmatprep.subr.bf16.mxu0 0
        %3425 = vmatpush2.bf16.msra.mxu0 0
        %3426 = vmatprep.subr.bf16.mxu0 0
        %3427 = vmatpush2.bf16.msra.mxu0 0
        %3428 = vmatprep.subr.bf16.mxu0 0
        %3429 = vmatpush2.bf16.msra.mxu0 0
        %3430 = vmatprep.mubr.bf16.mxu0 0
        %3431 = vmatmul.mubr.bf16.gmra.mxu0 %v3396
        %v3432 = vpop.f32.mrf.mxu0
        %v3433 = vadd.f32 0.0, %v3432
        %v3434 = vpop.f32.mrf.mxu0
        %v3435 = vpop.f32.mrf.mxu0
        %v3436 = vpop.f32.mrf.mxu0
        %3437 = vdwg.mxu0
        %v3438 = vpack.i.b16 %v3205, %v3205
        %v3439 = vlaneseq
        %v3440 = vshrl.u32 %v3439, 7
        %v3441 = vsub.s32 0, %v3440
        %v3442 = vrot.slane %v3438, %v3441
        %3444 = vmatprep.subr.bf16.mxu0 0
        %3445 = vmatpush1.bf16.msra.mxu0 %v855
        %3446 = vmatprep.subr.bf16.mxu0 0
        %3447 = vmatpush1.bf16.msra.mxu0 %v854
        %3448 = vmatprep.subr.bf16.mxu0 0
        %3449 = vmatpush1.bf16.msra.mxu0 %v853
        %3450 = vmatprep.subr.bf16.mxu0 0
        %3451 = vmatpush1.bf16.msra.mxu0 %v852
        %3452 = vmatprep.subr.bf16.mxu0 0
        %3453 = vmatpush1.bf16.msra.mxu0 %v851
        %3454 = vmatprep.subr.bf16.mxu0 0
        %3455 = vmatpush1.bf16.msra.mxu0 %v850
        %3456 = vmatprep.subr.bf16.mxu0 0
        %3457 = vmatpush1.bf16.msra.mxu0 %v849
        %3458 = vmatprep.subr.bf16.mxu0 0
        %3459 = vmatpush1.bf16.msra.mxu0 %v848
        %3460 = vmatprep.subr.bf16.mxu0 0
        %3461 = vmatpush2.bf16.msra.mxu0 0
        %3462 = vmatprep.subr.bf16.mxu0 0
        %3463 = vmatpush2.bf16.msra.mxu0 0
        %3464 = vmatprep.subr.bf16.mxu0 0
        %3465 = vmatpush2.bf16.msra.mxu0 0
        %3466 = vmatprep.subr.bf16.mxu0 0
        %3467 = vmatpush2.bf16.msra.mxu0 0
        %3468 = vmatprep.subr.bf16.mxu0 0
        %3469 = vmatpush2.bf16.msra.mxu0 0
        %3470 = vmatprep.subr.bf16.mxu0 0
        %3471 = vmatpush2.bf16.msra.mxu0 0
        %3472 = vmatprep.subr.bf16.mxu0 0
        %3473 = vmatpush2.bf16.msra.mxu0 0
        %3474 = vmatprep.subr.bf16.mxu0 0
        %3475 = vmatpush2.bf16.msra.mxu0 0
        %3476 = vmatprep.mubr.bf16.mxu0 0
        %3477 = vmatmul.mubr.bf16.gmra.mxu0 %v3442
        %v3478 = vpop.f32.mrf.mxu0
        %v3479 = vadd.f32 0.0, %v3478
        %v3480 = vpop.f32.mrf.mxu0
        %v3481 = vpop.f32.mrf.mxu0
        %v3482 = vpop.f32.mrf.mxu0
        %3483 = vdwg.mxu0
        %v3484 = vpack.i.b16 %v3206, %v3206
        %v3485 = vlaneseq
        %v3486 = vshrl.u32 %v3485, 7
        %v3487 = vsub.s32 0, %v3486
        %v3488 = vrot.slane %v3484, %v3487
        %3490 = vmatprep.subr.bf16.mxu0 0
        %3491 = vmatpush1.bf16.msra.mxu0 %v863
        %3492 = vmatprep.subr.bf16.mxu0 0
        %3493 = vmatpush1.bf16.msra.mxu0 %v862
        %3494 = vmatprep.subr.bf16.mxu0 0
        %3495 = vmatpush1.bf16.msra.mxu0 %v861
        %3496 = vmatprep.subr.bf16.mxu0 0
        %3497 = vmatpush1.bf16.msra.mxu0 %v860
        %3498 = vmatprep.subr.bf16.mxu0 0
        %3499 = vmatpush1.bf16.msra.mxu0 %v859
        %3500 = vmatprep.subr.bf16.mxu0 0
        %3501 = vmatpush1.bf16.msra.mxu0 %v858
        %3502 = vmatprep.subr.bf16.mxu0 0
        %3503 = vmatpush1.bf16.msra.mxu0 %v857
        %3504 = vmatprep.subr.bf16.mxu0 0
        %3505 = vmatpush1.bf16.msra.mxu0 %v856
        %3506 = vmatprep.subr.bf16.mxu0 0
        %3507 = vmatpush2.bf16.msra.mxu0 0
        %3508 = vmatprep.subr.bf16.mxu0 0
        %3509 = vmatpush2.bf16.msra.mxu0 0
        %3510 = vmatprep.subr.bf16.mxu0 0
        %3511 = vmatpush2.bf16.msra.mxu0 0
        %3512 = vmatprep.subr.bf16.mxu0 0
        %3513 = vmatpush2.bf16.msra.mxu0 0
        %3514 = vmatprep.subr.bf16.mxu0 0
        %3515 = vmatpush2.bf16.msra.mxu0 0
        %3516 = vmatprep.subr.bf16.mxu0 0
        %3517 = vmatpush2.bf16.msra.mxu0 0
        %3518 = vmatprep.subr.bf16.mxu0 0
        %3519 = vmatpush2.bf16.msra.mxu0 0
        %3520 = vmatprep.subr.bf16.mxu0 0
        %3521 = vmatpush2.bf16.msra.mxu0 0
        %3522 = vmatprep.mubr.bf16.mxu0 0
        %3523 = vmatmul.mubr.bf16.gmra.mxu0 %v3488
        %v3524 = vpop.f32.mrf.mxu0
        %v3525 = vadd.f32 0.0, %v3524
        %v3526 = vpop.f32.mrf.mxu0
        %v3527 = vpop.f32.mrf.mxu0
        %v3528 = vpop.f32.mrf.mxu0
        %3529 = vdwg.mxu0
        %v3530 = vpack.i.b16 %v3207, %v3207
        %v3531 = vlaneseq
        %v3532 = vshrl.u32 %v3531, 7
        %v3533 = vsub.s32 0, %v3532
        %v3534 = vrot.slane %v3530, %v3533
        %3536 = vmatprep.subr.bf16.mxu0 0
        %3537 = vmatpush1.bf16.msra.mxu0 %v871
        %3538 = vmatprep.subr.bf16.mxu0 0
        %3539 = vmatpush1.bf16.msra.mxu0 %v870
        %3540 = vmatprep.subr.bf16.mxu0 0
        %3541 = vmatpush1.bf16.msra.mxu0 %v869
        %3542 = vmatprep.subr.bf16.mxu0 0
        %3543 = vmatpush1.bf16.msra.mxu0 %v868
        %3544 = vmatprep.subr.bf16.mxu0 0
        %3545 = vmatpush1.bf16.msra.mxu0 %v867
        %3546 = vmatprep.subr.bf16.mxu0 0
        %3547 = vmatpush1.bf16.msra.mxu0 %v866
        %3548 = vmatprep.subr.bf16.mxu0 0
        %3549 = vmatpush1.bf16.msra.mxu0 %v865
        %3550 = vmatprep.subr.bf16.mxu0 0
        %3551 = vmatpush1.bf16.msra.mxu0 %v864
        %3552 = vmatprep.subr.bf16.mxu0 0
        %3553 = vmatpush2.bf16.msra.mxu0 0
        %3554 = vmatprep.subr.bf16.mxu0 0
        %3555 = vmatpush2.bf16.msra.mxu0 0
        %3556 = vmatprep.subr.bf16.mxu0 0
        %3557 = vmatpush2.bf16.msra.mxu0 0
        %3558 = vmatprep.subr.bf16.mxu0 0
        %3559 = vmatpush2.bf16.msra.mxu0 0
        %3560 = vmatprep.subr.bf16.mxu0 0
        %3561 = vmatpush2.bf16.msra.mxu0 0
        %3562 = vmatprep.subr.bf16.mxu0 0
        %3563 = vmatpush2.bf16.msra.mxu0 0
        %3564 = vmatprep.subr.bf16.mxu0 0
        %3565 = vmatpush2.bf16.msra.mxu0 0
        %3566 = vmatprep.subr.bf16.mxu0 0
        %3567 = vmatpush2.bf16.msra.mxu0 0
        %3568 = vmatprep.mubr.bf16.mxu0 0
        %3569 = vmatmul.mubr.bf16.gmra.mxu0 %v3534
        %v3570 = vpop.f32.mrf.mxu0
        %v3571 = vadd.f32 0.0, %v3570
        %v3572 = vpop.f32.mrf.mxu0
        %v3573 = vpop.f32.mrf.mxu0
        %v3574 = vpop.f32.mrf.mxu0
        %3575 = vdwg.mxu0
        %3576 = vst [vmem:[%s390] sm:$0xff] %v3173
        %v3585 = vrot.slane %v3295, 7
        %v3586 = vsel %vm3145, %v3585, %v3249
        %v3587 = vrot.slane %v3341, 6
        %v3588 = vsel %vm3147, %v3587, %v3586
        %v3589 = vrot.slane %v3387, 5
        %v3590 = vsel %vm3149, %v3589, %v3588
        %v3591 = vrot.slane %v3433, 4
        %v3592 = vsel %vm3151, %v3591, %v3590
        %v3593 = vrot.slane %v3479, 3
        %v3594 = vsel %vm3153, %v3593, %v3592
        %v3595 = vrot.slane %v3525, 2
        %v3596 = vsel %vm3155, %v3595, %v3594
        %v3597 = vrot.slane %v3571, 1
        %v3598 = vsel %vm3157, %v3597, %v3596
        %3600 = vst [vmem:[%s383] sm:$0xff] %v3598
        %s3601 = sand.u32 %s200, 1
        %s3602 = scalar_lea.sflag [#allocation4], %s3601
        %s3603 = sand.u32 %s200, 1
        %s3604 = smul.addr %s3603, 8
        %s3605 = scalar_lea.vmem [#allocation8], %s3604
        %s3606 = sand.u32 %s226, 1
        %s3607 = scalar_lea.sflag [#allocation10], %s3606
        %s3608 = sand.u32 %s226, 1
        %s3609 = smul.addr %s3608, 8
        %s3610 = scalar_lea.vmem [#allocation9], %s3609
        // Predicated region
        $region61: #{tpu_custom_call.1} parent=47 // pred_check
          %p3611 = pneg %p210
        $region62: #{tpu_custom_call.1} parent=47 // pred_check_branch
          %3613 = sbr.rel (%p3611) target = $region64
        $region63: #{tpu_custom_call.1} parent=47 // pred_region
          %s3615 = ssub.s32 128, 128
          %3616 = vsyncadd %s3602, %s3615
          %s3617 = smul.addr %s30, 128
          %s3618 = scalar_lea.hbm %s7, %s3617
          %s3620 = sshll.u32 %s3605, 4
          %s3621 = int_to_ptr.vmem [resolvable:$true] %s3620
          %3623 = dma.vmem_to_hbm [thread:$0]  %s3621, 128, %s3618, %s3602
        $region64: #{tpu_custom_call.1} parent=47 // pred_fallthru
          _
        // Predicated region
        $region65: #{tpu_custom_call.1} parent=47 // pred_check
          %p3624 = pneg %p236
        $region66: #{tpu_custom_call.1} parent=47 // pred_check_branch
          %3626 = sbr.rel (%p3624) target = $region68
        $region67: #{tpu_custom_call.1} parent=47 // pred_region
          %s3628 = ssub.s32 128, 128
          %3629 = vsyncadd %s3607, %s3628
          %s3630 = smul.addr %s30, 128
          %s3631 = scalar_lea.hbm %s8, %s3630
          %s3633 = sshll.u32 %s3610, 4
          %s3634 = int_to_ptr.vmem [resolvable:$true] %s3633
          %3636 = dma.vmem_to_hbm [thread:$0]  %s3634, 128, %s3631, %s3607
        $region68: #{tpu_custom_call.1} parent=47 // pred_fallthru
          _
      $region48: #{tpu_custom_call.1} parent=5 // pred_fallthru
        _
      %p3637 = scmp.le.s32.totalorder 2, %s25
      // Predicated region
      $region69: #{tpu_custom_call.1} parent=5 // pred_check
        %p3638 = pneg %p3637
      $region70: #{tpu_custom_call.1} parent=5 // pred_check_branch
        %3640 = sbr.rel (%p3638) target = $region72
      $region71: #{tpu_custom_call.1} parent=5 // pred_region
        %s3641 = ssub.s32 %s25, 2
        // Predicated region
        $region73: #{tpu_custom_call.1} parent=71 // pred_check
          %p3642 = pneg %p216
        $region74: #{tpu_custom_call.1} parent=71 // pred_check_branch
          %3644 = sbr.rel (%p3642) target = $region76
        $region75: #{tpu_custom_call.1} parent=71 // pred_region
          %s3645 = sand.u32 %s201, 1
          %s3646 = scalar_lea.sflag [#allocation4], %s3645
          %s3647 = sand.u32 %s201, 1
          %s3648 = smul.addr %s3647, 8
          %s3649 = scalar_lea.vmem [#allocation8], %s3648
          %3650 = dma.done %s3646, 128
        $region76: #{tpu_custom_call.1} parent=71 // pred_fallthru
          _
        // Predicated region
        $region77: #{tpu_custom_call.1} parent=71 // pred_check
          %p3651 = pneg %p242
        $region78: #{tpu_custom_call.1} parent=71 // pred_check_branch
          %3653 = sbr.rel (%p3651) target = $region80
        $region79: #{tpu_custom_call.1} parent=71 // pred_region
          %s3654 = sand.u32 %s227, 1
          %s3655 = scalar_lea.sflag [#allocation10], %s3654
          %s3656 = sand.u32 %s227, 1
          %s3657 = smul.addr %s3656, 8
          %s3658 = scalar_lea.vmem [#allocation9], %s3657
          %3659 = dma.done %s3655, 128
        $region80: #{tpu_custom_call.1} parent=71 // pred_fallthru
          _
      $region72: #{tpu_custom_call.1} parent=5 // pred_fallthru
        _
    $region6: #{tpu_custom_call.1} parent=1 // loop_footer
      %s29 = sadd.s32 1, %s25
    $region7: #{tpu_custom_call.1} parent=1 // loop_footer_branch
      %24 = sbr.rel target = $region3
    $region8: #{tpu_custom_call.1} parent=1 // loop_exit
      _
    %3660 = vsyncpa [#allocation3], 1
    %s3661 = scalar_lea.sflag [#allocation3], 1
    %3662 = vsyncpa %s3661, 1
    %3663 = vsyncpa [#allocation6], 1
    %3664 = vsyncpa [#allocation4], 1
    %s3665 = scalar_lea.sflag [#allocation4], 1
    %3666 = vsyncpa %s3665, 1
    %3667 = vsyncpa [#allocation10], 1
    %s3668 = scalar_lea.sflag [#allocation10], 1
    %3669 = vsyncpa %s3668, 1

</llo_original>
